<compile_context>
chip_gen: v7x
topology: tpu7x:2x2x1
jax: 0.10.0
libtpu: 0.0.40
codegen_flags: <defaults>
</compile_context>

<pallas_src>
import math

import jax
import jax.numpy as jnp
from jax.experimental import pallas as pl
from jax.experimental.pallas import tpu as pltpu

# ----------------------------- synthetic config ------------------------------
B = 2            # batch
S = 8            # sequence length
H = 32           # hidden size
NUM_HEADS = 2
HEAD_DIM = H // NUM_HEADS
INTER = 64       # intermediate (FFN) size
LAYERS = 2
VOCAB = 64
TYPE_VOCAB = 2
MAX_POS = 16
LN_EPS = 1e-12
NEG_INF = -1e9
PAD_LANES = 128  # lane width of the packed parameter slabs / merged output

# ------------------------- packed-slab row layout -----------------------------
# Per-layer slab: (LAYERS, L_ROWS, 128).  Matrix blocks start on 8-row boundaries.
L_WQKV = 0            # rows [0:32)   cols [0:96)   fused Wq|Wk|Wv
L_WO = 32             # rows [32:64)  cols [0:32)
L_WI = 64             # rows [64:96)  cols [0:64)
L_WO2 = 96            # rows [96:160) cols [0:32)
L_BQKV = 160          # single rows (bias / LayerNorm vectors)
L_BO = 161
L_LN1G = 162
L_LN1B = 163
L_BI = 164
L_BO2 = 165
L_LN2G = 166
L_LN2B = 167
L_ROWS = 168

# Head slab: (H_ROWS, 128)
H_WHEAD = 0           # rows [0:32): qa_w at cols [0:2), cls_dense_w at cols [2:34)
H_BHEAD = 32          # row 32:      qa_b at cols [0:2), cls_dense_b at cols [2:34)
H_CLSOW = 33          # row 33:      cls_out_w^T at cols [0:32)
H_CLSOB = 34          # row 34:      cls_out_b at col 0
H_EMBG = 35           # row 35:      embedding LayerNorm gamma at cols [0:32)
H_EMBB = 36           # row 36:      embedding LayerNorm beta  at cols [0:32)
H_ROWS = 40


# ------------------------------ kernel helpers -------------------------------
def _layer_norm(x, gamma, beta):
    mean = jnp.mean(x, axis=-1, keepdims=True)
    var = jnp.mean((x - mean) ** 2, axis=-1, keepdims=True)
    return (x - mean) * jax.lax.rsqrt(var + LN_EPS) * gamma + beta


def _softmax_last(x):
    m = jnp.max(x, axis=-1, keepdims=True)
    e = jnp.exp(x - m)
    return e / jnp.sum(e, axis=-1, keepdims=True)


def _erf(z):
    # Abramowitz & Stegun 7.1.26 rational approximation, |err| <= 1.5e-7.
    a1, a2, a3, a4, a5 = (0.254829592, -0.284496736, 1.421413741,
                          -1.453152027, 1.061405429)
    p = 0.3275911
    az = jnp.abs(z)
    t = 1.0 / (1.0 + p * az)
    poly = ((((a5 * t + a4) * t + a3) * t + a2) * t + a1) * t
    pos = 1.0 - poly * jnp.exp(-az * az)
    return jnp.where(z >= 0.0, pos, -pos)


def _gelu_exact(x):
    # erf-based ("exact") GELU, matching torch.nn.GELU() semantics.
    return 0.5 * x * (1.0 + _erf(x * 0.7071067811865476))


def _sigmoid(x):
    return 1.0 / (1.0 + jnp.exp(-x))


# --------------------------- fused forward kernel ----------------------------
def fused_electra_kernel(x_ref, mask_ref, lw_ref, hw_ref, out_ref):
    """Whole ElectraQA forward for one (B*S, H) activation slab.

    x_ref    : (B*S, H)            pre-LayerNorm embedding sum
    mask_ref : (B, S)              raw 0/1 attention mask (float32)
    lw_ref   : (LAYERS, 168, 128)  packed per-layer parameters
    hw_ref   : (40, 128)           packed head + embedding-LN parameters
    out_ref  : (B*S, 128)          lane-dense merged output tile
    """
    scale = 1.0 / math.sqrt(HEAD_DIM)

    # ---- embedding LayerNorm (gathers + sum stay in the JAX wrapper) ----
    emb_g = hw_ref[H_EMBG:H_EMBG + 1, 0:H]
    emb_b = hw_ref[H_EMBB:H_EMBB + 1, 0:H]
    x = _layer_norm(x_ref[...].astype(jnp.float32), emb_g, emb_b)       # (B*S, H)

    # ---- additive attention mask built in-kernel from the raw (B, S) mask ----
    add_mask = ((1.0 - mask_ref[...].astype(jnp.float32)) * NEG_INF).reshape(B, 1, S)

    # ---- encoder layers (statically unrolled: LAYERS == 2) ----
    for l in range(LAYERS):
        wqkv = lw_ref[l, L_WQKV:L_WQKV + H, 0:3 * H]       # (H, 3H)
        bqkv = lw_ref[l, L_BQKV:L_BQKV + 1, 0:3 * H]       # (1, 3H)
        wo = lw_ref[l, L_WO:L_WO + H, 0:H]
        bo = lw_ref[l, L_BO:L_BO + 1, 0:H]
        ln1g = lw_ref[l, L_LN1G:L_LN1G + 1, 0:H]
        ln1b = lw_ref[l, L_LN1B:L_LN1B + 1, 0:H]
        wi = lw_ref[l, L_WI:L_WI + H, 0:INTER]
        bi = lw_ref[l, L_BI:L_BI + 1, 0:INTER]
        wo2 = lw_ref[l, L_WO2:L_WO2 + INTER, 0:H]
        bo2 = lw_ref[l, L_BO2:L_BO2 + 1, 0:H]
        ln2g = lw_ref[l, L_LN2G:L_LN2G + 1, 0:H]
        ln2b = lw_ref[l, L_LN2B:L_LN2B + 1, 0:H]

        # fused QKV projection: one (B*S, H) x (H, 3H) matmul
        qkv = jnp.dot(x, wqkv, preferred_element_type=jnp.float32) + bqkv   # (B*S, 3H)
        qkv = qkv.reshape(B, S, 3 * H)                                      # tile-aligned row split

        # per-head attention with batched (batch = B) 3-D einsums; no stack/concat relayouts
        ctx_heads = []
        for h in range(NUM_HEADS):
            c = h * HEAD_DIM
            q_h = qkv[:, :, c:c + HEAD_DIM]                                 # (B, S, HD)
            k_h = qkv[:, :, H + c:H + c + HEAD_DIM]
            v_h = qkv[:, :, 2 * H + c:2 * H + c + HEAD_DIM]
            s_h = jnp.einsum('bqd,bkd->bqk', q_h, k_h,
                             preferred_element_type=jnp.float32) * scale + add_mask
            p_h = _softmax_last(s_h)
            ctx_heads.append(jnp.einsum('bqk,bkd->bqd', p_h, v_h,
                                        preferred_element_type=jnp.float32))
        ctx = jnp.concatenate(ctx_heads, axis=-1).reshape(B * S, H)         # (B*S, H)

        attn_out = jnp.dot(ctx, wo, preferred_element_type=jnp.float32) + bo
        x = _layer_norm(x + attn_out, ln1g, ln1b)

        inter = _gelu_exact(jnp.dot(x, wi, preferred_element_type=jnp.float32) + bi)
        ffn_out = jnp.dot(inter, wo2, preferred_element_type=jnp.float32) + bo2
        x = _layer_norm(x + ffn_out, ln2g, ln2b)

    # ---- heads: ONE padded (H, 128) MXU pass covers QA logits + classifier dense ----
    w_head = hw_ref[H_WHEAD:H_WHEAD + H, :]                  # (H, 128)
    b_head = hw_ref[H_BHEAD:H_BHEAD + 1, :]                  # (1, 128)
    head_out = jnp.dot(x, w_head, preferred_element_type=jnp.float32) + b_head  # (B*S, 128)

    # classifier on token 0: gelu -> out_proj (VPU mul + lane reduce) -> sigmoid
    x0_dense = head_out.reshape(B, S, PAD_LANES)[:, 0:1, 2:2 + H].reshape(B, H)  # (B, H)
    hcls = _gelu_exact(x0_dense)
    cls_ow = hw_ref[H_CLSOW:H_CLSOW + 1, 0:H]                # (1, H)  == cls_out_w^T
    cls_ob = hw_ref[H_CLSOB:H_CLSOB + 1, 0:1]                # (1, 1)
    verif = _sigmoid(jnp.sum(hcls * cls_ow, axis=-1, keepdims=True) + cls_ob)    # (B, 1)

    # ---- lane-dense merged output: cols 0/1 = QA logits, cols >= 2 = batch verif prob ----
    col = jax.lax.broadcasted_iota(jnp.int32, (B * S, PAD_LANES), 1)
    verif_rows = jnp.broadcast_to(verif.reshape(B, 1, 1),
                                  (B, S, PAD_LANES)).reshape(B * S, PAD_LANES)
    out_ref[...] = jnp.where(col < 2, head_out, verif_rows).astype(out_ref.dtype)


# --------------------------- parameter packing glue --------------------------
def pack_params(params):
    """Pack all parameters into 2 flat f32 slabs (done once, outside jit)."""
    def put(slab, row, mat):
        r, c = mat.shape
        return slab.at[row:row + r, 0:c].set(mat.astype(jnp.float32))

    layer_slab = jnp.zeros((LAYERS, L_ROWS, PAD_LANES), jnp.float32)
    for l, lp in enumerate(params["layers"]):
        s = jnp.zeros((L_ROWS, PAD_LANES), jnp.float32)
        wqkv = jnp.concatenate([lp["wq"], lp["wk"], lp["wv"]], axis=1)
        bqkv = jnp.concatenate([lp["bq"], lp["bk"], lp["bv"]], axis=1)
        s = put(s, L_WQKV, wqkv)
        s = put(s, L_WO, lp["wo"])
        s = put(s, L_WI, lp["wi"])
        s = put(s, L_WO2, lp["wo2"])
        s = put(s, L_BQKV, bqkv)
        s = put(s, L_BO, lp["bo"])
        s = put(s, L_LN1G, lp["ln1_g"])
        s = put(s, L_LN1B, lp["ln1_b"])
        s = put(s, L_BI, lp["bi"])
        s = put(s, L_BO2, lp["bo2"])
        s = put(s, L_LN2G, lp["ln2_g"])
        s = put(s, L_LN2B, lp["ln2_b"])
        layer_slab = layer_slab.at[l].set(s)

    head_slab = jnp.zeros((H_ROWS, PAD_LANES), jnp.float32)
    w_head = jnp.concatenate([params["qa_w"], params["cls_dense_w"]], axis=1)   # (H, 2+H)
    b_head = jnp.concatenate([params["qa_b"], params["cls_dense_b"]], axis=1)   # (1, 2+H)
    head_slab = put(head_slab, H_WHEAD, w_head)
    head_slab = put(head_slab, H_BHEAD, b_head)
    head_slab = put(head_slab, H_CLSOW, params["cls_out_w"].T)
    head_slab = put(head_slab, H_CLSOB, params["cls_out_b"])
    head_slab = put(head_slab, H_EMBG, params["emb_ln_g"])
    head_slab = put(head_slab, H_EMBB, params["emb_ln_b"])

    return {
        "word_emb": params["word_emb"],
        "pos_emb": params["pos_emb"],
        "tok_emb": params["tok_emb"],
        "layer_slab": layer_slab,
        "head_slab": head_slab,
    }


# ------------------------------ full forward ---------------------------------
@jax.jit
def electra_qa_forward(packed, input_ids, attention_mask, token_type_ids):
    # --- embeddings: gathers + sum in plain JAX; LayerNorm is fused into the kernel ---
    pos_ids = jnp.arange(S)
    emb_sum = (packed["word_emb"][input_ids]
               + packed["pos_emb"][pos_ids][None, :, :]
               + packed["tok_emb"][token_type_ids])                  # (B, S, H)
    x = emb_sum.reshape(B * S, H).astype(jnp.float32)
    mask_f = attention_mask.astype(jnp.float32)                      # raw (B, S) 0/1 mask

    # Single, gridless pallas_call: everything (<0.3 MiB) resident in VMEM.
    # TODO(synk): at larger B/S add a leading "parallel" grid axis over batch so both
    # v7x TensorCores are used; at B=2/S=8 the per-step overhead would outweigh the split.
    out = pl.pallas_call(
        fused_electra_kernel,
        out_shape=jax.ShapeDtypeStruct((B * S, PAD_LANES), jnp.float32),
        in_specs=[pl.BlockSpec(memory_space=pltpu.MemorySpace.VMEM)] * 4,
        out_specs=pl.BlockSpec(memory_space=pltpu.MemorySpace.VMEM),
        compiler_params=pltpu.CompilerParams(vmem_limit_bytes=16 * 1024 * 1024),
    )(x, mask_f, packed["layer_slab"], packed["head_slab"])

    out3 = out.reshape(B, S, PAD_LANES)
    start_logits = out3[:, :, 0]          # (B, S)
    end_logits = out3[:, :, 1]            # (B, S)
    verification_logits = out3[:, 0, 2:3]  # (B, 1)  sigmoid(classifier) on token 0
    return start_logits, end_logits, verification_logits


# -------------------------- pure-JAX reference check -------------------------
def reference_forward(params, input_ids, attention_mask, token_type_ids):
    pos_ids = jnp.arange(S)
    x = (params["word_emb"][input_ids]
         + params["pos_emb"][pos_ids][None, :, :]
         + params["tok_emb"][token_type_ids])

    def ln(t, g, b):
        m = jnp.mean(t, axis=-1, keepdims=True)
        v = jnp.mean((t - m) ** 2, axis=-1, keepdims=True)
        return (t - m) * jax.lax.rsqrt(v + LN_EPS) * g + b

    x = ln(x, params["emb_ln_g"], params["emb_ln_b"])
    add_mask = ((1.0 - attention_mask.astype(jnp.float32)) * NEG_INF)[:, None, None, :]
    for lp in params["layers"]:
        q = x @ lp["wq"] + lp["bq"]
        k = x @ lp["wk"] + lp["bk"]
        v = x @ lp["wv"] + lp["bv"]
        qh = q.reshape(B, S, NUM_HEADS, HEAD_DIM).transpose(0, 2, 1, 3)
        kh = k.reshape(B, S, NUM_HEADS, HEAD_DIM).transpose(0, 2, 1, 3)
        vh = v.reshape(B, S, NUM_HEADS, HEAD_DIM).transpose(0, 2, 1, 3)
        sc = jnp.einsum("bhqd,bhkd->bhqk", qh, kh) / math.sqrt(HEAD_DIM) + add_mask
        p = jax.nn.softmax(sc, axis=-1)
        ctx = jnp.einsum("bhqk,bhkd->bhqd", p, vh).transpose(0, 2, 1, 3).reshape(B, S, H)
        x = ln(x + ctx @ lp["wo"] + lp["bo"], lp["ln1_g"], lp["ln1_b"])
        ff = jax.nn.gelu(x @ lp["wi"] + lp["bi"], approximate=False) @ lp["wo2"] + lp["bo2"]
        x = ln(x + ff, lp["ln2_g"], lp["ln2_b"])
    logits = x @ params["qa_w"] + params["qa_b"]
    start, end = logits[..., 0], logits[..., 1]
    x0 = x[:, 0, :]
    h = jax.nn.gelu(x0 @ params["cls_dense_w"] + params["cls_dense_b"], approximate=False)
    verif = jax.nn.sigmoid(h @ params["cls_out_w"] + params["cls_out_b"])
    return start, end, verif


# ------------------------------- param init ----------------------------------
def init_params(key):
    # TODO(synk): real ElectraQA loads pretrained google/electra-large weights; here we
    # random-init a synthetic small config with the same computational structure.
    def nrm(k, shape, scale=0.02):
        return scale * jax.random.normal(k, shape, dtype=jnp.float32)

    keys = jax.random.split(key, 8 + LAYERS)
    params = {
        "word_emb": nrm(keys[0], (VOCAB, H)),
        "pos_emb": nrm(keys[1], (MAX_POS, H)),
        "tok_emb": nrm(keys[2], (TYPE_VOCAB, H)),
        "emb_ln_g": jnp.ones((1, H), jnp.float32),
        "emb_ln_b": jnp.zeros((1, H), jnp.float32),
        "qa_w": nrm(keys[3], (H, 2)),
        "qa_b": jnp.zeros((1, 2), jnp.float32),
        "cls_dense_w": nrm(keys[4], (H, H)),
        "cls_dense_b": jnp.zeros((1, H), jnp.float32),
        "cls_out_w": nrm(keys[5], (H, 1)),
        "cls_out_b": jnp.zeros((1, 1), jnp.float32),
        "layers": [],
    }
    for i in range(LAYERS):
        lk = jax.random.split(keys[8 + i], 8)
        params["layers"].append({
            "wq": nrm(lk[0], (H, H)), "bq": jnp.zeros((1, H), jnp.float32),
            "wk": nrm(lk[1], (H, H)), "bk": jnp.zeros((1, H), jnp.float32),
            "wv": nrm(lk[2], (H, H)), "bv": jnp.zeros((1, H), jnp.float32),
            "wo": nrm(lk[3], (H, H)), "bo": jnp.zeros((1, H), jnp.float32),
            "ln1_g": jnp.ones((1, H), jnp.float32), "ln1_b": jnp.zeros((1, H), jnp.float32),
            "wi": nrm(lk[4], (H, INTER)), "bi": jnp.zeros((1, INTER), jnp.float32),
            "wo2": nrm(lk[5], (INTER, H)), "bo2": jnp.zeros((1, H), jnp.float32),
            "ln2_g": jnp.ones((1, H), jnp.float32), "ln2_b": jnp.zeros((1, H), jnp.float32),
        })
    return params


# ---------------------------------- main --------------------------------------
if __name__ == "__main__":
    key = jax.random.PRNGKey(0)
    k_par, k_ids = jax.random.split(key, 2)

    params = init_params(k_par)
    input_ids = jax.random.randint(k_ids, (B, S), 0, VOCAB, dtype=jnp.int32)
    attention_mask = jnp.ones((B, S), jnp.int32).at[1, S - 2:].set(0)   # pad last 2 of batch 1
    token_type_ids = jnp.concatenate(
        [jnp.zeros((B, S // 2), jnp.int32), jnp.ones((B, S // 2), jnp.int32)], axis=1)

    packed = pack_params(params)   # parameters packed into 2 slabs, once

    start_logits, end_logits, verification_logits = jax.block_until_ready(
        electra_qa_forward(packed, input_ids, attention_mask, token_type_ids))

    # sanity check vs pure-JAX reference
    r_start, r_end, r_verif = reference_forward(params, input_ids, attention_mask, token_type_ids)
    assert start_logits.shape == (B, S)
    assert end_logits.shape == (B, S)
    assert verification_logits.shape == (B, 1)
    assert jnp.allclose(start_logits, r_start, atol=1e-3, rtol=1e-3)
    assert jnp.allclose(end_logits, r_end, atol=1e-3, rtol=1e-3)
    assert jnp.allclose(verification_logits, r_verif, atol=1e-3, rtol=1e-3)

    print("KERNEL_OK")
</pallas_src>

<mosaic_0001>
module attributes {stable_mosaic.version = 11 : i64} {
  func.func @fused_electra_kernel(%arg0: memref<16x32xf32, #tpu.memory_space<vmem>>, %arg1: memref<2x8xf32, #tpu.memory_space<vmem>>, %arg2: memref<2x168x128xf32, #tpu.memory_space<vmem>>, %arg3: memref<40x128xf32, #tpu.memory_space<vmem>>, %arg4: memref<16x128xf32, #tpu.memory_space<vmem>>) attributes {dimension_semantics = [], scalar_prefetch = 0 : i64, scratch_operands = 0 : i64, tpu.core_type = #tpu.core_type<tc>} {
    %c35 = arith.constant 35 : index
    %c0 = arith.constant 0 : index
    %0 = vector.load %arg3[%c35, %c0] : memref<40x128xf32, #tpu.memory_space<vmem>>, vector<1x32xf32>
    %c36 = arith.constant 36 : index
    %c0_0 = arith.constant 0 : index
    %1 = vector.load %arg3[%c36, %c0_0] : memref<40x128xf32, #tpu.memory_space<vmem>>, vector<1x32xf32>
    %c0_1 = arith.constant 0 : index
    %c0_2 = arith.constant 0 : index
    %2 = vector.load %arg0[%c0_1, %c0_2] : memref<16x32xf32, #tpu.memory_space<vmem>>, vector<16x32xf32>
    %cst = arith.constant dense<0.000000e+00> : vector<16xf32>
    %3 = vector.multi_reduction <add>, %2, %cst [1] : vector<16x32xf32> to vector<16xf32>
    %4 = vector.shape_cast %3 : vector<16xf32> to vector<16x1xf32>
    %cst_3 = arith.constant 3.200000e+01 : f32
    %5 = vector.broadcast %cst_3 : f32 to vector<16x1xf32>
    %6 = arith.divf %4, %5 : vector<16x1xf32>
    %7 = vector.broadcast %6 : vector<16x1xf32> to vector<16x32xf32>
    %8 = arith.subf %2, %7 : vector<16x32xf32>
    %9 = arith.mulf %8, %8 : vector<16x32xf32>
    %cst_4 = arith.constant dense<0.000000e+00> : vector<16xf32>
    %10 = vector.multi_reduction <add>, %9, %cst_4 [1] : vector<16x32xf32> to vector<16xf32>
    %11 = vector.shape_cast %10 : vector<16xf32> to vector<16x1xf32>
    %cst_5 = arith.constant 3.200000e+01 : f32
    %12 = vector.broadcast %cst_5 : f32 to vector<16x1xf32>
    %13 = arith.divf %11, %12 : vector<16x1xf32>
    %14 = vector.broadcast %6 : vector<16x1xf32> to vector<16x32xf32>
    %15 = arith.subf %2, %14 : vector<16x32xf32>
    %cst_6 = arith.constant 9.99999996E-13 : f32
    %16 = vector.broadcast %cst_6 : f32 to vector<16x1xf32>
    %17 = arith.addf %13, %16 : vector<16x1xf32>
    %18 = math.rsqrt %17 : vector<16x1xf32>
    %19 = vector.broadcast %18 : vector<16x1xf32> to vector<16x32xf32>
    %20 = arith.mulf %15, %19 : vector<16x32xf32>
    %21 = vector.broadcast %0 : vector<1x32xf32> to vector<16x32xf32>
    %22 = arith.mulf %20, %21 : vector<16x32xf32>
    %23 = vector.broadcast %1 : vector<1x32xf32> to vector<16x32xf32>
    %24 = arith.addf %22, %23 : vector<16x32xf32>
    %c0_7 = arith.constant 0 : index
    %c0_8 = arith.constant 0 : index
    %25 = vector.load %arg1[%c0_7, %c0_8] : memref<2x8xf32, #tpu.memory_space<vmem>>, vector<2x8xf32>
    %cst_9 = arith.constant 1.000000e+00 : f32
    %26 = vector.broadcast %cst_9 : f32 to vector<2x8xf32>
    %27 = arith.subf %26, %25 : vector<2x8xf32>
    %cst_10 = arith.constant -1.000000e+09 : f32
    %28 = vector.broadcast %cst_10 : f32 to vector<2x8xf32>
    %29 = arith.mulf %27, %28 : vector<2x8xf32>
    %30 = vector.shape_cast %29 : vector<2x8xf32> to vector<2x1x8xf32>
    %c0_11 = arith.constant 0 : index
    %c0_12 = arith.constant 0 : index
    %c0_13 = arith.constant 0 : index
    %31 = vector.load %arg2[%c0_11, %c0_12, %c0_13] : memref<2x168x128xf32, #tpu.memory_space<vmem>>, vector<1x32x96xf32>
    %32 = vector.shape_cast %31 : vector<1x32x96xf32> to vector<32x96xf32>
    %c0_14 = arith.constant 0 : index
    %c160 = arith.constant 160 : index
    %c0_15 = arith.constant 0 : index
    %33 = vector.load %arg2[%c0_14, %c160, %c0_15] : memref<2x168x128xf32, #tpu.memory_space<vmem>>, vector<1x1x96xf32>
    %34 = vector.shape_cast %33 : vector<1x1x96xf32> to vector<1x96xf32>
    %c0_16 = arith.constant 0 : index
    %c32 = arith.constant 32 : index
    %c0_17 = arith.constant 0 : index
    %35 = vector.load %arg2[%c0_16, %c32, %c0_17] : memref<2x168x128xf32, #tpu.memory_space<vmem>>, vector<1x32x32xf32>
    %36 = vector.shape_cast %35 : vector<1x32x32xf32> to vector<32x32xf32>
    %c0_18 = arith.constant 0 : index
    %c161 = arith.constant 161 : index
    %c0_19 = arith.constant 0 : index
    %37 = vector.load %arg2[%c0_18, %c161, %c0_19] : memref<2x168x128xf32, #tpu.memory_space<vmem>>, vector<1x1x32xf32>
    %38 = vector.shape_cast %37 : vector<1x1x32xf32> to vector<1x32xf32>
    %c0_20 = arith.constant 0 : index
    %c162 = arith.constant 162 : index
    %c0_21 = arith.constant 0 : index
    %39 = vector.load %arg2[%c0_20, %c162, %c0_21] : memref<2x168x128xf32, #tpu.memory_space<vmem>>, vector<1x1x32xf32>
    %40 = vector.shape_cast %39 : vector<1x1x32xf32> to vector<1x32xf32>
    %c0_22 = arith.constant 0 : index
    %c163 = arith.constant 163 : index
    %c0_23 = arith.constant 0 : index
    %41 = vector.load %arg2[%c0_22, %c163, %c0_23] : memref<2x168x128xf32, #tpu.memory_space<vmem>>, vector<1x1x32xf32>
    %42 = vector.shape_cast %41 : vector<1x1x32xf32> to vector<1x32xf32>
    %c0_24 = arith.constant 0 : index
    %c64 = arith.constant 64 : index
    %c0_25 = arith.constant 0 : index
    %43 = vector.load %arg2[%c0_24, %c64, %c0_25] : memref<2x168x128xf32, #tpu.memory_space<vmem>>, vector<1x32x64xf32>
    %44 = vector.shape_cast %43 : vector<1x32x64xf32> to vector<32x64xf32>
    %c0_26 = arith.constant 0 : index
    %c164 = arith.constant 164 : index
    %c0_27 = arith.constant 0 : index
    %45 = vector.load %arg2[%c0_26, %c164, %c0_27] : memref<2x168x128xf32, #tpu.memory_space<vmem>>, vector<1x1x64xf32>
    %46 = vector.shape_cast %45 : vector<1x1x64xf32> to vector<1x64xf32>
    %c0_28 = arith.constant 0 : index
    %c96 = arith.constant 96 : index
    %c0_29 = arith.constant 0 : index
    %47 = vector.load %arg2[%c0_28, %c96, %c0_29] : memref<2x168x128xf32, #tpu.memory_space<vmem>>, vector<1x64x32xf32>
    %48 = vector.shape_cast %47 : vector<1x64x32xf32> to vector<64x32xf32>
    %c0_30 = arith.constant 0 : index
    %c165 = arith.constant 165 : index
    %c0_31 = arith.constant 0 : index
    %49 = vector.load %arg2[%c0_30, %c165, %c0_31] : memref<2x168x128xf32, #tpu.memory_space<vmem>>, vector<1x1x32xf32>
    %50 = vector.shape_cast %49 : vector<1x1x32xf32> to vector<1x32xf32>
    %c0_32 = arith.constant 0 : index
    %c166 = arith.constant 166 : index
    %c0_33 = arith.constant 0 : index
    %51 = vector.load %arg2[%c0_32, %c166, %c0_33] : memref<2x168x128xf32, #tpu.memory_space<vmem>>, vector<1x1x32xf32>
    %52 = vector.shape_cast %51 : vector<1x1x32xf32> to vector<1x32xf32>
    %c0_34 = arith.constant 0 : index
    %c167 = arith.constant 167 : index
    %c0_35 = arith.constant 0 : index
    %53 = vector.load %arg2[%c0_34, %c167, %c0_35] : memref<2x168x128xf32, #tpu.memory_space<vmem>>, vector<1x1x32xf32>
    %54 = vector.shape_cast %53 : vector<1x1x32xf32> to vector<1x32xf32>
    %cst_36 = arith.constant dense<0.000000e+00> : vector<16x96xf32>
    %55 = tpu.matmul %24, %32, %cst_36 {dimension_numbers = #tpu.dot_dimension_numbers<[1], [0], [0], [1], [0, 0, 1, 1], [], []>} : vector<16x32xf32>, vector<32x96xf32>, vector<16x96xf32> -> vector<16x96xf32>
    %56 = vector.broadcast %34 : vector<1x96xf32> to vector<16x96xf32>
    %57 = arith.addf %55, %56 : vector<16x96xf32>
    %58 = vector.shape_cast %57 : vector<16x96xf32> to vector<2x8x96xf32>
    %59 = vector.extract_strided_slice %58 {offsets = [0, 0, 0], sizes = [2, 8, 16], strides = [1, 1, 1]} : vector<2x8x96xf32> to vector<2x8x16xf32>
    %60 = vector.extract_strided_slice %58 {offsets = [0, 0, 32], sizes = [2, 8, 16], strides = [1, 1, 1]} : vector<2x8x96xf32> to vector<2x8x16xf32>
    %61 = vector.extract_strided_slice %58 {offsets = [0, 0, 64], sizes = [2, 8, 16], strides = [1, 1, 1]} : vector<2x8x96xf32> to vector<2x8x16xf32>
    "tpu.trace_start"() <{level = 10 : i32, message = "bqd,bkd->bqk"}> : () -> ()
    %cst_37 = arith.constant dense<0.000000e+00> : vector<2x8x8xf32>
    %62 = tpu.matmul %59, %60, %cst_37 {dimension_numbers = #tpu.dot_dimension_numbers<[2], [2], [1], [1], [0, 0, 0, 1, 1, 1], [0], [0]>} : vector<2x8x16xf32>, vector<2x8x16xf32>, vector<2x8x8xf32> -> vector<2x8x8xf32>
    "tpu.trace_stop"() : () -> ()
    %cst_38 = arith.constant 2.500000e-01 : f32
    %63 = vector.broadcast %cst_38 : f32 to vector<2x8x8xf32>
    %64 = arith.mulf %62, %63 : vector<2x8x8xf32>
    %65 = vector.broadcast %30 : vector<2x1x8xf32> to vector<2x8x8xf32>
    %66 = arith.addf %64, %65 : vector<2x8x8xf32>
    %cst_39 = arith.constant dense<0xFF800000> : vector<2x8xf32>
    %67 = vector.multi_reduction <maximumf>, %66, %cst_39 [2] : vector<2x8x8xf32> to vector<2x8xf32>
    %68 = vector.shape_cast %67 : vector<2x8xf32> to vector<2x8x1xf32>
    %69 = vector.broadcast %68 : vector<2x8x1xf32> to vector<2x8x8xf32>
    %70 = arith.subf %66, %69 : vector<2x8x8xf32>
    %71 = math.exp %70 : vector<2x8x8xf32>
    %cst_40 = arith.constant dense<0.000000e+00> : vector<2x8xf32>
    %72 = vector.multi_reduction <add>, %71, %cst_40 [2] : vector<2x8x8xf32> to vector<2x8xf32>
    %73 = vector.shape_cast %72 : vector<2x8xf32> to vector<2x8x1xf32>
    %74 = vector.broadcast %73 : vector<2x8x1xf32> to vector<2x8x8xf32>
    %75 = arith.divf %71, %74 : vector<2x8x8xf32>
    "tpu.trace_start"() <{level = 10 : i32, message = "bqk,bkd->bqd"}> : () -> ()
    %cst_41 = arith.constant dense<0.000000e+00> : vector<2x8x16xf32>
    %76 = tpu.matmul %75, %61, %cst_41 {dimension_numbers = #tpu.dot_dimension_numbers<[2], [1], [1], [2], [0, 0, 0, 1, 1, 2], [0], [0]>} : vector<2x8x8xf32>, vector<2x8x16xf32>, vector<2x8x16xf32> -> vector<2x8x16xf32>
    "tpu.trace_stop"() : () -> ()
    %77 = vector.extract_strided_slice %58 {offsets = [0, 0, 16], sizes = [2, 8, 16], strides = [1, 1, 1]} : vector<2x8x96xf32> to vector<2x8x16xf32>
    %78 = vector.extract_strided_slice %58 {offsets = [0, 0, 48], sizes = [2, 8, 16], strides = [1, 1, 1]} : vector<2x8x96xf32> to vector<2x8x16xf32>
    %79 = vector.extract_strided_slice %58 {offsets = [0, 0, 80], sizes = [2, 8, 16], strides = [1, 1, 1]} : vector<2x8x96xf32> to vector<2x8x16xf32>
    "tpu.trace_start"() <{level = 10 : i32, message = "bqd,bkd->bqk"}> : () -> ()
    %cst_42 = arith.constant dense<0.000000e+00> : vector<2x8x8xf32>
    %80 = tpu.matmul %77, %78, %cst_42 {dimension_numbers = #tpu.dot_dimension_numbers<[2], [2], [1], [1], [0, 0, 0, 1, 1, 1], [0], [0]>} : vector<2x8x16xf32>, vector<2x8x16xf32>, vector<2x8x8xf32> -> vector<2x8x8xf32>
    "tpu.trace_stop"() : () -> ()
    %cst_43 = arith.constant 2.500000e-01 : f32
    %81 = vector.broadcast %cst_43 : f32 to vector<2x8x8xf32>
    %82 = arith.mulf %80, %81 : vector<2x8x8xf32>
    %83 = vector.broadcast %30 : vector<2x1x8xf32> to vector<2x8x8xf32>
    %84 = arith.addf %82, %83 : vector<2x8x8xf32>
    %cst_44 = arith.constant dense<0xFF800000> : vector<2x8xf32>
    %85 = vector.multi_reduction <maximumf>, %84, %cst_44 [2] : vector<2x8x8xf32> to vector<2x8xf32>
    %86 = vector.shape_cast %85 : vector<2x8xf32> to vector<2x8x1xf32>
    %87 = vector.broadcast %86 : vector<2x8x1xf32> to vector<2x8x8xf32>
    %88 = arith.subf %84, %87 : vector<2x8x8xf32>
    %89 = math.exp %88 : vector<2x8x8xf32>
    %cst_45 = arith.constant dense<0.000000e+00> : vector<2x8xf32>
    %90 = vector.multi_reduction <add>, %89, %cst_45 [2] : vector<2x8x8xf32> to vector<2x8xf32>
    %91 = vector.shape_cast %90 : vector<2x8xf32> to vector<2x8x1xf32>
    %92 = vector.broadcast %91 : vector<2x8x1xf32> to vector<2x8x8xf32>
    %93 = arith.divf %89, %92 : vector<2x8x8xf32>
    "tpu.trace_start"() <{level = 10 : i32, message = "bqk,bkd->bqd"}> : () -> ()
    %cst_46 = arith.constant dense<0.000000e+00> : vector<2x8x16xf32>
    %94 = tpu.matmul %93, %79, %cst_46 {dimension_numbers = #tpu.dot_dimension_numbers<[2], [1], [1], [2], [0, 0, 0, 1, 1, 2], [0], [0]>} : vector<2x8x8xf32>, vector<2x8x16xf32>, vector<2x8x16xf32> -> vector<2x8x16xf32>
    "tpu.trace_stop"() : () -> ()
    %95 = tpu.concatenate %76, %94 in 2 : vector<2x8x16xf32>, vector<2x8x16xf32> -> vector<2x8x32xf32>
    %96 = vector.shape_cast %95 : vector<2x8x32xf32> to vector<16x32xf32>
    %cst_47 = arith.constant dense<0.000000e+00> : vector<16x32xf32>
    %97 = tpu.matmul %96, %36, %cst_47 {dimension_numbers = #tpu.dot_dimension_numbers<[1], [0], [0], [1], [0, 0, 1, 1], [], []>} : vector<16x32xf32>, vector<32x32xf32>, vector<16x32xf32> -> vector<16x32xf32>
    %98 = vector.broadcast %38 : vector<1x32xf32> to vector<16x32xf32>
    %99 = arith.addf %97, %98 : vector<16x32xf32>
    %100 = arith.addf %24, %99 : vector<16x32xf32>
    %cst_48 = arith.constant dense<0.000000e+00> : vector<16xf32>
    %101 = vector.multi_reduction <add>, %100, %cst_48 [1] : vector<16x32xf32> to vector<16xf32>
    %102 = vector.shape_cast %101 : vector<16xf32> to vector<16x1xf32>
    %cst_49 = arith.constant 3.200000e+01 : f32
    %103 = vector.broadcast %cst_49 : f32 to vector<16x1xf32>
    %104 = arith.divf %102, %103 : vector<16x1xf32>
    %105 = vector.broadcast %104 : vector<16x1xf32> to vector<16x32xf32>
    %106 = arith.subf %100, %105 : vector<16x32xf32>
    %107 = arith.mulf %106, %106 : vector<16x32xf32>
    %cst_50 = arith.constant dense<0.000000e+00> : vector<16xf32>
    %108 = vector.multi_reduction <add>, %107, %cst_50 [1] : vector<16x32xf32> to vector<16xf32>
    %109 = vector.shape_cast %108 : vector<16xf32> to vector<16x1xf32>
    %cst_51 = arith.constant 3.200000e+01 : f32
    %110 = vector.broadcast %cst_51 : f32 to vector<16x1xf32>
    %111 = arith.divf %109, %110 : vector<16x1xf32>
    %112 = vector.broadcast %104 : vector<16x1xf32> to vector<16x32xf32>
    %113 = arith.subf %100, %112 : vector<16x32xf32>
    %cst_52 = arith.constant 9.99999996E-13 : f32
    %114 = vector.broadcast %cst_52 : f32 to vector<16x1xf32>
    %115 = arith.addf %111, %114 : vector<16x1xf32>
    %116 = math.rsqrt %115 : vector<16x1xf32>
    %117 = vector.broadcast %116 : vector<16x1xf32> to vector<16x32xf32>
    %118 = arith.mulf %113, %117 : vector<16x32xf32>
    %119 = vector.broadcast %40 : vector<1x32xf32> to vector<16x32xf32>
    %120 = arith.mulf %118, %119 : vector<16x32xf32>
    %121 = vector.broadcast %42 : vector<1x32xf32> to vector<16x32xf32>
    %122 = arith.addf %120, %121 : vector<16x32xf32>
    %cst_53 = arith.constant dense<0.000000e+00> : vector<16x64xf32>
    %123 = tpu.matmul %122, %44, %cst_53 {dimension_numbers = #tpu.dot_dimension_numbers<[1], [0], [0], [1], [0, 0, 1, 1], [], []>} : vector<16x32xf32>, vector<32x64xf32>, vector<16x64xf32> -> vector<16x64xf32>
    %124 = vector.broadcast %46 : vector<1x64xf32> to vector<16x64xf32>
    %125 = arith.addf %123, %124 : vector<16x64xf32>
    %cst_54 = arith.constant 5.000000e-01 : f32
    %126 = vector.broadcast %cst_54 : f32 to vector<16x64xf32>
    %127 = arith.mulf %126, %125 : vector<16x64xf32>
    %cst_55 = arith.constant 0.707106769 : f32
    %128 = vector.broadcast %cst_55 : f32 to vector<16x64xf32>
    %129 = arith.mulf %125, %128 : vector<16x64xf32>
    %130 = math.absf %129 : vector<16x64xf32>
    %cst_56 = arith.constant 0.327591091 : f32
    %131 = vector.broadcast %cst_56 : f32 to vector<16x64xf32>
    %132 = arith.mulf %131, %130 : vector<16x64xf32>
    %cst_57 = arith.constant 1.000000e+00 : f32
    %133 = vector.broadcast %cst_57 : f32 to vector<16x64xf32>
    %134 = arith.addf %133, %132 : vector<16x64xf32>
    %cst_58 = arith.constant 1.000000e+00 : f32
    %135 = vector.broadcast %cst_58 : f32 to vector<16x64xf32>
    %136 = arith.divf %135, %134 : vector<16x64xf32>
    %cst_59 = arith.constant 1.06140542 : f32
    %137 = vector.broadcast %cst_59 : f32 to vector<16x64xf32>
    %138 = arith.mulf %137, %136 : vector<16x64xf32>
    %cst_60 = arith.constant -1.45315206 : f32
    %139 = vector.broadcast %cst_60 : f32 to vector<16x64xf32>
    %140 = arith.addf %138, %139 : vector<16x64xf32>
    %141 = arith.mulf %140, %136 : vector<16x64xf32>
    %cst_61 = arith.constant 1.42141378 : f32
    %142 = vector.broadcast %cst_61 : f32 to vector<16x64xf32>
    %143 = arith.addf %141, %142 : vector<16x64xf32>
    %144 = arith.mulf %143, %136 : vector<16x64xf32>
    %cst_62 = arith.constant -0.284496725 : f32
    %145 = vector.broadcast %cst_62 : f32 to vector<16x64xf32>
    %146 = arith.addf %144, %145 : vector<16x64xf32>
    %147 = arith.mulf %146, %136 : vector<16x64xf32>
    %cst_63 = arith.constant 0.254829586 : f32
    %148 = vector.broadcast %cst_63 : f32 to vector<16x64xf32>
    %149 = arith.addf %147, %148 : vector<16x64xf32>
    %150 = arith.mulf %149, %136 : vector<16x64xf32>
    %cst_64 = arith.constant 0.000000e+00 : f32
    %151 = vector.broadcast %cst_64 : f32 to vector<16x64xf32>
    %152 = arith.subf %151, %130 : vector<16x64xf32>
    %153 = arith.mulf %152, %130 : vector<16x64xf32>
    %154 = math.exp %153 : vector<16x64xf32>
    %155 = arith.mulf %150, %154 : vector<16x64xf32>
    %cst_65 = arith.constant 1.000000e+00 : f32
    %156 = vector.broadcast %cst_65 : f32 to vector<16x64xf32>
    %157 = arith.subf %156, %155 : vector<16x64xf32>
    %cst_66 = arith.constant 0.000000e+00 : f32
    %158 = vector.broadcast %cst_66 : f32 to vector<16x64xf32>
    %159 = arith.cmpf oge, %129, %158 : vector<16x64xf32>
    %cst_67 = arith.constant 0.000000e+00 : f32
    %160 = vector.broadcast %cst_67 : f32 to vector<16x64xf32>
    %161 = arith.subf %160, %157 : vector<16x64xf32>
    %162 = arith.select %159, %157, %161 : vector<16x64xi1>, vector<16x64xf32>
    %cst_68 = arith.constant 1.000000e+00 : f32
    %163 = vector.broadcast %cst_68 : f32 to vector<16x64xf32>
    %164 = arith.addf %163, %162 : vector<16x64xf32>
    %165 = arith.mulf %127, %164 : vector<16x64xf32>
    %cst_69 = arith.constant dense<0.000000e+00> : vector<16x32xf32>
    %166 = tpu.matmul %165, %48, %cst_69 {dimension_numbers = #tpu.dot_dimension_numbers<[1], [0], [0], [1], [0, 0, 1, 1], [], []>} : vector<16x64xf32>, vector<64x32xf32>, vector<16x32xf32> -> vector<16x32xf32>
    %167 = vector.broadcast %50 : vector<1x32xf32> to vector<16x32xf32>
    %168 = arith.addf %166, %167 : vector<16x32xf32>
    %169 = arith.addf %122, %168 : vector<16x32xf32>
    %cst_70 = arith.constant dense<0.000000e+00> : vector<16xf32>
    %170 = vector.multi_reduction <add>, %169, %cst_70 [1] : vector<16x32xf32> to vector<16xf32>
    %171 = vector.shape_cast %170 : vector<16xf32> to vector<16x1xf32>
    %cst_71 = arith.constant 3.200000e+01 : f32
    %172 = vector.broadcast %cst_71 : f32 to vector<16x1xf32>
    %173 = arith.divf %171, %172 : vector<16x1xf32>
    %174 = vector.broadcast %173 : vector<16x1xf32> to vector<16x32xf32>
    %175 = arith.subf %169, %174 : vector<16x32xf32>
    %176 = arith.mulf %175, %175 : vector<16x32xf32>
    %cst_72 = arith.constant dense<0.000000e+00> : vector<16xf32>
    %177 = vector.multi_reduction <add>, %176, %cst_72 [1] : vector<16x32xf32> to vector<16xf32>
    %178 = vector.shape_cast %177 : vector<16xf32> to vector<16x1xf32>
    %cst_73 = arith.constant 3.200000e+01 : f32
    %179 = vector.broadcast %cst_73 : f32 to vector<16x1xf32>
    %180 = arith.divf %178, %179 : vector<16x1xf32>
    %181 = vector.broadcast %173 : vector<16x1xf32> to vector<16x32xf32>
    %182 = arith.subf %169, %181 : vector<16x32xf32>
    %cst_74 = arith.constant 9.99999996E-13 : f32
    %183 = vector.broadcast %cst_74 : f32 to vector<16x1xf32>
    %184 = arith.addf %180, %183 : vector<16x1xf32>
    %185 = math.rsqrt %184 : vector<16x1xf32>
    %186 = vector.broadcast %185 : vector<16x1xf32> to vector<16x32xf32>
    %187 = arith.mulf %182, %186 : vector<16x32xf32>
    %188 = vector.broadcast %52 : vector<1x32xf32> to vector<16x32xf32>
    %189 = arith.mulf %187, %188 : vector<16x32xf32>
    %190 = vector.broadcast %54 : vector<1x32xf32> to vector<16x32xf32>
    %191 = arith.addf %189, %190 : vector<16x32xf32>
    %c1 = arith.constant 1 : index
    %c0_75 = arith.constant 0 : index
    %c0_76 = arith.constant 0 : index
    %192 = vector.load %arg2[%c1, %c0_75, %c0_76] : memref<2x168x128xf32, #tpu.memory_space<vmem>>, vector<1x32x96xf32>
    %193 = vector.shape_cast %192 : vector<1x32x96xf32> to vector<32x96xf32>
    %c1_77 = arith.constant 1 : index
    %c160_78 = arith.constant 160 : index
    %c0_79 = arith.constant 0 : index
    %194 = vector.load %arg2[%c1_77, %c160_78, %c0_79] : memref<2x168x128xf32, #tpu.memory_space<vmem>>, vector<1x1x96xf32>
    %195 = vector.shape_cast %194 : vector<1x1x96xf32> to vector<1x96xf32>
    %c1_80 = arith.constant 1 : index
    %c32_81 = arith.constant 32 : index
    %c0_82 = arith.constant 0 : index
    %196 = vector.load %arg2[%c1_80, %c32_81, %c0_82] : memref<2x168x128xf32, #tpu.memory_space<vmem>>, vector<1x32x32xf32>
    %197 = vector.shape_cast %196 : vector<1x32x32xf32> to vector<32x32xf32>
    %c1_83 = arith.constant 1 : index
    %c161_84 = arith.constant 161 : index
    %c0_85 = arith.constant 0 : index
    %198 = vector.load %arg2[%c1_83, %c161_84, %c0_85] : memref<2x168x128xf32, #tpu.memory_space<vmem>>, vector<1x1x32xf32>
    %199 = vector.shape_cast %198 : vector<1x1x32xf32> to vector<1x32xf32>
    %c1_86 = arith.constant 1 : index
    %c162_87 = arith.constant 162 : index
    %c0_88 = arith.constant 0 : index
    %200 = vector.load %arg2[%c1_86, %c162_87, %c0_88] : memref<2x168x128xf32, #tpu.memory_space<vmem>>, vector<1x1x32xf32>
    %201 = vector.shape_cast %200 : vector<1x1x32xf32> to vector<1x32xf32>
    %c1_89 = arith.constant 1 : index
    %c163_90 = arith.constant 163 : index
    %c0_91 = arith.constant 0 : index
    %202 = vector.load %arg2[%c1_89, %c163_90, %c0_91] : memref<2x168x128xf32, #tpu.memory_space<vmem>>, vector<1x1x32xf32>
    %203 = vector.shape_cast %202 : vector<1x1x32xf32> to vector<1x32xf32>
    %c1_92 = arith.constant 1 : index
    %c64_93 = arith.constant 64 : index
    %c0_94 = arith.constant 0 : index
    %204 = vector.load %arg2[%c1_92, %c64_93, %c0_94] : memref<2x168x128xf32, #tpu.memory_space<vmem>>, vector<1x32x64xf32>
    %205 = vector.shape_cast %204 : vector<1x32x64xf32> to vector<32x64xf32>
    %c1_95 = arith.constant 1 : index
    %c164_96 = arith.constant 164 : index
    %c0_97 = arith.constant 0 : index
    %206 = vector.load %arg2[%c1_95, %c164_96, %c0_97] : memref<2x168x128xf32, #tpu.memory_space<vmem>>, vector<1x1x64xf32>
    %207 = vector.shape_cast %206 : vector<1x1x64xf32> to vector<1x64xf32>
    %c1_98 = arith.constant 1 : index
    %c96_99 = arith.constant 96 : index
    %c0_100 = arith.constant 0 : index
    %208 = vector.load %arg2[%c1_98, %c96_99, %c0_100] : memref<2x168x128xf32, #tpu.memory_space<vmem>>, vector<1x64x32xf32>
    %209 = vector.shape_cast %208 : vector<1x64x32xf32> to vector<64x32xf32>
    %c1_101 = arith.constant 1 : index
    %c165_102 = arith.constant 165 : index
    %c0_103 = arith.constant 0 : index
    %210 = vector.load %arg2[%c1_101, %c165_102, %c0_103] : memref<2x168x128xf32, #tpu.memory_space<vmem>>, vector<1x1x32xf32>
    %211 = vector.shape_cast %210 : vector<1x1x32xf32> to vector<1x32xf32>
    %c1_104 = arith.constant 1 : index
    %c166_105 = arith.constant 166 : index
    %c0_106 = arith.constant 0 : index
    %212 = vector.load %arg2[%c1_104, %c166_105, %c0_106] : memref<2x168x128xf32, #tpu.memory_space<vmem>>, vector<1x1x32xf32>
    %213 = vector.shape_cast %212 : vector<1x1x32xf32> to vector<1x32xf32>
    %c1_107 = arith.constant 1 : index
    %c167_108 = arith.constant 167 : index
    %c0_109 = arith.constant 0 : index
    %214 = vector.load %arg2[%c1_107, %c167_108, %c0_109] : memref<2x168x128xf32, #tpu.memory_space<vmem>>, vector<1x1x32xf32>
    %215 = vector.shape_cast %214 : vector<1x1x32xf32> to vector<1x32xf32>
    %cst_110 = arith.constant dense<0.000000e+00> : vector<16x96xf32>
    %216 = tpu.matmul %191, %193, %cst_110 {dimension_numbers = #tpu.dot_dimension_numbers<[1], [0], [0], [1], [0, 0, 1, 1], [], []>} : vector<16x32xf32>, vector<32x96xf32>, vector<16x96xf32> -> vector<16x96xf32>
    %217 = vector.broadcast %195 : vector<1x96xf32> to vector<16x96xf32>
    %218 = arith.addf %216, %217 : vector<16x96xf32>
    %219 = vector.shape_cast %218 : vector<16x96xf32> to vector<2x8x96xf32>
    %220 = vector.extract_strided_slice %219 {offsets = [0, 0, 0], sizes = [2, 8, 16], strides = [1, 1, 1]} : vector<2x8x96xf32> to vector<2x8x16xf32>
    %221 = vector.extract_strided_slice %219 {offsets = [0, 0, 32], sizes = [2, 8, 16], strides = [1, 1, 1]} : vector<2x8x96xf32> to vector<2x8x16xf32>
    %222 = vector.extract_strided_slice %219 {offsets = [0, 0, 64], sizes = [2, 8, 16], strides = [1, 1, 1]} : vector<2x8x96xf32> to vector<2x8x16xf32>
    "tpu.trace_start"() <{level = 10 : i32, message = "bqd,bkd->bqk"}> : () -> ()
    %cst_111 = arith.constant dense<0.000000e+00> : vector<2x8x8xf32>
    %223 = tpu.matmul %220, %221, %cst_111 {dimension_numbers = #tpu.dot_dimension_numbers<[2], [2], [1], [1], [0, 0, 0, 1, 1, 1], [0], [0]>} : vector<2x8x16xf32>, vector<2x8x16xf32>, vector<2x8x8xf32> -> vector<2x8x8xf32>
    "tpu.trace_stop"() : () -> ()
    %cst_112 = arith.constant 2.500000e-01 : f32
    %224 = vector.broadcast %cst_112 : f32 to vector<2x8x8xf32>
    %225 = arith.mulf %223, %224 : vector<2x8x8xf32>
    %226 = vector.broadcast %30 : vector<2x1x8xf32> to vector<2x8x8xf32>
    %227 = arith.addf %225, %226 : vector<2x8x8xf32>
    %cst_113 = arith.constant dense<0xFF800000> : vector<2x8xf32>
    %228 = vector.multi_reduction <maximumf>, %227, %cst_113 [2] : vector<2x8x8xf32> to vector<2x8xf32>
    %229 = vector.shape_cast %228 : vector<2x8xf32> to vector<2x8x1xf32>
    %230 = vector.broadcast %229 : vector<2x8x1xf32> to vector<2x8x8xf32>
    %231 = arith.subf %227, %230 : vector<2x8x8xf32>
    %232 = math.exp %231 : vector<2x8x8xf32>
    %cst_114 = arith.constant dense<0.000000e+00> : vector<2x8xf32>
    %233 = vector.multi_reduction <add>, %232, %cst_114 [2] : vector<2x8x8xf32> to vector<2x8xf32>
    %234 = vector.shape_cast %233 : vector<2x8xf32> to vector<2x8x1xf32>
    %235 = vector.broadcast %234 : vector<2x8x1xf32> to vector<2x8x8xf32>
    %236 = arith.divf %232, %235 : vector<2x8x8xf32>
    "tpu.trace_start"() <{level = 10 : i32, message = "bqk,bkd->bqd"}> : () -> ()
    %cst_115 = arith.constant dense<0.000000e+00> : vector<2x8x16xf32>
    %237 = tpu.matmul %236, %222, %cst_115 {dimension_numbers = #tpu.dot_dimension_numbers<[2], [1], [1], [2], [0, 0, 0, 1, 1, 2], [0], [0]>} : vector<2x8x8xf32>, vector<2x8x16xf32>, vector<2x8x16xf32> -> vector<2x8x16xf32>
    "tpu.trace_stop"() : () -> ()
    %238 = vector.extract_strided_slice %219 {offsets = [0, 0, 16], sizes = [2, 8, 16], strides = [1, 1, 1]} : vector<2x8x96xf32> to vector<2x8x16xf32>
    %239 = vector.extract_strided_slice %219 {offsets = [0, 0, 48], sizes = [2, 8, 16], strides = [1, 1, 1]} : vector<2x8x96xf32> to vector<2x8x16xf32>
    %240 = vector.extract_strided_slice %219 {offsets = [0, 0, 80], sizes = [2, 8, 16], strides = [1, 1, 1]} : vector<2x8x96xf32> to vector<2x8x16xf32>
    "tpu.trace_start"() <{level = 10 : i32, message = "bqd,bkd->bqk"}> : () -> ()
    %cst_116 = arith.constant dense<0.000000e+00> : vector<2x8x8xf32>
    %241 = tpu.matmul %238, %239, %cst_116 {dimension_numbers = #tpu.dot_dimension_numbers<[2], [2], [1], [1], [0, 0, 0, 1, 1, 1], [0], [0]>} : vector<2x8x16xf32>, vector<2x8x16xf32>, vector<2x8x8xf32> -> vector<2x8x8xf32>
    "tpu.trace_stop"() : () -> ()
    %cst_117 = arith.constant 2.500000e-01 : f32
    %242 = vector.broadcast %cst_117 : f32 to vector<2x8x8xf32>
    %243 = arith.mulf %241, %242 : vector<2x8x8xf32>
    %244 = vector.broadcast %30 : vector<2x1x8xf32> to vector<2x8x8xf32>
    %245 = arith.addf %243, %244 : vector<2x8x8xf32>
    %cst_118 = arith.constant dense<0xFF800000> : vector<2x8xf32>
    %246 = vector.multi_reduction <maximumf>, %245, %cst_118 [2] : vector<2x8x8xf32> to vector<2x8xf32>
    %247 = vector.shape_cast %246 : vector<2x8xf32> to vector<2x8x1xf32>
    %248 = vector.broadcast %247 : vector<2x8x1xf32> to vector<2x8x8xf32>
    %249 = arith.subf %245, %248 : vector<2x8x8xf32>
    %250 = math.exp %249 : vector<2x8x8xf32>
    %cst_119 = arith.constant dense<0.000000e+00> : vector<2x8xf32>
    %251 = vector.multi_reduction <add>, %250, %cst_119 [2] : vector<2x8x8xf32> to vector<2x8xf32>
    %252 = vector.shape_cast %251 : vector<2x8xf32> to vector<2x8x1xf32>
    %253 = vector.broadcast %252 : vector<2x8x1xf32> to vector<2x8x8xf32>
    %254 = arith.divf %250, %253 : vector<2x8x8xf32>
    "tpu.trace_start"() <{level = 10 : i32, message = "bqk,bkd->bqd"}> : () -> ()
    %cst_120 = arith.constant dense<0.000000e+00> : vector<2x8x16xf32>
    %255 = tpu.matmul %254, %240, %cst_120 {dimension_numbers = #tpu.dot_dimension_numbers<[2], [1], [1], [2], [0, 0, 0, 1, 1, 2], [0], [0]>} : vector<2x8x8xf32>, vector<2x8x16xf32>, vector<2x8x16xf32> -> vector<2x8x16xf32>
    "tpu.trace_stop"() : () -> ()
    %256 = tpu.concatenate %237, %255 in 2 : vector<2x8x16xf32>, vector<2x8x16xf32> -> vector<2x8x32xf32>
    %257 = vector.shape_cast %256 : vector<2x8x32xf32> to vector<16x32xf32>
    %cst_121 = arith.constant dense<0.000000e+00> : vector<16x32xf32>
    %258 = tpu.matmul %257, %197, %cst_121 {dimension_numbers = #tpu.dot_dimension_numbers<[1], [0], [0], [1], [0, 0, 1, 1], [], []>} : vector<16x32xf32>, vector<32x32xf32>, vector<16x32xf32> -> vector<16x32xf32>
    %259 = vector.broadcast %199 : vector<1x32xf32> to vector<16x32xf32>
    %260 = arith.addf %258, %259 : vector<16x32xf32>
    %261 = arith.addf %191, %260 : vector<16x32xf32>
    %cst_122 = arith.constant dense<0.000000e+00> : vector<16xf32>
    %262 = vector.multi_reduction <add>, %261, %cst_122 [1] : vector<16x32xf32> to vector<16xf32>
    %263 = vector.shape_cast %262 : vector<16xf32> to vector<16x1xf32>
    %cst_123 = arith.constant 3.200000e+01 : f32
    %264 = vector.broadcast %cst_123 : f32 to vector<16x1xf32>
    %265 = arith.divf %263, %264 : vector<16x1xf32>
    %266 = vector.broadcast %265 : vector<16x1xf32> to vector<16x32xf32>
    %267 = arith.subf %261, %266 : vector<16x32xf32>
    %268 = arith.mulf %267, %267 : vector<16x32xf32>
    %cst_124 = arith.constant dense<0.000000e+00> : vector<16xf32>
    %269 = vector.multi_reduction <add>, %268, %cst_124 [1] : vector<16x32xf32> to vector<16xf32>
    %270 = vector.shape_cast %269 : vector<16xf32> to vector<16x1xf32>
    %cst_125 = arith.constant 3.200000e+01 : f32
    %271 = vector.broadcast %cst_125 : f32 to vector<16x1xf32>
    %272 = arith.divf %270, %271 : vector<16x1xf32>
    %273 = vector.broadcast %265 : vector<16x1xf32> to vector<16x32xf32>
    %274 = arith.subf %261, %273 : vector<16x32xf32>
    %cst_126 = arith.constant 9.99999996E-13 : f32
    %275 = vector.broadcast %cst_126 : f32 to vector<16x1xf32>
    %276 = arith.addf %272, %275 : vector<16x1xf32>
    %277 = math.rsqrt %276 : vector<16x1xf32>
    %278 = vector.broadcast %277 : vector<16x1xf32> to vector<16x32xf32>
    %279 = arith.mulf %274, %278 : vector<16x32xf32>
    %280 = vector.broadcast %201 : vector<1x32xf32> to vector<16x32xf32>
    %281 = arith.mulf %279, %280 : vector<16x32xf32>
    %282 = vector.broadcast %203 : vector<1x32xf32> to vector<16x32xf32>
    %283 = arith.addf %281, %282 : vector<16x32xf32>
    %cst_127 = arith.constant dense<0.000000e+00> : vector<16x64xf32>
    %284 = tpu.matmul %283, %205, %cst_127 {dimension_numbers = #tpu.dot_dimension_numbers<[1], [0], [0], [1], [0, 0, 1, 1], [], []>} : vector<16x32xf32>, vector<32x64xf32>, vector<16x64xf32> -> vector<16x64xf32>
    %285 = vector.broadcast %207 : vector<1x64xf32> to vector<16x64xf32>
    %286 = arith.addf %284, %285 : vector<16x64xf32>
    %cst_128 = arith.constant 5.000000e-01 : f32
    %287 = vector.broadcast %cst_128 : f32 to vector<16x64xf32>
    %288 = arith.mulf %287, %286 : vector<16x64xf32>
    %cst_129 = arith.constant 0.707106769 : f32
    %289 = vector.broadcast %cst_129 : f32 to vector<16x64xf32>
    %290 = arith.mulf %286, %289 : vector<16x64xf32>
    %291 = math.absf %290 : vector<16x64xf32>
    %cst_130 = arith.constant 0.327591091 : f32
    %292 = vector.broadcast %cst_130 : f32 to vector<16x64xf32>
    %293 = arith.mulf %292, %291 : vector<16x64xf32>
    %cst_131 = arith.constant 1.000000e+00 : f32
    %294 = vector.broadcast %cst_131 : f32 to vector<16x64xf32>
    %295 = arith.addf %294, %293 : vector<16x64xf32>
    %cst_132 = arith.constant 1.000000e+00 : f32
    %296 = vector.broadcast %cst_132 : f32 to vector<16x64xf32>
    %297 = arith.divf %296, %295 : vector<16x64xf32>
    %cst_133 = arith.constant 1.06140542 : f32
    %298 = vector.broadcast %cst_133 : f32 to vector<16x64xf32>
    %299 = arith.mulf %298, %297 : vector<16x64xf32>
    %cst_134 = arith.constant -1.45315206 : f32
    %300 = vector.broadcast %cst_134 : f32 to vector<16x64xf32>
    %301 = arith.addf %299, %300 : vector<16x64xf32>
    %302 = arith.mulf %301, %297 : vector<16x64xf32>
    %cst_135 = arith.constant 1.42141378 : f32
    %303 = vector.broadcast %cst_135 : f32 to vector<16x64xf32>
    %304 = arith.addf %302, %303 : vector<16x64xf32>
    %305 = arith.mulf %304, %297 : vector<16x64xf32>
    %cst_136 = arith.constant -0.284496725 : f32
    %306 = vector.broadcast %cst_136 : f32 to vector<16x64xf32>
    %307 = arith.addf %305, %306 : vector<16x64xf32>
    %308 = arith.mulf %307, %297 : vector<16x64xf32>
    %cst_137 = arith.constant 0.254829586 : f32
    %309 = vector.broadcast %cst_137 : f32 to vector<16x64xf32>
    %310 = arith.addf %308, %309 : vector<16x64xf32>
    %311 = arith.mulf %310, %297 : vector<16x64xf32>
    %cst_138 = arith.constant 0.000000e+00 : f32
    %312 = vector.broadcast %cst_138 : f32 to vector<16x64xf32>
    %313 = arith.subf %312, %291 : vector<16x64xf32>
    %314 = arith.mulf %313, %291 : vector<16x64xf32>
    %315 = math.exp %314 : vector<16x64xf32>
    %316 = arith.mulf %311, %315 : vector<16x64xf32>
    %cst_139 = arith.constant 1.000000e+00 : f32
    %317 = vector.broadcast %cst_139 : f32 to vector<16x64xf32>
    %318 = arith.subf %317, %316 : vector<16x64xf32>
    %cst_140 = arith.constant 0.000000e+00 : f32
    %319 = vector.broadcast %cst_140 : f32 to vector<16x64xf32>
    %320 = arith.cmpf oge, %290, %319 : vector<16x64xf32>
    %cst_141 = arith.constant 0.000000e+00 : f32
    %321 = vector.broadcast %cst_141 : f32 to vector<16x64xf32>
    %322 = arith.subf %321, %318 : vector<16x64xf32>
    %323 = arith.select %320, %318, %322 : vector<16x64xi1>, vector<16x64xf32>
    %cst_142 = arith.constant 1.000000e+00 : f32
    %324 = vector.broadcast %cst_142 : f32 to vector<16x64xf32>
    %325 = arith.addf %324, %323 : vector<16x64xf32>
    %326 = arith.mulf %288, %325 : vector<16x64xf32>
    %cst_143 = arith.constant dense<0.000000e+00> : vector<16x32xf32>
    %327 = tpu.matmul %326, %209, %cst_143 {dimension_numbers = #tpu.dot_dimension_numbers<[1], [0], [0], [1], [0, 0, 1, 1], [], []>} : vector<16x64xf32>, vector<64x32xf32>, vector<16x32xf32> -> vector<16x32xf32>
    %328 = vector.broadcast %211 : vector<1x32xf32> to vector<16x32xf32>
    %329 = arith.addf %327, %328 : vector<16x32xf32>
    %330 = arith.addf %283, %329 : vector<16x32xf32>
    %cst_144 = arith.constant dense<0.000000e+00> : vector<16xf32>
    %331 = vector.multi_reduction <add>, %330, %cst_144 [1] : vector<16x32xf32> to vector<16xf32>
    %332 = vector.shape_cast %331 : vector<16xf32> to vector<16x1xf32>
    %cst_145 = arith.constant 3.200000e+01 : f32
    %333 = vector.broadcast %cst_145 : f32 to vector<16x1xf32>
    %334 = arith.divf %332, %333 : vector<16x1xf32>
    %335 = vector.broadcast %334 : vector<16x1xf32> to vector<16x32xf32>
    %336 = arith.subf %330, %335 : vector<16x32xf32>
    %337 = arith.mulf %336, %336 : vector<16x32xf32>
    %cst_146 = arith.constant dense<0.000000e+00> : vector<16xf32>
    %338 = vector.multi_reduction <add>, %337, %cst_146 [1] : vector<16x32xf32> to vector<16xf32>
    %339 = vector.shape_cast %338 : vector<16xf32> to vector<16x1xf32>
    %cst_147 = arith.constant 3.200000e+01 : f32
    %340 = vector.broadcast %cst_147 : f32 to vector<16x1xf32>
    %341 = arith.divf %339, %340 : vector<16x1xf32>
    %342 = vector.broadcast %334 : vector<16x1xf32> to vector<16x32xf32>
    %343 = arith.subf %330, %342 : vector<16x32xf32>
    %cst_148 = arith.constant 9.99999996E-13 : f32
    %344 = vector.broadcast %cst_148 : f32 to vector<16x1xf32>
    %345 = arith.addf %341, %344 : vector<16x1xf32>
    %346 = math.rsqrt %345 : vector<16x1xf32>
    %347 = vector.broadcast %346 : vector<16x1xf32> to vector<16x32xf32>
    %348 = arith.mulf %343, %347 : vector<16x32xf32>
    %349 = vector.broadcast %213 : vector<1x32xf32> to vector<16x32xf32>
    %350 = arith.mulf %348, %349 : vector<16x32xf32>
    %351 = vector.broadcast %215 : vector<1x32xf32> to vector<16x32xf32>
    %352 = arith.addf %350, %351 : vector<16x32xf32>
    %c0_149 = arith.constant 0 : index
    %c0_150 = arith.constant 0 : index
    %353 = vector.load %arg3[%c0_149, %c0_150] : memref<40x128xf32, #tpu.memory_space<vmem>>, vector<32x128xf32>
    %c32_151 = arith.constant 32 : index
    %c0_152 = arith.constant 0 : index
    %354 = vector.load %arg3[%c32_151, %c0_152] : memref<40x128xf32, #tpu.memory_space<vmem>>, vector<1x128xf32>
    %cst_153 = arith.constant dense<0.000000e+00> : vector<16x128xf32>
    %355 = tpu.matmul %352, %353, %cst_153 {dimension_numbers = #tpu.dot_dimension_numbers<[1], [0], [0], [1], [0, 0, 1, 1], [], []>} : vector<16x32xf32>, vector<32x128xf32>, vector<16x128xf32> -> vector<16x128xf32>
    %356 = vector.broadcast %354 : vector<1x128xf32> to vector<16x128xf32>
    %357 = arith.addf %355, %356 : vector<16x128xf32>
    %358 = vector.shape_cast %357 : vector<16x128xf32> to vector<2x8x128xf32>
    %359 = vector.extract_strided_slice %358 {offsets = [0, 0, 2], sizes = [2, 1, 32], strides = [1, 1, 1]} : vector<2x8x128xf32> to vector<2x1x32xf32>
    %360 = vector.shape_cast %359 : vector<2x1x32xf32> to vector<2x32xf32>
    %cst_154 = arith.constant 5.000000e-01 : f32
    %361 = vector.broadcast %cst_154 : f32 to vector<2x32xf32>
    %362 = arith.mulf %361, %360 : vector<2x32xf32>
    %cst_155 = arith.constant 0.707106769 : f32
    %363 = vector.broadcast %cst_155 : f32 to vector<2x32xf32>
    %364 = arith.mulf %360, %363 : vector<2x32xf32>
    %365 = math.absf %364 : vector<2x32xf32>
    %cst_156 = arith.constant 0.327591091 : f32
    %366 = vector.broadcast %cst_156 : f32 to vector<2x32xf32>
    %367 = arith.mulf %366, %365 : vector<2x32xf32>
    %cst_157 = arith.constant 1.000000e+00 : f32
    %368 = vector.broadcast %cst_157 : f32 to vector<2x32xf32>
    %369 = arith.addf %368, %367 : vector<2x32xf32>
    %cst_158 = arith.constant 1.000000e+00 : f32
    %370 = vector.broadcast %cst_158 : f32 to vector<2x32xf32>
    %371 = arith.divf %370, %369 : vector<2x32xf32>
    %cst_159 = arith.constant 1.06140542 : f32
    %372 = vector.broadcast %cst_159 : f32 to vector<2x32xf32>
    %373 = arith.mulf %372, %371 : vector<2x32xf32>
    %cst_160 = arith.constant -1.45315206 : f32
    %374 = vector.broadcast %cst_160 : f32 to vector<2x32xf32>
    %375 = arith.addf %373, %374 : vector<2x32xf32>
    %376 = arith.mulf %375, %371 : vector<2x32xf32>
    %cst_161 = arith.constant 1.42141378 : f32
    %377 = vector.broadcast %cst_161 : f32 to vector<2x32xf32>
    %378 = arith.addf %376, %377 : vector<2x32xf32>
    %379 = arith.mulf %378, %371 : vector<2x32xf32>
    %cst_162 = arith.constant -0.284496725 : f32
    %380 = vector.broadcast %cst_162 : f32 to vector<2x32xf32>
    %381 = arith.addf %379, %380 : vector<2x32xf32>
    %382 = arith.mulf %381, %371 : vector<2x32xf32>
    %cst_163 = arith.constant 0.254829586 : f32
    %383 = vector.broadcast %cst_163 : f32 to vector<2x32xf32>
    %384 = arith.addf %382, %383 : vector<2x32xf32>
    %385 = arith.mulf %384, %371 : vector<2x32xf32>
    %cst_164 = arith.constant 0.000000e+00 : f32
    %386 = vector.broadcast %cst_164 : f32 to vector<2x32xf32>
    %387 = arith.subf %386, %365 : vector<2x32xf32>
    %388 = arith.mulf %387, %365 : vector<2x32xf32>
    %389 = math.exp %388 : vector<2x32xf32>
    %390 = arith.mulf %385, %389 : vector<2x32xf32>
    %cst_165 = arith.constant 1.000000e+00 : f32
    %391 = vector.broadcast %cst_165 : f32 to vector<2x32xf32>
    %392 = arith.subf %391, %390 : vector<2x32xf32>
    %cst_166 = arith.constant 0.000000e+00 : f32
    %393 = vector.broadcast %cst_166 : f32 to vector<2x32xf32>
    %394 = arith.cmpf oge, %364, %393 : vector<2x32xf32>
    %cst_167 = arith.constant 0.000000e+00 : f32
    %395 = vector.broadcast %cst_167 : f32 to vector<2x32xf32>
    %396 = arith.subf %395, %392 : vector<2x32xf32>
    %397 = arith.select %394, %392, %396 : vector<2x32xi1>, vector<2x32xf32>
    %cst_168 = arith.constant 1.000000e+00 : f32
    %398 = vector.broadcast %cst_168 : f32 to vector<2x32xf32>
    %399 = arith.addf %398, %397 : vector<2x32xf32>
    %400 = arith.mulf %362, %399 : vector<2x32xf32>
    %c33 = arith.constant 33 : index
    %c0_169 = arith.constant 0 : index
    %401 = vector.load %arg3[%c33, %c0_169] : memref<40x128xf32, #tpu.memory_space<vmem>>, vector<1x32xf32>
    %c34 = arith.constant 34 : index
    %c0_170 = arith.constant 0 : index
    %402 = vector.load %arg3[%c34, %c0_170] : memref<40x128xf32, #tpu.memory_space<vmem>>, vector<1x1xf32>
    %403 = vector.broadcast %401 : vector<1x32xf32> to vector<2x32xf32>
    %404 = arith.mulf %400, %403 : vector<2x32xf32>
    %cst_171 = arith.constant dense<0.000000e+00> : vector<2xf32>
    %405 = vector.multi_reduction <add>, %404, %cst_171 [1] : vector<2x32xf32> to vector<2xf32>
    %406 = vector.shape_cast %405 : vector<2xf32> to vector<2x1xf32>
    %407 = vector.broadcast %402 : vector<1x1xf32> to vector<2x1xf32>
    %408 = arith.addf %406, %407 : vector<2x1xf32>
    %cst_172 = arith.constant 0.000000e+00 : f32
    %409 = vector.broadcast %cst_172 : f32 to vector<2x1xf32>
    %410 = arith.subf %409, %408 : vector<2x1xf32>
    %411 = math.exp %410 : vector<2x1xf32>
    %cst_173 = arith.constant 1.000000e+00 : f32
    %412 = vector.broadcast %cst_173 : f32 to vector<2x1xf32>
    %413 = arith.addf %412, %411 : vector<2x1xf32>
    %cst_174 = arith.constant 1.000000e+00 : f32
    %414 = vector.broadcast %cst_174 : f32 to vector<2x1xf32>
    %415 = arith.divf %414, %413 : vector<2x1xf32>
    %416 = tpu.iota {dimensions = array<i32: 1>} : vector<16x128xi32>
    %417 = vector.shape_cast %415 : vector<2x1xf32> to vector<2x1x1xf32>
    %418 = vector.shape_cast %417 : vector<2x1x1xf32> to vector<2x1x1xf32>
    %419 = vector.broadcast %418 : vector<2x1x1xf32> to vector<2x8x128xf32>
    %420 = vector.shape_cast %419 : vector<2x8x128xf32> to vector<16x128xf32>
    %c2_i32 = arith.constant 2 : i32
    %421 = vector.broadcast %c2_i32 : i32 to vector<16x128xi32>
    %422 = arith.cmpi slt, %416, %421 : vector<16x128xi32>
    %423 = arith.select %422, %357, %420 : vector<16x128xi1>, vector<16x128xf32>
    %c0_175 = arith.constant 0 : index
    %c0_176 = arith.constant 0 : index
    %424 = vector.load %arg4[%c0_175, %c0_176] : memref<16x128xf32, #tpu.memory_space<vmem>>, vector<16x128xf32>
    tpu.vector_store %arg4[%c0_175, %c0_176], %423 {strides = array<i32>} : memref<16x128xf32, #tpu.memory_space<vmem>>, vector<16x128xf32>,
    return
  }
}

</mosaic_0001>

<llo_original>
// kernel: electra_qa_forward.1
$region0: #{electra_qa_forward.1}
  #allocation0 [shape = 'u32[]', space=smem, size = 0x4, offset = 0x4, fixed_abs, tag = 'smem constant byte address 0x4 - core index']
  #allocation1 [shape = 'u32[144,128]{1,0:T(1,128)}', space=vmem, size = 0x12000, scoped, tag = 'internal scratch']
  %s0 = inlined_call_operand.vmem [shape: f32[16,32], index: 0, kind: input, shape index: {}]
  %s1 = inlined_call_operand.vmem [shape: f32[2,8], index: 1, kind: input, shape index: {}]
  %s2 = inlined_call_operand.hbm [shape: f32[2,168,128], index: 2, kind: input, shape index: {}]
  %s3 = inlined_call_operand.vmem [shape: f32[40,128], index: 3, kind: input, shape index: {}]
  %s4 = inlined_call_operand.vmem [shape: f32[16,128], index: 4, kind: output, shape index: {}]
  %s5 = sld [smem:[#allocation0]]
  $region30: #{electra_qa_forward.1} parent=0
    _
  %s7 = ssub.s32 1, %s5
  %s8 = scalar_select 0, %s7, %s5
  $region1: #{electra_qa_forward.1} parent=0
    #allocation2 [shape = 'u8[172032]{0}', space=vmem, size = 0x2a000, scoped, tag = 'input window, operand 2, single buffered']
    #allocation3 [shape = 's32[1]{0}', space=sflag, size = 0x4, scoped, tag = 'scoped memory for electra_qa_forward.1']
    %9 = vsyncpa [#allocation3], 0
    // Predicated region
    $region2: #{electra_qa_forward.1} parent=1 // pred_check
      _
    $region3: #{electra_qa_forward.1} parent=1 // pred_check_branch
      %11 = sbr.rel (0) target = $region5
    $region4: #{electra_qa_forward.1} parent=1 // pred_region
      _
    $region5: #{electra_qa_forward.1} parent=1 // pred_fallthru
      _
    // Predicated region
    $region6: #{electra_qa_forward.1} parent=1 // pred_check
      _
    $region7: #{electra_qa_forward.1} parent=1 // pred_check_branch
      %13 = sbr.rel (0) target = $region9
    $region8: #{electra_qa_forward.1} parent=1 // pred_region
      _
    $region9: #{electra_qa_forward.1} parent=1 // pred_fallthru
      _
    // Predicated region
    $region10: #{electra_qa_forward.1} parent=1 // pred_check
      _
    $region11: #{electra_qa_forward.1} parent=1 // pred_check_branch
      %15 = sbr.rel (0) target = $region13
    $region12: #{electra_qa_forward.1} parent=1 // pred_region
      %s17 = ssub.s32 5376, 5376
      %18 = vsyncadd [#allocation3], %s17
      %s19 = sshll.u32 [#allocation2], 4
      %s20 = int_to_ptr.vmem [resolvable:$true] %s19
      %25 = dma.hbm_to_vmem [thread:$0]  %s2, 5376, %s20, [#allocation3], 128, 128, 8
    $region13: #{electra_qa_forward.1} parent=1 // pred_fallthru
      _
    // Predicated region
    $region14: #{electra_qa_forward.1} parent=1 // pred_check
      _
    $region15: #{electra_qa_forward.1} parent=1 // pred_check_branch
      %27 = sbr.rel (0) target = $region17
    $region16: #{electra_qa_forward.1} parent=1 // pred_region
      _
    $region17: #{electra_qa_forward.1} parent=1 // pred_fallthru
      _
    // Predicated region
    $region18: #{electra_qa_forward.1} parent=1 // pred_check
      _
    $region19: #{electra_qa_forward.1} parent=1 // pred_check_branch
      %29 = sbr.rel (0) target = $region21
    $region20: #{electra_qa_forward.1} parent=1 // pred_region
      %30 = dma.done [#allocation3], 5376
    $region21: #{electra_qa_forward.1} parent=1 // pred_fallthru
      _
    %v31 = vld [vmem:[%s3 + $0x23] sm:$0x1]
    %v32 = vld [vmem:[%s3 + $0x24] sm:$0x1]
    %v33 = vld [vmem:[%s0] sm:$0xff]
    %v34 = vld [vmem:[%s0 + $0x8] sm:$0xff]
    %vm35 = vcmask 261120
    %v36 = vsel %vm35, %v33, 0.0
    %37 = vadd.xlane.f32.xlu0 %v36
    %v38 = vpop.xlane.xlu0 %37
    %v39 = vsel %vm35, %v34, 0.0
    %40 = vadd.xlane.f32.xlu0 %v39
    %v41 = vpop.xlane.xlu0 %40
    %v42 = vrcp.pop 32.0
    %v43 = vmul.f32 %v38, %v42
    %v44 = vmul.f32 %v41, %v42
    %v45 = vsub.f32 %v33, %v43
    %v46 = vsub.f32 %v34, %v44
    %v47 = vmul.f32 %v45, %v45
    %v48 = vmul.f32 %v46, %v46
    %v49 = vsel %vm35, %v47, 0.0
    %50 = vadd.xlane.f32.xlu0 %v49
    %v51 = vpop.xlane.xlu0 %50
    %v52 = vsel %vm35, %v48, 0.0
    %53 = vadd.xlane.f32.xlu0 %v52
    %v54 = vpop.xlane.xlu0 %53
    %v55 = vmul.f32 %v51, %v42
    %v56 = vmul.f32 %v54, %v42
    %v57 = vadd.f32 %v55, 1e-12
    %v58 = vadd.f32 %v56, 1e-12
    %v59 = vrsqrt.pop %v57
    %v60 = vrsqrt.pop %v58
    %v61 = vmul.f32 %v45, %v59
    %v62 = vmul.f32 %v46, %v60
    %v63 = vlaneseq
    %v64 = vshrl.u32 %v63, 7
    %v65 = vsub.s32 0, %v64
    %v66 = vrot.slane %v31, %v65
    %v67 = vmul.f32 %v61, %v66
    %v68 = vmul.f32 %v62, %v66
    %v69 = vlaneseq
    %v70 = vshrl.u32 %v69, 7
    %v71 = vsub.s32 0, %v70
    %v72 = vrot.slane %v32, %v71
    %v73 = vadd.f32 %v67, %v72
    %v74 = vadd.f32 %v68, %v72
    %v75 = vld [vmem:[%s1] sm:$0x3]
    %v76 = vsub.f32 1.0, %v75
    %v77 = vmul.f32 %v76, -1e+09
    %v80 = vunpack.c.l.s4 1966171168
    %v81 = vunpack.c.0.s8 %v80
    %v82 = vlaneseq
    %v83 = vshrl.u32 %v82, 7
    %v84 = vsub.s32 %v81, %v83
    %v85 = vrot.slane %v77, %v84
    %v86 = vcombine.high %v85, %v85
    %v88 = vunpack.c.l.s4 1966171168
    %v89 = vunpack.c.0.s8 %v88
    %v90 = vlaneseq
    %v91 = vshrl.u32 %v90, 7
    %v92 = vsub.s32 %v89, %v91
    %v93 = vrot.slane %v85, %v92
    %v95 = vunpack.c.l.s4 1966171168
    %v96 = vunpack.c.0.s8 %v95
    %v97 = vlaneseq
    %v98 = vshrl.u32 %v97, 7
    %v99 = vsub.s32 %v96, %v98
    %v100 = vrot.slane %v86, %v99
    %v101 = vld [vmem:[#allocation2] sm:$0xff]
    %v102 = vld [vmem:[#allocation2 + $0x8] sm:$0xff]
    %v103 = vld [vmem:[#allocation2 + $0x10] sm:$0xff]
    %v104 = vld [vmem:[#allocation2 + $0x18] sm:$0xff]
    %v105 = vld [vmem:[#allocation2 + $0xa0] sm:$0x1]
    %v106 = vld [vmem:[#allocation2 + $0x20] sm:$0xff]
    %v107 = vld [vmem:[#allocation2 + $0x28] sm:$0xff]
    %v108 = vld [vmem:[#allocation2 + $0x30] sm:$0xff]
    %v109 = vld [vmem:[#allocation2 + $0x38] sm:$0xff]
    %v110 = vld [vmem:[#allocation2 + $0xa1] sm:$0x1]
    %v111 = vld [vmem:[#allocation2 + $0xa2] sm:$0x1]
    %v112 = vld [vmem:[#allocation2 + $0xa3] sm:$0x1]
    %v113 = vld [vmem:[#allocation2 + $0x40] sm:$0xff]
    %v114 = vld [vmem:[#allocation2 + $0x48] sm:$0xff]
    %v115 = vld [vmem:[#allocation2 + $0x50] sm:$0xff]
    %v116 = vld [vmem:[#allocation2 + $0x58] sm:$0xff]
    %v117 = vld [vmem:[#allocation2 + $0xa4] sm:$0x1]
    %v118 = vld [vmem:[#allocation2 + $0x60] sm:$0xff]
    %v119 = vld [vmem:[#allocation2 + $0x68] sm:$0xff]
    %v120 = vld [vmem:[#allocation2 + $0x70] sm:$0xff]
    %v121 = vld [vmem:[#allocation2 + $0x78] sm:$0xff]
    %v122 = vld [vmem:[#allocation2 + $0x80] sm:$0xff]
    %v123 = vld [vmem:[#allocation2 + $0x88] sm:$0xff]
    %v124 = vld [vmem:[#allocation2 + $0x90] sm:$0xff]
    %v125 = vld [vmem:[#allocation2 + $0x98] sm:$0xff]
    %v126 = vld [vmem:[#allocation2 + $0xa5] sm:$0x1]
    %v127 = vld [vmem:[#allocation2 + $0xa6] sm:$0x1]
    %v128 = vld [vmem:[#allocation2 + $0xa7] sm:$0x1]
    %v129 = vlaneseq
    %v130 = vshrl.u32 %v129, 7
    %v131 = vsub.s32 0, %v130
    %v132 = vrot.slane %v105, %v131
    %v134 = vsel %vm35, %v73, 0
    %v137 = vsel %vm35, %v74, 0
    %139 = vmatprep.subr.mxu0 0.0
    %140 = vmatpush1.msra.mxu0 %v101
    %141 = vmatprep.subr.mxu0 0.0
    %142 = vmatpush1.msra.mxu0 %v102
    %143 = vmatprep.subr.mxu0 0.0
    %144 = vmatpush1.msra.mxu0 %v103
    %145 = vmatprep.subr.mxu0 0.0
    %146 = vmatpush1.msra.mxu0 %v104
    %147 = vmatprep.subr.mxu0 0.0
    %148 = vmatpush1.msra.mxu0 0.0
    %149 = vmatprep.subr.mxu0 0.0
    %150 = vmatpush1.msra.mxu0 0.0
    %151 = vmatprep.subr.mxu0 0.0
    %152 = vmatpush1.msra.mxu0 0.0
    %153 = vmatprep.subr.mxu0 0.0
    %154 = vmatpush1.msra.mxu0 0.0
    %155 = vmatprep.subr.mxu0 0.0
    %156 = vmatpush1.msra.mxu0 0.0
    %157 = vmatprep.subr.mxu0 0.0
    %158 = vmatpush1.msra.mxu0 0.0
    %159 = vmatprep.subr.mxu0 0.0
    %160 = vmatpush1.msra.mxu0 0.0
    %161 = vmatprep.subr.mxu0 0.0
    %162 = vmatpush1.msra.mxu0 0.0
    %163 = vmatprep.subr.mxu0 0.0
    %164 = vmatpush1.msra.mxu0 0.0
    %165 = vmatprep.subr.mxu0 0.0
    %166 = vmatpush1.msra.mxu0 0.0
    %167 = vmatprep.subr.mxu0 0.0
    %168 = vmatpush1.msra.mxu0 0.0
    %169 = vmatprep.subr.mxu0 0.0
    %170 = vmatpush1.msra.mxu0 0.0
    %171 = vmatprep.subr.mxu0 0.0
    %172 = vmatpush1.msra.mxu0 0.0
    %173 = vmatprep.subr.mxu0 0.0
    %174 = vmatpush1.msra.mxu0 0.0
    %175 = vmatprep.subr.mxu0 0.0
    %176 = vmatpush1.msra.mxu0 0.0
    %177 = vmatprep.subr.mxu0 0.0
    %178 = vmatpush1.msra.mxu0 0.0
    %179 = vmatprep.subr.mxu0 0.0
    %180 = vmatpush1.msra.mxu0 0.0
    %181 = vmatprep.subr.mxu0 0.0
    %182 = vmatpush1.msra.mxu0 0.0
    %183 = vmatprep.subr.mxu0 0.0
    %184 = vmatpush1.msra.mxu0 0.0
    %185 = vmatprep.subr.mxu0 0.0
    %186 = vmatpush1.msra.mxu0 0.0
    %187 = vmatprep.subr.mxu0 0.0
    %188 = vmatpush1.msra.mxu0 0.0
    %189 = vmatprep.subr.mxu0 0.0
    %190 = vmatpush1.msra.mxu0 0.0
    %191 = vmatprep.subr.mxu0 0.0
    %192 = vmatpush1.msra.mxu0 0.0
    %193 = vmatprep.subr.mxu0 0.0
    %194 = vmatpush1.msra.mxu0 0.0
    %195 = vmatprep.subr.mxu0 0.0
    %196 = vmatpush1.msra.mxu0 0.0
    %197 = vmatprep.subr.mxu0 0.0
    %198 = vmatpush1.msra.mxu0 0.0
    %199 = vmatprep.subr.mxu0 0.0
    %200 = vmatpush1.msra.mxu0 0.0
    %201 = vmatprep.subr.mxu0 0.0
    %202 = vmatpush1.msra.mxu0 0.0
    %203 = vmatprep.mubr.f32.mxu0 0.0
    %204 = vmatmul.mubr.f32.gmra.mrb[0].mxu0 %v134
    %v205 = vpop.f32.mrb[0].mxu0
    %v206 = vadd.f32 %v132, %v205
    %v207 = vpop.f32.mrb[0].mxu0
    %208 = vmatprep.mubr.f32.mxu0 0.0
    %209 = vmatmul.mubr.f32.gmra.mrb[0].mxu0 %v137
    %v210 = vpop.f32.mrb[0].mxu0
    %v211 = vadd.f32 %v132, %v210
    %v212 = vpop.f32.mrb[0].mxu0
    %213 = vdwg.mxu0
    %215 = vrot.lane.b32.xlu0 %v206, 96
    %v216 = vpop.permute.xlu0 %215
    %vm217 = vcmask 130048
    %v218 = vsel %vm217, %v206, 0
    %v220 = vsel %vm217, %v216, 0
    %222 = vmatprep.subr.mxu0 0.0
    %223 = vmatpush1.xpose.msra.mxu0 %v220
    %224 = vmatprep.subr.mxu0 0.0
    %225 = vmatpush1.xpose.msra.mxu0 0.0
    %226 = vmatprep.subr.mxu0 0.0
    %227 = vmatpush1.xpose.msra.mxu0 0.0
    %228 = vmatprep.subr.mxu0 0.0
    %229 = vmatpush1.xpose.msra.mxu0 0.0
    %230 = vmatprep.subr.mxu0 0.0
    %231 = vmatpush1.xpose.msra.mxu0 0.0
    %232 = vmatprep.subr.mxu0 0.0
    %233 = vmatpush1.xpose.msra.mxu0 0.0
    %234 = vmatprep.subr.mxu0 0.0
    %235 = vmatpush1.xpose.msra.mxu0 0.0
    %236 = vmatprep.subr.mxu0 0.0
    %237 = vmatpush1.xpose.msra.mxu0 0.0
    %238 = vmatprep.subr.mxu0 0.0
    %239 = vmatpush1.xpose.msra.mxu0 0.0
    %240 = vmatprep.subr.mxu0 0.0
    %241 = vmatpush1.xpose.msra.mxu0 0.0
    %242 = vmatprep.subr.mxu0 0.0
    %243 = vmatpush1.xpose.msra.mxu0 0.0
    %244 = vmatprep.subr.mxu0 0.0
    %245 = vmatpush1.xpose.msra.mxu0 0.0
    %246 = vmatprep.subr.mxu0 0.0
    %247 = vmatpush1.xpose.msra.mxu0 0.0
    %248 = vmatprep.subr.mxu0 0.0
    %249 = vmatpush1.xpose.msra.mxu0 0.0
    %250 = vmatprep.subr.mxu0 0.0
    %251 = vmatpush1.xpose.msra.mxu0 0.0
    %252 = vmatprep.subr.mxu0 0.0
    %253 = vmatpush1.xpose.msra.mxu0 0.0
    %254 = vmatprep.subr.mxu0 0.0
    %255 = vmatpush1.xpose.msra.mxu0 0.0
    %256 = vmatprep.subr.mxu0 0.0
    %257 = vmatpush1.xpose.msra.mxu0 0.0
    %258 = vmatprep.subr.mxu0 0.0
    %259 = vmatpush1.xpose.msra.mxu0 0.0
    %260 = vmatprep.subr.mxu0 0.0
    %261 = vmatpush1.xpose.msra.mxu0 0.0
    %262 = vmatprep.subr.mxu0 0.0
    %263 = vmatpush1.xpose.msra.mxu0 0.0
    %264 = vmatprep.subr.mxu0 0.0
    %265 = vmatpush1.xpose.msra.mxu0 0.0
    %266 = vmatprep.subr.mxu0 0.0
    %267 = vmatpush1.xpose.msra.mxu0 0.0
    %268 = vmatprep.subr.mxu0 0.0
    %269 = vmatpush1.xpose.msra.mxu0 0.0
    %270 = vmatprep.subr.mxu0 0.0
    %271 = vmatpush1.xpose.msra.mxu0 0.0
    %272 = vmatprep.subr.mxu0 0.0
    %273 = vmatpush1.xpose.msra.mxu0 0.0
    %274 = vmatprep.subr.mxu0 0.0
    %275 = vmatpush1.xpose.msra.mxu0 0.0
    %276 = vmatprep.subr.mxu0 0.0
    %277 = vmatpush1.xpose.msra.mxu0 0.0
    %278 = vmatprep.subr.mxu0 0.0
    %279 = vmatpush1.xpose.msra.mxu0 0.0
    %280 = vmatprep.subr.mxu0 0.0
    %281 = vmatpush1.xpose.msra.mxu0 0.0
    %282 = vmatprep.subr.mxu0 0.0
    %283 = vmatpush1.xpose.msra.mxu0 0.0
    %284 = vmatprep.subr.mxu0 0.0
    %285 = vmatpush1.xpose.msra.mxu0 0.0
    %286 = vmatprep.mubr.f32.mxu0 0.0
    %287 = vmatmul.mubr.f32.gmra.mrb[0].mxu0 %v218
    %v288 = vpop.f32.mrb[0].mxu0
    %v289 = vadd.f32 0.0, %v288
    %v290 = vpop.f32.mrb[0].mxu0
    %291 = vdwg.mxu0
    %293 = vrot.lane.b32.xlu0 %v211, 96
    %v294 = vpop.permute.xlu0 %293
    %v295 = vsel %vm217, %v211, 0
    %v297 = vsel %vm217, %v294, 0
    %299 = vmatprep.subr.mxu0 0.0
    %300 = vmatpush1.xpose.msra.mxu0 %v297
    %301 = vmatprep.subr.mxu0 0.0
    %302 = vmatpush1.xpose.msra.mxu0 0.0
    %303 = vmatprep.subr.mxu0 0.0
    %304 = vmatpush1.xpose.msra.mxu0 0.0
    %305 = vmatprep.subr.mxu0 0.0
    %306 = vmatpush1.xpose.msra.mxu0 0.0
    %307 = vmatprep.subr.mxu0 0.0
    %308 = vmatpush1.xpose.msra.mxu0 0.0
    %309 = vmatprep.subr.mxu0 0.0
    %310 = vmatpush1.xpose.msra.mxu0 0.0
    %311 = vmatprep.subr.mxu0 0.0
    %312 = vmatpush1.xpose.msra.mxu0 0.0
    %313 = vmatprep.subr.mxu0 0.0
    %314 = vmatpush1.xpose.msra.mxu0 0.0
    %315 = vmatprep.subr.mxu0 0.0
    %316 = vmatpush1.xpose.msra.mxu0 0.0
    %317 = vmatprep.subr.mxu0 0.0
    %318 = vmatpush1.xpose.msra.mxu0 0.0
    %319 = vmatprep.subr.mxu0 0.0
    %320 = vmatpush1.xpose.msra.mxu0 0.0
    %321 = vmatprep.subr.mxu0 0.0
    %322 = vmatpush1.xpose.msra.mxu0 0.0
    %323 = vmatprep.subr.mxu0 0.0
    %324 = vmatpush1.xpose.msra.mxu0 0.0
    %325 = vmatprep.subr.mxu0 0.0
    %326 = vmatpush1.xpose.msra.mxu0 0.0
    %327 = vmatprep.subr.mxu0 0.0
    %328 = vmatpush1.xpose.msra.mxu0 0.0
    %329 = vmatprep.subr.mxu0 0.0
    %330 = vmatpush1.xpose.msra.mxu0 0.0
    %331 = vmatprep.subr.mxu0 0.0
    %332 = vmatpush1.xpose.msra.mxu0 0.0
    %333 = vmatprep.subr.mxu0 0.0
    %334 = vmatpush1.xpose.msra.mxu0 0.0
    %335 = vmatprep.subr.mxu0 0.0
    %336 = vmatpush1.xpose.msra.mxu0 0.0
    %337 = vmatprep.subr.mxu0 0.0
    %338 = vmatpush1.xpose.msra.mxu0 0.0
    %339 = vmatprep.subr.mxu0 0.0
    %340 = vmatpush1.xpose.msra.mxu0 0.0
    %341 = vmatprep.subr.mxu0 0.0
    %342 = vmatpush1.xpose.msra.mxu0 0.0
    %343 = vmatprep.subr.mxu0 0.0
    %344 = vmatpush1.xpose.msra.mxu0 0.0
    %345 = vmatprep.subr.mxu0 0.0
    %346 = vmatpush1.xpose.msra.mxu0 0.0
    %347 = vmatprep.subr.mxu0 0.0
    %348 = vmatpush1.xpose.msra.mxu0 0.0
    %349 = vmatprep.subr.mxu0 0.0
    %350 = vmatpush1.xpose.msra.mxu0 0.0
    %351 = vmatprep.subr.mxu0 0.0
    %352 = vmatpush1.xpose.msra.mxu0 0.0
    %353 = vmatprep.subr.mxu0 0.0
    %354 = vmatpush1.xpose.msra.mxu0 0.0
    %355 = vmatprep.subr.mxu0 0.0
    %356 = vmatpush1.xpose.msra.mxu0 0.0
    %357 = vmatprep.subr.mxu0 0.0
    %358 = vmatpush1.xpose.msra.mxu0 0.0
    %359 = vmatprep.subr.mxu0 0.0
    %360 = vmatpush1.xpose.msra.mxu0 0.0
    %361 = vmatprep.subr.mxu0 0.0
    %362 = vmatpush1.xpose.msra.mxu0 0.0
    %363 = vmatprep.mubr.f32.mxu0 0.0
    %364 = vmatmul.mubr.f32.gmra.mrb[0].mxu0 %v295
    %v365 = vpop.f32.mrb[0].mxu0
    %v366 = vadd.f32 0.0, %v365
    %v367 = vpop.f32.mrb[0].mxu0
    %368 = vdwg.mxu0
    %v369 = vmul.f32 %v289, 0.25
    %v370 = vmul.f32 %v366, 0.25
    %v371 = vlaneseq
    %v372 = vshrl.u32 %v371, 7
    %v373 = vsub.s32 0, %v372
    %v374 = vrot.slane %v93, %v373
    %v375 = vlaneseq
    %v376 = vshrl.u32 %v375, 7
    %v377 = vsub.s32 0, %v376
    %v378 = vrot.slane %v100, %v377
    %v381 = vadd.f32 %v369, %v374
    %v382 = vadd.f32 %v370, %v378
    %vm383 = vcmask 64512
    %v384 = vsel %vm383, %v381, -inf
    %385 = vmax.xlane.f32.xlu0 %v384
    %v386 = vpop.xlane.xlu0 %385
    %v387 = vsel %vm383, %v382, -inf
    %388 = vmax.xlane.f32.xlu0 %v387
    %v389 = vpop.xlane.xlu0 %388
    %v390 = vsub.f32 %v381, %v386
    %v391 = vsub.f32 %v382, %v389
    %v392 = vmul.f32 %v390, 1.442695
    %v393 = vpow.pop %v392
    %v394 = vmul.f32 %v391, 1.442695
    %v395 = vpow.pop %v394
    %v396 = vsel %vm383, %v393, 0.0
    %397 = vadd.xlane.f32.xlu0 %v396
    %v398 = vpop.xlane.xlu0 %397
    %v399 = vsel %vm383, %v395, 0.0
    %400 = vadd.xlane.f32.xlu0 %v399
    %v401 = vpop.xlane.xlu0 %400
    %v402 = vrcp.pop %v398
    %v403 = vmul.f32 %v393, %v402
    %v404 = vrcp.pop %v401
    %v405 = vmul.f32 %v395, %v404
    %406 = vrot.lane.b32.xlu0 %v206, 64
    %v407 = vpop.permute.xlu0 %406
    %v410 = vsel %vm383, %v403, 0
    %412 = vmatprep.subr.mxu0 0.0
    %413 = vmatpush1.msra.mxu0 %v407
    %414 = vmatprep.subr.mxu0 0.0
    %415 = vmatpush1.msra.mxu0 0.0
    %416 = vmatprep.subr.mxu0 0.0
    %417 = vmatpush1.msra.mxu0 0.0
    %418 = vmatprep.subr.mxu0 0.0
    %419 = vmatpush1.msra.mxu0 0.0
    %420 = vmatprep.subr.mxu0 0.0
    %421 = vmatpush1.msra.mxu0 0.0
    %422 = vmatprep.subr.mxu0 0.0
    %423 = vmatpush1.msra.mxu0 0.0
    %424 = vmatprep.subr.mxu0 0.0
    %425 = vmatpush1.msra.mxu0 0.0
    %426 = vmatprep.subr.mxu0 0.0
    %427 = vmatpush1.msra.mxu0 0.0
    %428 = vmatprep.subr.mxu0 0.0
    %429 = vmatpush1.msra.mxu0 0.0
    %430 = vmatprep.subr.mxu0 0.0
    %431 = vmatpush1.msra.mxu0 0.0
    %432 = vmatprep.subr.mxu0 0.0
    %433 = vmatpush1.msra.mxu0 0.0
    %434 = vmatprep.subr.mxu0 0.0
    %435 = vmatpush1.msra.mxu0 0.0
    %436 = vmatprep.subr.mxu0 0.0
    %437 = vmatpush1.msra.mxu0 0.0
    %438 = vmatprep.subr.mxu0 0.0
    %439 = vmatpush1.msra.mxu0 0.0
    %440 = vmatprep.subr.mxu0 0.0
    %441 = vmatpush1.msra.mxu0 0.0
    %442 = vmatprep.subr.mxu0 0.0
    %443 = vmatpush1.msra.mxu0 0.0
    %444 = vmatprep.subr.mxu0 0.0
    %445 = vmatpush1.msra.mxu0 0.0
    %446 = vmatprep.subr.mxu0 0.0
    %447 = vmatpush1.msra.mxu0 0.0
    %448 = vmatprep.subr.mxu0 0.0
    %449 = vmatpush1.msra.mxu0 0.0
    %450 = vmatprep.subr.mxu0 0.0
    %451 = vmatpush1.msra.mxu0 0.0
    %452 = vmatprep.subr.mxu0 0.0
    %453 = vmatpush1.msra.mxu0 0.0
    %454 = vmatprep.subr.mxu0 0.0
    %455 = vmatpush1.msra.mxu0 0.0
    %456 = vmatprep.subr.mxu0 0.0
    %457 = vmatpush1.msra.mxu0 0.0
    %458 = vmatprep.subr.mxu0 0.0
    %459 = vmatpush1.msra.mxu0 0.0
    %460 = vmatprep.subr.mxu0 0.0
    %461 = vmatpush1.msra.mxu0 0.0
    %462 = vmatprep.subr.mxu0 0.0
    %463 = vmatpush1.msra.mxu0 0.0
    %464 = vmatprep.subr.mxu0 0.0
    %465 = vmatpush1.msra.mxu0 0.0
    %466 = vmatprep.subr.mxu0 0.0
    %467 = vmatpush1.msra.mxu0 0.0
    %468 = vmatprep.subr.mxu0 0.0
    %469 = vmatpush1.msra.mxu0 0.0
    %470 = vmatprep.subr.mxu0 0.0
    %471 = vmatpush1.msra.mxu0 0.0
    %472 = vmatprep.subr.mxu0 0.0
    %473 = vmatpush1.msra.mxu0 0.0
    %474 = vmatprep.subr.mxu0 0.0
    %475 = vmatpush1.msra.mxu0 0.0
    %476 = vmatprep.mubr.f32.mxu0 0.0
    %477 = vmatmul.mubr.f32.gmra.mrb[0].mxu0 %v410
    %v478 = vpop.f32.mrb[0].mxu0
    %v479 = vadd.f32 0.0, %v478
    %v480 = vpop.f32.mrb[0].mxu0
    %481 = vdwg.mxu0
    %482 = vrot.lane.b32.xlu0 %v211, 64
    %v483 = vpop.permute.xlu0 %482
    %v486 = vsel %vm383, %v405, 0
    %488 = vmatprep.subr.mxu0 0.0
    %489 = vmatpush1.msra.mxu0 %v483
    %490 = vmatprep.subr.mxu0 0.0
    %491 = vmatpush1.msra.mxu0 0.0
    %492 = vmatprep.subr.mxu0 0.0
    %493 = vmatpush1.msra.mxu0 0.0
    %494 = vmatprep.subr.mxu0 0.0
    %495 = vmatpush1.msra.mxu0 0.0
    %496 = vmatprep.subr.mxu0 0.0
    %497 = vmatpush1.msra.mxu0 0.0
    %498 = vmatprep.subr.mxu0 0.0
    %499 = vmatpush1.msra.mxu0 0.0
    %500 = vmatprep.subr.mxu0 0.0
    %501 = vmatpush1.msra.mxu0 0.0
    %502 = vmatprep.subr.mxu0 0.0
    %503 = vmatpush1.msra.mxu0 0.0
    %504 = vmatprep.subr.mxu0 0.0
    %505 = vmatpush1.msra.mxu0 0.0
    %506 = vmatprep.subr.mxu0 0.0
    %507 = vmatpush1.msra.mxu0 0.0
    %508 = vmatprep.subr.mxu0 0.0
    %509 = vmatpush1.msra.mxu0 0.0
    %510 = vmatprep.subr.mxu0 0.0
    %511 = vmatpush1.msra.mxu0 0.0
    %512 = vmatprep.subr.mxu0 0.0
    %513 = vmatpush1.msra.mxu0 0.0
    %514 = vmatprep.subr.mxu0 0.0
    %515 = vmatpush1.msra.mxu0 0.0
    %516 = vmatprep.subr.mxu0 0.0
    %517 = vmatpush1.msra.mxu0 0.0
    %518 = vmatprep.subr.mxu0 0.0
    %519 = vmatpush1.msra.mxu0 0.0
    %520 = vmatprep.subr.mxu0 0.0
    %521 = vmatpush1.msra.mxu0 0.0
    %522 = vmatprep.subr.mxu0 0.0
    %523 = vmatpush1.msra.mxu0 0.0
    %524 = vmatprep.subr.mxu0 0.0
    %525 = vmatpush1.msra.mxu0 0.0
    %526 = vmatprep.subr.mxu0 0.0
    %527 = vmatpush1.msra.mxu0 0.0
    %528 = vmatprep.subr.mxu0 0.0
    %529 = vmatpush1.msra.mxu0 0.0
    %530 = vmatprep.subr.mxu0 0.0
    %531 = vmatpush1.msra.mxu0 0.0
    %532 = vmatprep.subr.mxu0 0.0
    %533 = vmatpush1.msra.mxu0 0.0
    %534 = vmatprep.subr.mxu0 0.0
    %535 = vmatpush1.msra.mxu0 0.0
    %536 = vmatprep.subr.mxu0 0.0
    %537 = vmatpush1.msra.mxu0 0.0
    %538 = vmatprep.subr.mxu0 0.0
    %539 = vmatpush1.msra.mxu0 0.0
    %540 = vmatprep.subr.mxu0 0.0
    %541 = vmatpush1.msra.mxu0 0.0
    %542 = vmatprep.subr.mxu0 0.0
    %543 = vmatpush1.msra.mxu0 0.0
    %544 = vmatprep.subr.mxu0 0.0
    %545 = vmatpush1.msra.mxu0 0.0
    %546 = vmatprep.subr.mxu0 0.0
    %547 = vmatpush1.msra.mxu0 0.0
    %548 = vmatprep.subr.mxu0 0.0
    %549 = vmatpush1.msra.mxu0 0.0
    %550 = vmatprep.subr.mxu0 0.0
    %551 = vmatpush1.msra.mxu0 0.0
    %552 = vmatprep.mubr.f32.mxu0 0.0
    %553 = vmatmul.mubr.f32.gmra.mrb[0].mxu0 %v486
    %v554 = vpop.f32.mrb[0].mxu0
    %v555 = vadd.f32 0.0, %v554
    %v556 = vpop.f32.mrb[0].mxu0
    %557 = vdwg.mxu0
    %558 = vrot.lane.b32.xlu0 %v206, 112
    %v559 = vpop.permute.xlu0 %558
    %560 = vrot.lane.b32.xlu0 %v206, 80
    %v561 = vpop.permute.xlu0 %560
    %v562 = vsel %vm217, %v559, 0
    %v564 = vsel %vm217, %v561, 0
    %566 = vmatprep.subr.mxu0 0.0
    %567 = vmatpush1.xpose.msra.mxu0 %v564
    %568 = vmatprep.subr.mxu0 0.0
    %569 = vmatpush1.xpose.msra.mxu0 0.0
    %570 = vmatprep.subr.mxu0 0.0
    %571 = vmatpush1.xpose.msra.mxu0 0.0
    %572 = vmatprep.subr.mxu0 0.0
    %573 = vmatpush1.xpose.msra.mxu0 0.0
    %574 = vmatprep.subr.mxu0 0.0
    %575 = vmatpush1.xpose.msra.mxu0 0.0
    %576 = vmatprep.subr.mxu0 0.0
    %577 = vmatpush1.xpose.msra.mxu0 0.0
    %578 = vmatprep.subr.mxu0 0.0
    %579 = vmatpush1.xpose.msra.mxu0 0.0
    %580 = vmatprep.subr.mxu0 0.0
    %581 = vmatpush1.xpose.msra.mxu0 0.0
    %582 = vmatprep.subr.mxu0 0.0
    %583 = vmatpush1.xpose.msra.mxu0 0.0
    %584 = vmatprep.subr.mxu0 0.0
    %585 = vmatpush1.xpose.msra.mxu0 0.0
    %586 = vmatprep.subr.mxu0 0.0
    %587 = vmatpush1.xpose.msra.mxu0 0.0
    %588 = vmatprep.subr.mxu0 0.0
    %589 = vmatpush1.xpose.msra.mxu0 0.0
    %590 = vmatprep.subr.mxu0 0.0
    %591 = vmatpush1.xpose.msra.mxu0 0.0
    %592 = vmatprep.subr.mxu0 0.0
    %593 = vmatpush1.xpose.msra.mxu0 0.0
    %594 = vmatprep.subr.mxu0 0.0
    %595 = vmatpush1.xpose.msra.mxu0 0.0
    %596 = vmatprep.subr.mxu0 0.0
    %597 = vmatpush1.xpose.msra.mxu0 0.0
    %598 = vmatprep.subr.mxu0 0.0
    %599 = vmatpush1.xpose.msra.mxu0 0.0
    %600 = vmatprep.subr.mxu0 0.0
    %601 = vmatpush1.xpose.msra.mxu0 0.0
    %602 = vmatprep.subr.mxu0 0.0
    %603 = vmatpush1.xpose.msra.mxu0 0.0
    %604 = vmatprep.subr.mxu0 0.0
    %605 = vmatpush1.xpose.msra.mxu0 0.0
    %606 = vmatprep.subr.mxu0 0.0
    %607 = vmatpush1.xpose.msra.mxu0 0.0
    %608 = vmatprep.subr.mxu0 0.0
    %609 = vmatpush1.xpose.msra.mxu0 0.0
    %610 = vmatprep.subr.mxu0 0.0
    %611 = vmatpush1.xpose.msra.mxu0 0.0
    %612 = vmatprep.subr.mxu0 0.0
    %613 = vmatpush1.xpose.msra.mxu0 0.0
    %614 = vmatprep.subr.mxu0 0.0
    %615 = vmatpush1.xpose.msra.mxu0 0.0
    %616 = vmatprep.subr.mxu0 0.0
    %617 = vmatpush1.xpose.msra.mxu0 0.0
    %618 = vmatprep.subr.mxu0 0.0
    %619 = vmatpush1.xpose.msra.mxu0 0.0
    %620 = vmatprep.subr.mxu0 0.0
    %621 = vmatpush1.xpose.msra.mxu0 0.0
    %622 = vmatprep.subr.mxu0 0.0
    %623 = vmatpush1.xpose.msra.mxu0 0.0
    %624 = vmatprep.subr.mxu0 0.0
    %625 = vmatpush1.xpose.msra.mxu0 0.0
    %626 = vmatprep.subr.mxu0 0.0
    %627 = vmatpush1.xpose.msra.mxu0 0.0
    %628 = vmatprep.subr.mxu0 0.0
    %629 = vmatpush1.xpose.msra.mxu0 0.0
    %630 = vmatprep.mubr.f32.mxu0 0.0
    %631 = vmatmul.mubr.f32.gmra.mrb[0].mxu0 %v562
    %v632 = vpop.f32.mrb[0].mxu0
    %v633 = vadd.f32 0.0, %v632
    %v634 = vpop.f32.mrb[0].mxu0
    %635 = vdwg.mxu0
    %636 = vrot.lane.b32.xlu0 %v211, 112
    %v637 = vpop.permute.xlu0 %636
    %638 = vrot.lane.b32.xlu0 %v211, 80
    %v639 = vpop.permute.xlu0 %638
    %v640 = vsel %vm217, %v637, 0
    %v642 = vsel %vm217, %v639, 0
    %644 = vmatprep.subr.mxu0 0.0
    %645 = vmatpush1.xpose.msra.mxu0 %v642
    %646 = vmatprep.subr.mxu0 0.0
    %647 = vmatpush1.xpose.msra.mxu0 0.0
    %648 = vmatprep.subr.mxu0 0.0
    %649 = vmatpush1.xpose.msra.mxu0 0.0
    %650 = vmatprep.subr.mxu0 0.0
    %651 = vmatpush1.xpose.msra.mxu0 0.0
    %652 = vmatprep.subr.mxu0 0.0
    %653 = vmatpush1.xpose.msra.mxu0 0.0
    %654 = vmatprep.subr.mxu0 0.0
    %655 = vmatpush1.xpose.msra.mxu0 0.0
    %656 = vmatprep.subr.mxu0 0.0
    %657 = vmatpush1.xpose.msra.mxu0 0.0
    %658 = vmatprep.subr.mxu0 0.0
    %659 = vmatpush1.xpose.msra.mxu0 0.0
    %660 = vmatprep.subr.mxu0 0.0
    %661 = vmatpush1.xpose.msra.mxu0 0.0
    %662 = vmatprep.subr.mxu0 0.0
    %663 = vmatpush1.xpose.msra.mxu0 0.0
    %664 = vmatprep.subr.mxu0 0.0
    %665 = vmatpush1.xpose.msra.mxu0 0.0
    %666 = vmatprep.subr.mxu0 0.0
    %667 = vmatpush1.xpose.msra.mxu0 0.0
    %668 = vmatprep.subr.mxu0 0.0
    %669 = vmatpush1.xpose.msra.mxu0 0.0
    %670 = vmatprep.subr.mxu0 0.0
    %671 = vmatpush1.xpose.msra.mxu0 0.0
    %672 = vmatprep.subr.mxu0 0.0
    %673 = vmatpush1.xpose.msra.mxu0 0.0
    %674 = vmatprep.subr.mxu0 0.0
    %675 = vmatpush1.xpose.msra.mxu0 0.0
    %676 = vmatprep.subr.mxu0 0.0
    %677 = vmatpush1.xpose.msra.mxu0 0.0
    %678 = vmatprep.subr.mxu0 0.0
    %679 = vmatpush1.xpose.msra.mxu0 0.0
    %680 = vmatprep.subr.mxu0 0.0
    %681 = vmatpush1.xpose.msra.mxu0 0.0
    %682 = vmatprep.subr.mxu0 0.0
    %683 = vmatpush1.xpose.msra.mxu0 0.0
    %684 = vmatprep.subr.mxu0 0.0
    %685 = vmatpush1.xpose.msra.mxu0 0.0
    %686 = vmatprep.subr.mxu0 0.0
    %687 = vmatpush1.xpose.msra.mxu0 0.0
    %688 = vmatprep.subr.mxu0 0.0
    %689 = vmatpush1.xpose.msra.mxu0 0.0
    %690 = vmatprep.subr.mxu0 0.0
    %691 = vmatpush1.xpose.msra.mxu0 0.0
    %692 = vmatprep.subr.mxu0 0.0
    %693 = vmatpush1.xpose.msra.mxu0 0.0
    %694 = vmatprep.subr.mxu0 0.0
    %695 = vmatpush1.xpose.msra.mxu0 0.0
    %696 = vmatprep.subr.mxu0 0.0
    %697 = vmatpush1.xpose.msra.mxu0 0.0
    %698 = vmatprep.subr.mxu0 0.0
    %699 = vmatpush1.xpose.msra.mxu0 0.0
    %700 = vmatprep.subr.mxu0 0.0
    %701 = vmatpush1.xpose.msra.mxu0 0.0
    %702 = vmatprep.subr.mxu0 0.0
    %703 = vmatpush1.xpose.msra.mxu0 0.0
    %704 = vmatprep.subr.mxu0 0.0
    %705 = vmatpush1.xpose.msra.mxu0 0.0
    %706 = vmatprep.subr.mxu0 0.0
    %707 = vmatpush1.xpose.msra.mxu0 0.0
    %708 = vmatprep.mubr.f32.mxu0 0.0
    %709 = vmatmul.mubr.f32.gmra.mrb[0].mxu0 %v640
    %v710 = vpop.f32.mrb[0].mxu0
    %v711 = vadd.f32 0.0, %v710
    %v712 = vpop.f32.mrb[0].mxu0
    %713 = vdwg.mxu0
    %v714 = vmul.f32 %v633, 0.25
    %v715 = vmul.f32 %v711, 0.25
    %v716 = vadd.f32 %v714, %v374
    %v717 = vadd.f32 %v715, %v378
    %v718 = vsel %vm383, %v716, -inf
    %719 = vmax.xlane.f32.xlu0 %v718
    %v720 = vpop.xlane.xlu0 %719
    %v721 = vsel %vm383, %v717, -inf
    %722 = vmax.xlane.f32.xlu0 %v721
    %v723 = vpop.xlane.xlu0 %722
    %v724 = vsub.f32 %v716, %v720
    %v725 = vsub.f32 %v717, %v723
    %v726 = vmul.f32 %v724, 1.442695
    %v727 = vpow.pop %v726
    %v728 = vmul.f32 %v725, 1.442695
    %v729 = vpow.pop %v728
    %v730 = vsel %vm383, %v727, 0.0
    %731 = vadd.xlane.f32.xlu0 %v730
    %v732 = vpop.xlane.xlu0 %731
    %v733 = vsel %vm383, %v729, 0.0
    %734 = vadd.xlane.f32.xlu0 %v733
    %v735 = vpop.xlane.xlu0 %734
    %v736 = vrcp.pop %v732
    %v737 = vmul.f32 %v727, %v736
    %v738 = vrcp.pop %v735
    %v739 = vmul.f32 %v729, %v738
    %740 = vrot.lane.b32.xlu0 %v206, 48
    %v741 = vpop.permute.xlu0 %740
    %v744 = vsel %vm383, %v737, 0
    %746 = vmatprep.subr.mxu0 0.0
    %747 = vmatpush1.msra.mxu0 %v741
    %748 = vmatprep.subr.mxu0 0.0
    %749 = vmatpush1.msra.mxu0 0.0
    %750 = vmatprep.subr.mxu0 0.0
    %751 = vmatpush1.msra.mxu0 0.0
    %752 = vmatprep.subr.mxu0 0.0
    %753 = vmatpush1.msra.mxu0 0.0
    %754 = vmatprep.subr.mxu0 0.0
    %755 = vmatpush1.msra.mxu0 0.0
    %756 = vmatprep.subr.mxu0 0.0
    %757 = vmatpush1.msra.mxu0 0.0
    %758 = vmatprep.subr.mxu0 0.0
    %759 = vmatpush1.msra.mxu0 0.0
    %760 = vmatprep.subr.mxu0 0.0
    %761 = vmatpush1.msra.mxu0 0.0
    %762 = vmatprep.subr.mxu0 0.0
    %763 = vmatpush1.msra.mxu0 0.0
    %764 = vmatprep.subr.mxu0 0.0
    %765 = vmatpush1.msra.mxu0 0.0
    %766 = vmatprep.subr.mxu0 0.0
    %767 = vmatpush1.msra.mxu0 0.0
    %768 = vmatprep.subr.mxu0 0.0
    %769 = vmatpush1.msra.mxu0 0.0
    %770 = vmatprep.subr.mxu0 0.0
    %771 = vmatpush1.msra.mxu0 0.0
    %772 = vmatprep.subr.mxu0 0.0
    %773 = vmatpush1.msra.mxu0 0.0
    %774 = vmatprep.subr.mxu0 0.0
    %775 = vmatpush1.msra.mxu0 0.0
    %776 = vmatprep.subr.mxu0 0.0
    %777 = vmatpush1.msra.mxu0 0.0
    %778 = vmatprep.subr.mxu0 0.0
    %779 = vmatpush1.msra.mxu0 0.0
    %780 = vmatprep.subr.mxu0 0.0
    %781 = vmatpush1.msra.mxu0 0.0
    %782 = vmatprep.subr.mxu0 0.0
    %783 = vmatpush1.msra.mxu0 0.0
    %784 = vmatprep.subr.mxu0 0.0
    %785 = vmatpush1.msra.mxu0 0.0
    %786 = vmatprep.subr.mxu0 0.0
    %787 = vmatpush1.msra.mxu0 0.0
    %788 = vmatprep.subr.mxu0 0.0
    %789 = vmatpush1.msra.mxu0 0.0
    %790 = vmatprep.subr.mxu0 0.0
    %791 = vmatpush1.msra.mxu0 0.0
    %792 = vmatprep.subr.mxu0 0.0
    %793 = vmatpush1.msra.mxu0 0.0
    %794 = vmatprep.subr.mxu0 0.0
    %795 = vmatpush1.msra.mxu0 0.0
    %796 = vmatprep.subr.mxu0 0.0
    %797 = vmatpush1.msra.mxu0 0.0
    %798 = vmatprep.subr.mxu0 0.0
    %799 = vmatpush1.msra.mxu0 0.0
    %800 = vmatprep.subr.mxu0 0.0
    %801 = vmatpush1.msra.mxu0 0.0
    %802 = vmatprep.subr.mxu0 0.0
    %803 = vmatpush1.msra.mxu0 0.0
    %804 = vmatprep.subr.mxu0 0.0
    %805 = vmatpush1.msra.mxu0 0.0
    %806 = vmatprep.subr.mxu0 0.0
    %807 = vmatpush1.msra.mxu0 0.0
    %808 = vmatprep.subr.mxu0 0.0
    %809 = vmatpush1.msra.mxu0 0.0
    %810 = vmatprep.mubr.f32.mxu0 0.0
    %811 = vmatmul.mubr.f32.gmra.mrb[0].mxu0 %v744
    %v812 = vpop.f32.mrb[0].mxu0
    %v813 = vadd.f32 0.0, %v812
    %v814 = vpop.f32.mrb[0].mxu0
    %815 = vdwg.mxu0
    %816 = vrot.lane.b32.xlu0 %v211, 48
    %v817 = vpop.permute.xlu0 %816
    %v820 = vsel %vm383, %v739, 0
    %822 = vmatprep.subr.mxu0 0.0
    %823 = vmatpush1.msra.mxu0 %v817
    %824 = vmatprep.subr.mxu0 0.0
    %825 = vmatpush1.msra.mxu0 0.0
    %826 = vmatprep.subr.mxu0 0.0
    %827 = vmatpush1.msra.mxu0 0.0
    %828 = vmatprep.subr.mxu0 0.0
    %829 = vmatpush1.msra.mxu0 0.0
    %830 = vmatprep.subr.mxu0 0.0
    %831 = vmatpush1.msra.mxu0 0.0
    %832 = vmatprep.subr.mxu0 0.0
    %833 = vmatpush1.msra.mxu0 0.0
    %834 = vmatprep.subr.mxu0 0.0
    %835 = vmatpush1.msra.mxu0 0.0
    %836 = vmatprep.subr.mxu0 0.0
    %837 = vmatpush1.msra.mxu0 0.0
    %838 = vmatprep.subr.mxu0 0.0
    %839 = vmatpush1.msra.mxu0 0.0
    %840 = vmatprep.subr.mxu0 0.0
    %841 = vmatpush1.msra.mxu0 0.0
    %842 = vmatprep.subr.mxu0 0.0
    %843 = vmatpush1.msra.mxu0 0.0
    %844 = vmatprep.subr.mxu0 0.0
    %845 = vmatpush1.msra.mxu0 0.0
    %846 = vmatprep.subr.mxu0 0.0
    %847 = vmatpush1.msra.mxu0 0.0
    %848 = vmatprep.subr.mxu0 0.0
    %849 = vmatpush1.msra.mxu0 0.0
    %850 = vmatprep.subr.mxu0 0.0
    %851 = vmatpush1.msra.mxu0 0.0
    %852 = vmatprep.subr.mxu0 0.0
    %853 = vmatpush1.msra.mxu0 0.0
    %854 = vmatprep.subr.mxu0 0.0
    %855 = vmatpush1.msra.mxu0 0.0
    %856 = vmatprep.subr.mxu0 0.0
    %857 = vmatpush1.msra.mxu0 0.0
    %858 = vmatprep.subr.mxu0 0.0
    %859 = vmatpush1.msra.mxu0 0.0
    %860 = vmatprep.subr.mxu0 0.0
    %861 = vmatpush1.msra.mxu0 0.0
    %862 = vmatprep.subr.mxu0 0.0
    %863 = vmatpush1.msra.mxu0 0.0
    %864 = vmatprep.subr.mxu0 0.0
    %865 = vmatpush1.msra.mxu0 0.0
    %866 = vmatprep.subr.mxu0 0.0
    %867 = vmatpush1.msra.mxu0 0.0
    %868 = vmatprep.subr.mxu0 0.0
    %869 = vmatpush1.msra.mxu0 0.0
    %870 = vmatprep.subr.mxu0 0.0
    %871 = vmatpush1.msra.mxu0 0.0
    %872 = vmatprep.subr.mxu0 0.0
    %873 = vmatpush1.msra.mxu0 0.0
    %874 = vmatprep.subr.mxu0 0.0
    %875 = vmatpush1.msra.mxu0 0.0
    %876 = vmatprep.subr.mxu0 0.0
    %877 = vmatpush1.msra.mxu0 0.0
    %878 = vmatprep.subr.mxu0 0.0
    %879 = vmatpush1.msra.mxu0 0.0
    %880 = vmatprep.subr.mxu0 0.0
    %881 = vmatpush1.msra.mxu0 0.0
    %882 = vmatprep.subr.mxu0 0.0
    %883 = vmatpush1.msra.mxu0 0.0
    %884 = vmatprep.subr.mxu0 0.0
    %885 = vmatpush1.msra.mxu0 0.0
    %886 = vmatprep.mubr.f32.mxu0 0.0
    %887 = vmatmul.mubr.f32.gmra.mrb[0].mxu0 %v820
    %v888 = vpop.f32.mrb[0].mxu0
    %v889 = vadd.f32 0.0, %v888
    %v890 = vpop.f32.mrb[0].mxu0
    %891 = vdwg.mxu0
    %894 = vrot.lane.b32.xlu0 %v813, 16
    %v895 = vpop.permute.xlu0 %894
    %896 = vrot.lane.b32.xlu0 %v889, 16
    %v897 = vpop.permute.xlu0 %896
    %v900 = vsel %vm217, %v479, %v895
    %v901 = vsel %vm217, %v555, %v897
    %v902 = vlaneseq
    %v903 = vshrl.u32 %v902, 7
    %v904 = vsub.s32 0, %v903
    %v905 = vrot.slane %v110, %v904
    %v907 = vsel %vm35, %v900, 0
    %v910 = vsel %vm35, %v901, 0
    %912 = vmatprep.subr.mxu0 0.0
    %913 = vmatpush1.msra.mxu0 %v106
    %914 = vmatprep.subr.mxu0 0.0
    %915 = vmatpush1.msra.mxu0 %v107
    %916 = vmatprep.subr.mxu0 0.0
    %917 = vmatpush1.msra.mxu0 %v108
    %918 = vmatprep.subr.mxu0 0.0
    %919 = vmatpush1.msra.mxu0 %v109
    %920 = vmatprep.subr.mxu0 0.0
    %921 = vmatpush1.msra.mxu0 0.0
    %922 = vmatprep.subr.mxu0 0.0
    %923 = vmatpush1.msra.mxu0 0.0
    %924 = vmatprep.subr.mxu0 0.0
    %925 = vmatpush1.msra.mxu0 0.0
    %926 = vmatprep.subr.mxu0 0.0
    %927 = vmatpush1.msra.mxu0 0.0
    %928 = vmatprep.subr.mxu0 0.0
    %929 = vmatpush1.msra.mxu0 0.0
    %930 = vmatprep.subr.mxu0 0.0
    %931 = vmatpush1.msra.mxu0 0.0
    %932 = vmatprep.subr.mxu0 0.0
    %933 = vmatpush1.msra.mxu0 0.0
    %934 = vmatprep.subr.mxu0 0.0
    %935 = vmatpush1.msra.mxu0 0.0
    %936 = vmatprep.subr.mxu0 0.0
    %937 = vmatpush1.msra.mxu0 0.0
    %938 = vmatprep.subr.mxu0 0.0
    %939 = vmatpush1.msra.mxu0 0.0
    %940 = vmatprep.subr.mxu0 0.0
    %941 = vmatpush1.msra.mxu0 0.0
    %942 = vmatprep.subr.mxu0 0.0
    %943 = vmatpush1.msra.mxu0 0.0
    %944 = vmatprep.subr.mxu0 0.0
    %945 = vmatpush1.msra.mxu0 0.0
    %946 = vmatprep.subr.mxu0 0.0
    %947 = vmatpush1.msra.mxu0 0.0
    %948 = vmatprep.subr.mxu0 0.0
    %949 = vmatpush1.msra.mxu0 0.0
    %950 = vmatprep.subr.mxu0 0.0
    %951 = vmatpush1.msra.mxu0 0.0
    %952 = vmatprep.subr.mxu0 0.0
    %953 = vmatpush1.msra.mxu0 0.0
    %954 = vmatprep.subr.mxu0 0.0
    %955 = vmatpush1.msra.mxu0 0.0
    %956 = vmatprep.subr.mxu0 0.0
    %957 = vmatpush1.msra.mxu0 0.0
    %958 = vmatprep.subr.mxu0 0.0
    %959 = vmatpush1.msra.mxu0 0.0
    %960 = vmatprep.subr.mxu0 0.0
    %961 = vmatpush1.msra.mxu0 0.0
    %962 = vmatprep.subr.mxu0 0.0
    %963 = vmatpush1.msra.mxu0 0.0
    %964 = vmatprep.subr.mxu0 0.0
    %965 = vmatpush1.msra.mxu0 0.0
    %966 = vmatprep.subr.mxu0 0.0
    %967 = vmatpush1.msra.mxu0 0.0
    %968 = vmatprep.subr.mxu0 0.0
    %969 = vmatpush1.msra.mxu0 0.0
    %970 = vmatprep.subr.mxu0 0.0
    %971 = vmatpush1.msra.mxu0 0.0
    %972 = vmatprep.subr.mxu0 0.0
    %973 = vmatpush1.msra.mxu0 0.0
    %974 = vmatprep.subr.mxu0 0.0
    %975 = vmatpush1.msra.mxu0 0.0
    %976 = vmatprep.mubr.f32.mxu0 0.0
    %977 = vmatmul.mubr.f32.gmra.mrb[0].mxu0 %v907
    %v978 = vpop.f32.mrb[0].mxu0
    %v979 = vadd.f32 %v905, %v978
    %v980 = vpop.f32.mrb[0].mxu0
    %981 = vmatprep.mubr.f32.mxu0 0.0
    %982 = vmatmul.mubr.f32.gmra.mrb[0].mxu0 %v910
    %v983 = vpop.f32.mrb[0].mxu0
    %v984 = vadd.f32 %v905, %v983
    %v985 = vpop.f32.mrb[0].mxu0
    %986 = vdwg.mxu0
    %v987 = vadd.f32 %v73, %v979
    %v988 = vadd.f32 %v74, %v984
    %v989 = vsel %vm35, %v987, 0.0
    %990 = vadd.xlane.f32.xlu0 %v989
    %v991 = vpop.xlane.xlu0 %990
    %v992 = vsel %vm35, %v988, 0.0
    %993 = vadd.xlane.f32.xlu0 %v992
    %v994 = vpop.xlane.xlu0 %993
    %v995 = vmul.f32 %v991, %v42
    %v996 = vmul.f32 %v994, %v42
    %v997 = vsub.f32 %v987, %v995
    %v998 = vsub.f32 %v988, %v996
    %v999 = vmul.f32 %v997, %v997
    %v1000 = vmul.f32 %v998, %v998
    %v1001 = vsel %vm35, %v999, 0.0
    %1002 = vadd.xlane.f32.xlu0 %v1001
    %v1003 = vpop.xlane.xlu0 %1002
    %v1004 = vsel %vm35, %v1000, 0.0
    %1005 = vadd.xlane.f32.xlu0 %v1004
    %v1006 = vpop.xlane.xlu0 %1005
    %v1007 = vmul.f32 %v1003, %v42
    %v1008 = vmul.f32 %v1006, %v42
    %v1009 = vadd.f32 %v1007, 1e-12
    %v1010 = vadd.f32 %v1008, 1e-12
    %v1011 = vrsqrt.pop %v1009
    %v1012 = vrsqrt.pop %v1010
    %v1013 = vmul.f32 %v997, %v1011
    %v1014 = vmul.f32 %v998, %v1012
    %v1015 = vlaneseq
    %v1016 = vshrl.u32 %v1015, 7
    %v1017 = vsub.s32 0, %v1016
    %v1018 = vrot.slane %v111, %v1017
    %v1019 = vmul.f32 %v1013, %v1018
    %v1020 = vmul.f32 %v1014, %v1018
    %v1021 = vlaneseq
    %v1022 = vshrl.u32 %v1021, 7
    %v1023 = vsub.s32 0, %v1022
    %v1024 = vrot.slane %v112, %v1023
    %v1025 = vadd.f32 %v1019, %v1024
    %v1026 = vadd.f32 %v1020, %v1024
    %v1027 = vlaneseq
    %v1028 = vshrl.u32 %v1027, 7
    %v1029 = vsub.s32 0, %v1028
    %v1030 = vrot.slane %v117, %v1029
    %v1032 = vsel %vm35, %v1025, 0
    %v1035 = vsel %vm35, %v1026, 0
    %1037 = vmatprep.subr.mxu0 0.0
    %1038 = vmatpush1.msra.mxu0 %v113
    %1039 = vmatprep.subr.mxu0 0.0
    %1040 = vmatpush1.msra.mxu0 %v114
    %1041 = vmatprep.subr.mxu0 0.0
    %1042 = vmatpush1.msra.mxu0 %v115
    %1043 = vmatprep.subr.mxu0 0.0
    %1044 = vmatpush1.msra.mxu0 %v116
    %1045 = vmatprep.subr.mxu0 0.0
    %1046 = vmatpush1.msra.mxu0 0.0
    %1047 = vmatprep.subr.mxu0 0.0
    %1048 = vmatpush1.msra.mxu0 0.0
    %1049 = vmatprep.subr.mxu0 0.0
    %1050 = vmatpush1.msra.mxu0 0.0
    %1051 = vmatprep.subr.mxu0 0.0
    %1052 = vmatpush1.msra.mxu0 0.0
    %1053 = vmatprep.subr.mxu0 0.0
    %1054 = vmatpush1.msra.mxu0 0.0
    %1055 = vmatprep.subr.mxu0 0.0
    %1056 = vmatpush1.msra.mxu0 0.0
    %1057 = vmatprep.subr.mxu0 0.0
    %1058 = vmatpush1.msra.mxu0 0.0
    %1059 = vmatprep.subr.mxu0 0.0
    %1060 = vmatpush1.msra.mxu0 0.0
    %1061 = vmatprep.subr.mxu0 0.0
    %1062 = vmatpush1.msra.mxu0 0.0
    %1063 = vmatprep.subr.mxu0 0.0
    %1064 = vmatpush1.msra.mxu0 0.0
    %1065 = vmatprep.subr.mxu0 0.0
    %1066 = vmatpush1.msra.mxu0 0.0
    %1067 = vmatprep.subr.mxu0 0.0
    %1068 = vmatpush1.msra.mxu0 0.0
    %1069 = vmatprep.subr.mxu0 0.0
    %1070 = vmatpush1.msra.mxu0 0.0
    %1071 = vmatprep.subr.mxu0 0.0
    %1072 = vmatpush1.msra.mxu0 0.0
    %1073 = vmatprep.subr.mxu0 0.0
    %1074 = vmatpush1.msra.mxu0 0.0
    %1075 = vmatprep.subr.mxu0 0.0
    %1076 = vmatpush1.msra.mxu0 0.0
    %1077 = vmatprep.subr.mxu0 0.0
    %1078 = vmatpush1.msra.mxu0 0.0
    %1079 = vmatprep.subr.mxu0 0.0
    %1080 = vmatpush1.msra.mxu0 0.0
    %1081 = vmatprep.subr.mxu0 0.0
    %1082 = vmatpush1.msra.mxu0 0.0
    %1083 = vmatprep.subr.mxu0 0.0
    %1084 = vmatpush1.msra.mxu0 0.0
    %1085 = vmatprep.subr.mxu0 0.0
    %1086 = vmatpush1.msra.mxu0 0.0
    %1087 = vmatprep.subr.mxu0 0.0
    %1088 = vmatpush1.msra.mxu0 0.0
    %1089 = vmatprep.subr.mxu0 0.0
    %1090 = vmatpush1.msra.mxu0 0.0
    %1091 = vmatprep.subr.mxu0 0.0
    %1092 = vmatpush1.msra.mxu0 0.0
    %1093 = vmatprep.subr.mxu0 0.0
    %1094 = vmatpush1.msra.mxu0 0.0
    %1095 = vmatprep.subr.mxu0 0.0
    %1096 = vmatpush1.msra.mxu0 0.0
    %1097 = vmatprep.subr.mxu0 0.0
    %1098 = vmatpush1.msra.mxu0 0.0
    %1099 = vmatprep.subr.mxu0 0.0
    %1100 = vmatpush1.msra.mxu0 0.0
    %1101 = vmatprep.mubr.f32.mxu0 0.0
    %1102 = vmatmul.mubr.f32.gmra.mrb[0].mxu0 %v1032
    %v1103 = vpop.f32.mrb[0].mxu0
    %v1104 = vadd.f32 %v1030, %v1103
    %v1105 = vpop.f32.mrb[0].mxu0
    %1106 = vmatprep.mubr.f32.mxu0 0.0
    %1107 = vmatmul.mubr.f32.gmra.mrb[0].mxu0 %v1035
    %v1108 = vpop.f32.mrb[0].mxu0
    %v1109 = vadd.f32 %v1030, %v1108
    %v1110 = vpop.f32.mrb[0].mxu0
    %1111 = vdwg.mxu0
    %v1112 = vmul.f32 %v1104, 0.5
    %v1113 = vmul.f32 %v1109, 0.5
    %v1114 = vmul.f32 %v1104, 0.70710677
    %v1115 = vmul.f32 %v1109, 0.70710677
    %v1116 = vand.u32 2147483647, %v1114
    %v1117 = vand.u32 2147483647, %v1115
    %v1118 = vmul.f32 %v1116, 0.3275911
    %v1119 = vmul.f32 %v1117, 0.3275911
    %v1120 = vadd.f32 %v1118, 1.0
    %v1121 = vadd.f32 %v1119, 1.0
    %v1122 = vrcp.pop %v1120
    %v1123 = vmul.f32 1.0, %v1122
    %v1124 = vrcp.pop %v1121
    %v1125 = vmul.f32 1.0, %v1124
    %v1126 = vmul.f32 %v1123, 1.0614054
    %v1127 = vmul.f32 %v1125, 1.0614054
    %v1128 = vadd.f32 %v1126, -1.4531521
    %v1129 = vadd.f32 %v1127, -1.4531521
    %v1130 = vmul.f32 %v1128, %v1123
    %v1131 = vmul.f32 %v1129, %v1125
    %v1132 = vadd.f32 %v1130, 1.4214138
    %v1133 = vadd.f32 %v1131, 1.4214138
    %v1134 = vmul.f32 %v1132, %v1123
    %v1135 = vmul.f32 %v1133, %v1125
    %v1136 = vadd.f32 %v1134, -0.28449672
    %v1137 = vadd.f32 %v1135, -0.28449672
    %v1138 = vmul.f32 %v1136, %v1123
    %v1139 = vmul.f32 %v1137, %v1125
    %v1140 = vadd.f32 %v1138, 0.2548296
    %v1141 = vadd.f32 %v1139, 0.2548296
    %v1142 = vmul.f32 %v1140, %v1123
    %v1143 = vmul.f32 %v1141, %v1125
    %v1144 = vsub.f32 0.0, %v1116
    %v1145 = vsub.f32 0.0, %v1117
    %v1146 = vmul.f32 %v1144, %v1116
    %v1147 = vmul.f32 %v1145, %v1117
    %v1148 = vmul.f32 %v1146, 1.442695
    %v1149 = vpow.pop %v1148
    %v1150 = vmul.f32 %v1147, 1.442695
    %v1151 = vpow.pop %v1150
    %v1152 = vmul.f32 %v1142, %v1149
    %v1153 = vmul.f32 %v1143, %v1151
    %v1154 = vsub.f32 1.0, %v1152
    %v1155 = vsub.f32 1.0, %v1153
    %vm1156 = vcmp.ge.f32.partialorder %v1114, 0.0
    %vm1157 = vcmp.ge.f32.partialorder %v1115, 0.0
    %v1158 = vsub.f32 0.0, %v1154
    %v1159 = vsub.f32 0.0, %v1155
    %v1160 = vsel %vm1156, %v1154, %v1158
    %v1161 = vsel %vm1157, %v1155, %v1159
    %v1162 = vadd.f32 %v1160, 1.0
    %v1163 = vadd.f32 %v1161, 1.0
    %v1164 = vmul.f32 %v1112, %v1162
    %v1165 = vmul.f32 %v1113, %v1163
    %v1166 = vlaneseq
    %v1167 = vshrl.u32 %v1166, 7
    %v1168 = vsub.s32 0, %v1167
    %v1169 = vrot.slane %v126, %v1168
    %vm1170 = vcmask 523264
    %v1172 = vsel %vm1170, %v1164, 0
    %v1175 = vsel %vm1170, %v1165, 0
    %1177 = vmatprep.subr.mxu0 0.0
    %1178 = vmatpush1.msra.mxu0 %v118
    %1179 = vmatprep.subr.mxu0 0.0
    %1180 = vmatpush1.msra.mxu0 %v119
    %1181 = vmatprep.subr.mxu0 0.0
    %1182 = vmatpush1.msra.mxu0 %v120
    %1183 = vmatprep.subr.mxu0 0.0
    %1184 = vmatpush1.msra.mxu0 %v121
    %1185 = vmatprep.subr.mxu0 0.0
    %1186 = vmatpush1.msra.mxu0 %v122
    %1187 = vmatprep.subr.mxu0 0.0
    %1188 = vmatpush1.msra.mxu0 %v123
    %1189 = vmatprep.subr.mxu0 0.0
    %1190 = vmatpush1.msra.mxu0 %v124
    %1191 = vmatprep.subr.mxu0 0.0
    %1192 = vmatpush1.msra.mxu0 %v125
    %1193 = vmatprep.subr.mxu0 0.0
    %1194 = vmatpush1.msra.mxu0 0.0
    %1195 = vmatprep.subr.mxu0 0.0
    %1196 = vmatpush1.msra.mxu0 0.0
    %1197 = vmatprep.subr.mxu0 0.0
    %1198 = vmatpush1.msra.mxu0 0.0
    %1199 = vmatprep.subr.mxu0 0.0
    %1200 = vmatpush1.msra.mxu0 0.0
    %1201 = vmatprep.subr.mxu0 0.0
    %1202 = vmatpush1.msra.mxu0 0.0
    %1203 = vmatprep.subr.mxu0 0.0
    %1204 = vmatpush1.msra.mxu0 0.0
    %1205 = vmatprep.subr.mxu0 0.0
    %1206 = vmatpush1.msra.mxu0 0.0
    %1207 = vmatprep.subr.mxu0 0.0
    %1208 = vmatpush1.msra.mxu0 0.0
    %1209 = vmatprep.subr.mxu0 0.0
    %1210 = vmatpush1.msra.mxu0 0.0
    %1211 = vmatprep.subr.mxu0 0.0
    %1212 = vmatpush1.msra.mxu0 0.0
    %1213 = vmatprep.subr.mxu0 0.0
    %1214 = vmatpush1.msra.mxu0 0.0
    %1215 = vmatprep.subr.mxu0 0.0
    %1216 = vmatpush1.msra.mxu0 0.0
    %1217 = vmatprep.subr.mxu0 0.0
    %1218 = vmatpush1.msra.mxu0 0.0
    %1219 = vmatprep.subr.mxu0 0.0
    %1220 = vmatpush1.msra.mxu0 0.0
    %1221 = vmatprep.subr.mxu0 0.0
    %1222 = vmatpush1.msra.mxu0 0.0
    %1223 = vmatprep.subr.mxu0 0.0
    %1224 = vmatpush1.msra.mxu0 0.0
    %1225 = vmatprep.subr.mxu0 0.0
    %1226 = vmatpush1.msra.mxu0 0.0
    %1227 = vmatprep.subr.mxu0 0.0
    %1228 = vmatpush1.msra.mxu0 0.0
    %1229 = vmatprep.subr.mxu0 0.0
    %1230 = vmatpush1.msra.mxu0 0.0
    %1231 = vmatprep.subr.mxu0 0.0
    %1232 = vmatpush1.msra.mxu0 0.0
    %1233 = vmatprep.subr.mxu0 0.0
    %1234 = vmatpush1.msra.mxu0 0.0
    %1235 = vmatprep.subr.mxu0 0.0
    %1236 = vmatpush1.msra.mxu0 0.0
    %1237 = vmatprep.subr.mxu0 0.0
    %1238 = vmatpush1.msra.mxu0 0.0
    %1239 = vmatprep.subr.mxu0 0.0
    %1240 = vmatpush1.msra.mxu0 0.0
    %1241 = vmatprep.mubr.f32.mxu0 0.0
    %1242 = vmatmul.mubr.f32.gmra.mrb[0].mxu0 %v1172
    %v1243 = vpop.f32.mrb[0].mxu0
    %v1244 = vadd.f32 %v1169, %v1243
    %v1245 = vpop.f32.mrb[0].mxu0
    %1246 = vmatprep.mubr.f32.mxu0 0.0
    %1247 = vmatmul.mubr.f32.gmra.mrb[0].mxu0 %v1175
    %v1248 = vpop.f32.mrb[0].mxu0
    %v1249 = vadd.f32 %v1169, %v1248
    %v1250 = vpop.f32.mrb[0].mxu0
    %1251 = vdwg.mxu0
    %v1252 = vadd.f32 %v1025, %v1244
    %v1253 = vadd.f32 %v1026, %v1249
    %v1254 = vsel %vm35, %v1252, 0.0
    %1255 = vadd.xlane.f32.xlu0 %v1254
    %v1256 = vpop.xlane.xlu0 %1255
    %v1257 = vsel %vm35, %v1253, 0.0
    %1258 = vadd.xlane.f32.xlu0 %v1257
    %v1259 = vpop.xlane.xlu0 %1258
    %v1260 = vmul.f32 %v1256, %v42
    %v1261 = vmul.f32 %v1259, %v42
    %v1262 = vsub.f32 %v1252, %v1260
    %v1263 = vsub.f32 %v1253, %v1261
    %v1264 = vmul.f32 %v1262, %v1262
    %v1265 = vmul.f32 %v1263, %v1263
    %v1266 = vsel %vm35, %v1264, 0.0
    %1267 = vadd.xlane.f32.xlu0 %v1266
    %v1268 = vpop.xlane.xlu0 %1267
    %v1269 = vsel %vm35, %v1265, 0.0
    %1270 = vadd.xlane.f32.xlu0 %v1269
    %v1271 = vpop.xlane.xlu0 %1270
    %v1272 = vmul.f32 %v1268, %v42
    %v1273 = vmul.f32 %v1271, %v42
    %v1274 = vadd.f32 %v1272, 1e-12
    %v1275 = vadd.f32 %v1273, 1e-12
    %v1276 = vrsqrt.pop %v1274
    %v1277 = vrsqrt.pop %v1275
    %v1278 = vmul.f32 %v1262, %v1276
    %v1279 = vmul.f32 %v1263, %v1277
    %v1280 = vlaneseq
    %v1281 = vshrl.u32 %v1280, 7
    %v1282 = vsub.s32 0, %v1281
    %v1283 = vrot.slane %v127, %v1282
    %v1284 = vmul.f32 %v1278, %v1283
    %v1285 = vmul.f32 %v1279, %v1283
    %v1286 = vlaneseq
    %v1287 = vshrl.u32 %v1286, 7
    %v1288 = vsub.s32 0, %v1287
    %v1289 = vrot.slane %v128, %v1288
    %v1290 = vadd.f32 %v1284, %v1289
    %v1291 = vadd.f32 %v1285, %v1289
    %s1292 = scalar_lea.vmem [#allocation2], 168
    %v1293 = vld [vmem:[%s1292] sm:$0xff]
    %v1294 = vld [vmem:[%s1292 + $0x8] sm:$0xff]
    %v1295 = vld [vmem:[%s1292 + $0x10] sm:$0xff]
    %v1296 = vld [vmem:[%s1292 + $0x18] sm:$0xff]
    %v1297 = vld [vmem:[%s1292 + $0xa0] sm:$0x1]
    %v1298 = vld [vmem:[%s1292 + $0x20] sm:$0xff]
    %v1299 = vld [vmem:[%s1292 + $0x28] sm:$0xff]
    %v1300 = vld [vmem:[%s1292 + $0x30] sm:$0xff]
    %v1301 = vld [vmem:[%s1292 + $0x38] sm:$0xff]
    %v1302 = vld [vmem:[%s1292 + $0xa1] sm:$0x1]
    %v1303 = vld [vmem:[%s1292 + $0xa2] sm:$0x1]
    %v1304 = vld [vmem:[%s1292 + $0xa3] sm:$0x1]
    %v1305 = vld [vmem:[%s1292 + $0x40] sm:$0xff]
    %v1306 = vld [vmem:[%s1292 + $0x48] sm:$0xff]
    %v1307 = vld [vmem:[%s1292 + $0x50] sm:$0xff]
    %v1308 = vld [vmem:[%s1292 + $0x58] sm:$0xff]
    %v1309 = vld [vmem:[%s1292 + $0xa4] sm:$0x1]
    %v1310 = vld [vmem:[%s1292 + $0x60] sm:$0xff]
    %v1311 = vld [vmem:[%s1292 + $0x68] sm:$0xff]
    %v1312 = vld [vmem:[%s1292 + $0x70] sm:$0xff]
    %v1313 = vld [vmem:[%s1292 + $0x78] sm:$0xff]
    %v1314 = vld [vmem:[%s1292 + $0x80] sm:$0xff]
    %v1315 = vld [vmem:[%s1292 + $0x88] sm:$0xff]
    %v1316 = vld [vmem:[%s1292 + $0x90] sm:$0xff]
    %v1317 = vld [vmem:[%s1292 + $0x98] sm:$0xff]
    %v1318 = vld [vmem:[%s1292 + $0xa5] sm:$0x1]
    %v1319 = vld [vmem:[%s1292 + $0xa6] sm:$0x1]
    %v1320 = vld [vmem:[%s1292 + $0xa7] sm:$0x1]
    %v1321 = vlaneseq
    %v1322 = vshrl.u32 %v1321, 7
    %v1323 = vsub.s32 0, %v1322
    %v1324 = vrot.slane %v1297, %v1323
    %v1326 = vsel %vm35, %v1290, 0
    %v1329 = vsel %vm35, %v1291, 0
    %1331 = vmatprep.subr.mxu0 0.0
    %1332 = vmatpush1.msra.mxu0 %v1293
    %1333 = vmatprep.subr.mxu0 0.0
    %1334 = vmatpush1.msra.mxu0 %v1294
    %1335 = vmatprep.subr.mxu0 0.0
    %1336 = vmatpush1.msra.mxu0 %v1295
    %1337 = vmatprep.subr.mxu0 0.0
    %1338 = vmatpush1.msra.mxu0 %v1296
    %1339 = vmatprep.subr.mxu0 0.0
    %1340 = vmatpush1.msra.mxu0 0.0
    %1341 = vmatprep.subr.mxu0 0.0
    %1342 = vmatpush1.msra.mxu0 0.0
    %1343 = vmatprep.subr.mxu0 0.0
    %1344 = vmatpush1.msra.mxu0 0.0
    %1345 = vmatprep.subr.mxu0 0.0
    %1346 = vmatpush1.msra.mxu0 0.0
    %1347 = vmatprep.subr.mxu0 0.0
    %1348 = vmatpush1.msra.mxu0 0.0
    %1349 = vmatprep.subr.mxu0 0.0
    %1350 = vmatpush1.msra.mxu0 0.0
    %1351 = vmatprep.subr.mxu0 0.0
    %1352 = vmatpush1.msra.mxu0 0.0
    %1353 = vmatprep.subr.mxu0 0.0
    %1354 = vmatpush1.msra.mxu0 0.0
    %1355 = vmatprep.subr.mxu0 0.0
    %1356 = vmatpush1.msra.mxu0 0.0
    %1357 = vmatprep.subr.mxu0 0.0
    %1358 = vmatpush1.msra.mxu0 0.0
    %1359 = vmatprep.subr.mxu0 0.0
    %1360 = vmatpush1.msra.mxu0 0.0
    %1361 = vmatprep.subr.mxu0 0.0
    %1362 = vmatpush1.msra.mxu0 0.0
    %1363 = vmatprep.subr.mxu0 0.0
    %1364 = vmatpush1.msra.mxu0 0.0
    %1365 = vmatprep.subr.mxu0 0.0
    %1366 = vmatpush1.msra.mxu0 0.0
    %1367 = vmatprep.subr.mxu0 0.0
    %1368 = vmatpush1.msra.mxu0 0.0
    %1369 = vmatprep.subr.mxu0 0.0
    %1370 = vmatpush1.msra.mxu0 0.0
    %1371 = vmatprep.subr.mxu0 0.0
    %1372 = vmatpush1.msra.mxu0 0.0
    %1373 = vmatprep.subr.mxu0 0.0
    %1374 = vmatpush1.msra.mxu0 0.0
    %1375 = vmatprep.subr.mxu0 0.0
    %1376 = vmatpush1.msra.mxu0 0.0
    %1377 = vmatprep.subr.mxu0 0.0
    %1378 = vmatpush1.msra.mxu0 0.0
    %1379 = vmatprep.subr.mxu0 0.0
    %1380 = vmatpush1.msra.mxu0 0.0
    %1381 = vmatprep.subr.mxu0 0.0
    %1382 = vmatpush1.msra.mxu0 0.0
    %1383 = vmatprep.subr.mxu0 0.0
    %1384 = vmatpush1.msra.mxu0 0.0
    %1385 = vmatprep.subr.mxu0 0.0
    %1386 = vmatpush1.msra.mxu0 0.0
    %1387 = vmatprep.subr.mxu0 0.0
    %1388 = vmatpush1.msra.mxu0 0.0
    %1389 = vmatprep.subr.mxu0 0.0
    %1390 = vmatpush1.msra.mxu0 0.0
    %1391 = vmatprep.subr.mxu0 0.0
    %1392 = vmatpush1.msra.mxu0 0.0
    %1393 = vmatprep.subr.mxu0 0.0
    %1394 = vmatpush1.msra.mxu0 0.0
    %1395 = vmatprep.mubr.f32.mxu0 0.0
    %1396 = vmatmul.mubr.f32.gmra.mrb[0].mxu0 %v1326
    %v1397 = vpop.f32.mrb[0].mxu0
    %v1398 = vadd.f32 %v1324, %v1397
    %v1399 = vpop.f32.mrb[0].mxu0
    %1400 = vmatprep.mubr.f32.mxu0 0.0
    %1401 = vmatmul.mubr.f32.gmra.mrb[0].mxu0 %v1329
    %v1402 = vpop.f32.mrb[0].mxu0
    %v1403 = vadd.f32 %v1324, %v1402
    %v1404 = vpop.f32.mrb[0].mxu0
    %1405 = vdwg.mxu0
    %1407 = vrot.lane.b32.xlu0 %v1398, 96
    %v1408 = vpop.permute.xlu0 %1407
    %v1409 = vsel %vm217, %v1398, 0
    %v1411 = vsel %vm217, %v1408, 0
    %1413 = vmatprep.subr.mxu0 0.0
    %1414 = vmatpush1.xpose.msra.mxu0 %v1411
    %1415 = vmatprep.subr.mxu0 0.0
    %1416 = vmatpush1.xpose.msra.mxu0 0.0
    %1417 = vmatprep.subr.mxu0 0.0
    %1418 = vmatpush1.xpose.msra.mxu0 0.0
    %1419 = vmatprep.subr.mxu0 0.0
    %1420 = vmatpush1.xpose.msra.mxu0 0.0
    %1421 = vmatprep.subr.mxu0 0.0
    %1422 = vmatpush1.xpose.msra.mxu0 0.0
    %1423 = vmatprep.subr.mxu0 0.0
    %1424 = vmatpush1.xpose.msra.mxu0 0.0
    %1425 = vmatprep.subr.mxu0 0.0
    %1426 = vmatpush1.xpose.msra.mxu0 0.0
    %1427 = vmatprep.subr.mxu0 0.0
    %1428 = vmatpush1.xpose.msra.mxu0 0.0
    %1429 = vmatprep.subr.mxu0 0.0
    %1430 = vmatpush1.xpose.msra.mxu0 0.0
    %1431 = vmatprep.subr.mxu0 0.0
    %1432 = vmatpush1.xpose.msra.mxu0 0.0
    %1433 = vmatprep.subr.mxu0 0.0
    %1434 = vmatpush1.xpose.msra.mxu0 0.0
    %1435 = vmatprep.subr.mxu0 0.0
    %1436 = vmatpush1.xpose.msra.mxu0 0.0
    %1437 = vmatprep.subr.mxu0 0.0
    %1438 = vmatpush1.xpose.msra.mxu0 0.0
    %1439 = vmatprep.subr.mxu0 0.0
    %1440 = vmatpush1.xpose.msra.mxu0 0.0
    %1441 = vmatprep.subr.mxu0 0.0
    %1442 = vmatpush1.xpose.msra.mxu0 0.0
    %1443 = vmatprep.subr.mxu0 0.0
    %1444 = vmatpush1.xpose.msra.mxu0 0.0
    %1445 = vmatprep.subr.mxu0 0.0
    %1446 = vmatpush1.xpose.msra.mxu0 0.0
    %1447 = vmatprep.subr.mxu0 0.0
    %1448 = vmatpush1.xpose.msra.mxu0 0.0
    %1449 = vmatprep.subr.mxu0 0.0
    %1450 = vmatpush1.xpose.msra.mxu0 0.0
    %1451 = vmatprep.subr.mxu0 0.0
    %1452 = vmatpush1.xpose.msra.mxu0 0.0
    %1453 = vmatprep.subr.mxu0 0.0
    %1454 = vmatpush1.xpose.msra.mxu0 0.0
    %1455 = vmatprep.subr.mxu0 0.0
    %1456 = vmatpush1.xpose.msra.mxu0 0.0
    %1457 = vmatprep.subr.mxu0 0.0
    %1458 = vmatpush1.xpose.msra.mxu0 0.0
    %1459 = vmatprep.subr.mxu0 0.0
    %1460 = vmatpush1.xpose.msra.mxu0 0.0
    %1461 = vmatprep.subr.mxu0 0.0
    %1462 = vmatpush1.xpose.msra.mxu0 0.0
    %1463 = vmatprep.subr.mxu0 0.0
    %1464 = vmatpush1.xpose.msra.mxu0 0.0
    %1465 = vmatprep.subr.mxu0 0.0
    %1466 = vmatpush1.xpose.msra.mxu0 0.0
    %1467 = vmatprep.subr.mxu0 0.0
    %1468 = vmatpush1.xpose.msra.mxu0 0.0
    %1469 = vmatprep.subr.mxu0 0.0
    %1470 = vmatpush1.xpose.msra.mxu0 0.0
    %1471 = vmatprep.subr.mxu0 0.0
    %1472 = vmatpush1.xpose.msra.mxu0 0.0
    %1473 = vmatprep.subr.mxu0 0.0
    %1474 = vmatpush1.xpose.msra.mxu0 0.0
    %1475 = vmatprep.subr.mxu0 0.0
    %1476 = vmatpush1.xpose.msra.mxu0 0.0
    %1477 = vmatprep.mubr.f32.mxu0 0.0
    %1478 = vmatmul.mubr.f32.gmra.mrb[0].mxu0 %v1409
    %v1479 = vpop.f32.mrb[0].mxu0
    %v1480 = vadd.f32 0.0, %v1479
    %v1481 = vpop.f32.mrb[0].mxu0
    %1482 = vdwg.mxu0
    %1484 = vrot.lane.b32.xlu0 %v1403, 96
    %v1485 = vpop.permute.xlu0 %1484
    %v1486 = vsel %vm217, %v1403, 0
    %v1488 = vsel %vm217, %v1485, 0
    %1490 = vmatprep.subr.mxu0 0.0
    %1491 = vmatpush1.xpose.msra.mxu0 %v1488
    %1492 = vmatprep.subr.mxu0 0.0
    %1493 = vmatpush1.xpose.msra.mxu0 0.0
    %1494 = vmatprep.subr.mxu0 0.0
    %1495 = vmatpush1.xpose.msra.mxu0 0.0
    %1496 = vmatprep.subr.mxu0 0.0
    %1497 = vmatpush1.xpose.msra.mxu0 0.0
    %1498 = vmatprep.subr.mxu0 0.0
    %1499 = vmatpush1.xpose.msra.mxu0 0.0
    %1500 = vmatprep.subr.mxu0 0.0
    %1501 = vmatpush1.xpose.msra.mxu0 0.0
    %1502 = vmatprep.subr.mxu0 0.0
    %1503 = vmatpush1.xpose.msra.mxu0 0.0
    %1504 = vmatprep.subr.mxu0 0.0
    %1505 = vmatpush1.xpose.msra.mxu0 0.0
    %1506 = vmatprep.subr.mxu0 0.0
    %1507 = vmatpush1.xpose.msra.mxu0 0.0
    %1508 = vmatprep.subr.mxu0 0.0
    %1509 = vmatpush1.xpose.msra.mxu0 0.0
    %1510 = vmatprep.subr.mxu0 0.0
    %1511 = vmatpush1.xpose.msra.mxu0 0.0
    %1512 = vmatprep.subr.mxu0 0.0
    %1513 = vmatpush1.xpose.msra.mxu0 0.0
    %1514 = vmatprep.subr.mxu0 0.0
    %1515 = vmatpush1.xpose.msra.mxu0 0.0
    %1516 = vmatprep.subr.mxu0 0.0
    %1517 = vmatpush1.xpose.msra.mxu0 0.0
    %1518 = vmatprep.subr.mxu0 0.0
    %1519 = vmatpush1.xpose.msra.mxu0 0.0
    %1520 = vmatprep.subr.mxu0 0.0
    %1521 = vmatpush1.xpose.msra.mxu0 0.0
    %1522 = vmatprep.subr.mxu0 0.0
    %1523 = vmatpush1.xpose.msra.mxu0 0.0
    %1524 = vmatprep.subr.mxu0 0.0
    %1525 = vmatpush1.xpose.msra.mxu0 0.0
    %1526 = vmatprep.subr.mxu0 0.0
    %1527 = vmatpush1.xpose.msra.mxu0 0.0
    %1528 = vmatprep.subr.mxu0 0.0
    %1529 = vmatpush1.xpose.msra.mxu0 0.0
    %1530 = vmatprep.subr.mxu0 0.0
    %1531 = vmatpush1.xpose.msra.mxu0 0.0
    %1532 = vmatprep.subr.mxu0 0.0
    %1533 = vmatpush1.xpose.msra.mxu0 0.0
    %1534 = vmatprep.subr.mxu0 0.0
    %1535 = vmatpush1.xpose.msra.mxu0 0.0
    %1536 = vmatprep.subr.mxu0 0.0
    %1537 = vmatpush1.xpose.msra.mxu0 0.0
    %1538 = vmatprep.subr.mxu0 0.0
    %1539 = vmatpush1.xpose.msra.mxu0 0.0
    %1540 = vmatprep.subr.mxu0 0.0
    %1541 = vmatpush1.xpose.msra.mxu0 0.0
    %1542 = vmatprep.subr.mxu0 0.0
    %1543 = vmatpush1.xpose.msra.mxu0 0.0
    %1544 = vmatprep.subr.mxu0 0.0
    %1545 = vmatpush1.xpose.msra.mxu0 0.0
    %1546 = vmatprep.subr.mxu0 0.0
    %1547 = vmatpush1.xpose.msra.mxu0 0.0
    %1548 = vmatprep.subr.mxu0 0.0
    %1549 = vmatpush1.xpose.msra.mxu0 0.0
    %1550 = vmatprep.subr.mxu0 0.0
    %1551 = vmatpush1.xpose.msra.mxu0 0.0
    %1552 = vmatprep.subr.mxu0 0.0
    %1553 = vmatpush1.xpose.msra.mxu0 0.0
    %1554 = vmatprep.mubr.f32.mxu0 0.0
    %1555 = vmatmul.mubr.f32.gmra.mrb[0].mxu0 %v1486
    %v1556 = vpop.f32.mrb[0].mxu0
    %v1557 = vadd.f32 0.0, %v1556
    %v1558 = vpop.f32.mrb[0].mxu0
    %1559 = vdwg.mxu0
    %v1560 = vmul.f32 %v1480, 0.25
    %v1561 = vmul.f32 %v1557, 0.25
    %v1562 = vadd.f32 %v1560, %v374
    %v1563 = vadd.f32 %v1561, %v378
    %v1564 = vsel %vm383, %v1562, -inf
    %1565 = vmax.xlane.f32.xlu0 %v1564
    %v1566 = vpop.xlane.xlu0 %1565
    %v1567 = vsel %vm383, %v1563, -inf
    %1568 = vmax.xlane.f32.xlu0 %v1567
    %v1569 = vpop.xlane.xlu0 %1568
    %v1570 = vsub.f32 %v1562, %v1566
    %v1571 = vsub.f32 %v1563, %v1569
    %v1572 = vmul.f32 %v1570, 1.442695
    %v1573 = vpow.pop %v1572
    %v1574 = vmul.f32 %v1571, 1.442695
    %v1575 = vpow.pop %v1574
    %v1576 = vsel %vm383, %v1573, 0.0
    %1577 = vadd.xlane.f32.xlu0 %v1576
    %v1578 = vpop.xlane.xlu0 %1577
    %v1579 = vsel %vm383, %v1575, 0.0
    %1580 = vadd.xlane.f32.xlu0 %v1579
    %v1581 = vpop.xlane.xlu0 %1580
    %v1582 = vrcp.pop %v1578
    %v1583 = vmul.f32 %v1573, %v1582
    %v1584 = vrcp.pop %v1581
    %v1585 = vmul.f32 %v1575, %v1584
    %1586 = vrot.lane.b32.xlu0 %v1398, 64
    %v1587 = vpop.permute.xlu0 %1586
    %v1590 = vsel %vm383, %v1583, 0
    %1592 = vmatprep.subr.mxu0 0.0
    %1593 = vmatpush1.msra.mxu0 %v1587
    %1594 = vmatprep.subr.mxu0 0.0
    %1595 = vmatpush1.msra.mxu0 0.0
    %1596 = vmatprep.subr.mxu0 0.0
    %1597 = vmatpush1.msra.mxu0 0.0
    %1598 = vmatprep.subr.mxu0 0.0
    %1599 = vmatpush1.msra.mxu0 0.0
    %1600 = vmatprep.subr.mxu0 0.0
    %1601 = vmatpush1.msra.mxu0 0.0
    %1602 = vmatprep.subr.mxu0 0.0
    %1603 = vmatpush1.msra.mxu0 0.0
    %1604 = vmatprep.subr.mxu0 0.0
    %1605 = vmatpush1.msra.mxu0 0.0
    %1606 = vmatprep.subr.mxu0 0.0
    %1607 = vmatpush1.msra.mxu0 0.0
    %1608 = vmatprep.subr.mxu0 0.0
    %1609 = vmatpush1.msra.mxu0 0.0
    %1610 = vmatprep.subr.mxu0 0.0
    %1611 = vmatpush1.msra.mxu0 0.0
    %1612 = vmatprep.subr.mxu0 0.0
    %1613 = vmatpush1.msra.mxu0 0.0
    %1614 = vmatprep.subr.mxu0 0.0
    %1615 = vmatpush1.msra.mxu0 0.0
    %1616 = vmatprep.subr.mxu0 0.0
    %1617 = vmatpush1.msra.mxu0 0.0
    %1618 = vmatprep.subr.mxu0 0.0
    %1619 = vmatpush1.msra.mxu0 0.0
    %1620 = vmatprep.subr.mxu0 0.0
    %1621 = vmatpush1.msra.mxu0 0.0
    %1622 = vmatprep.subr.mxu0 0.0
    %1623 = vmatpush1.msra.mxu0 0.0
    %1624 = vmatprep.subr.mxu0 0.0
    %1625 = vmatpush1.msra.mxu0 0.0
    %1626 = vmatprep.subr.mxu0 0.0
    %1627 = vmatpush1.msra.mxu0 0.0
    %1628 = vmatprep.subr.mxu0 0.0
    %1629 = vmatpush1.msra.mxu0 0.0
    %1630 = vmatprep.subr.mxu0 0.0
    %1631 = vmatpush1.msra.mxu0 0.0
    %1632 = vmatprep.subr.mxu0 0.0
    %1633 = vmatpush1.msra.mxu0 0.0
    %1634 = vmatprep.subr.mxu0 0.0
    %1635 = vmatpush1.msra.mxu0 0.0
    %1636 = vmatprep.subr.mxu0 0.0
    %1637 = vmatpush1.msra.mxu0 0.0
    %1638 = vmatprep.subr.mxu0 0.0
    %1639 = vmatpush1.msra.mxu0 0.0
    %1640 = vmatprep.subr.mxu0 0.0
    %1641 = vmatpush1.msra.mxu0 0.0
    %1642 = vmatprep.subr.mxu0 0.0
    %1643 = vmatpush1.msra.mxu0 0.0
    %1644 = vmatprep.subr.mxu0 0.0
    %1645 = vmatpush1.msra.mxu0 0.0
    %1646 = vmatprep.subr.mxu0 0.0
    %1647 = vmatpush1.msra.mxu0 0.0
    %1648 = vmatprep.subr.mxu0 0.0
    %1649 = vmatpush1.msra.mxu0 0.0
    %1650 = vmatprep.subr.mxu0 0.0
    %1651 = vmatpush1.msra.mxu0 0.0
    %1652 = vmatprep.subr.mxu0 0.0
    %1653 = vmatpush1.msra.mxu0 0.0
    %1654 = vmatprep.subr.mxu0 0.0
    %1655 = vmatpush1.msra.mxu0 0.0
    %1656 = vmatprep.mubr.f32.mxu0 0.0
    %1657 = vmatmul.mubr.f32.gmra.mrb[0].mxu0 %v1590
    %v1658 = vpop.f32.mrb[0].mxu0
    %v1659 = vadd.f32 0.0, %v1658
    %v1660 = vpop.f32.mrb[0].mxu0
    %1661 = vdwg.mxu0
    %1662 = vrot.lane.b32.xlu0 %v1403, 64
    %v1663 = vpop.permute.xlu0 %1662
    %v1666 = vsel %vm383, %v1585, 0
    %1668 = vmatprep.subr.mxu0 0.0
    %1669 = vmatpush1.msra.mxu0 %v1663
    %1670 = vmatprep.subr.mxu0 0.0
    %1671 = vmatpush1.msra.mxu0 0.0
    %1672 = vmatprep.subr.mxu0 0.0
    %1673 = vmatpush1.msra.mxu0 0.0
    %1674 = vmatprep.subr.mxu0 0.0
    %1675 = vmatpush1.msra.mxu0 0.0
    %1676 = vmatprep.subr.mxu0 0.0
    %1677 = vmatpush1.msra.mxu0 0.0
    %1678 = vmatprep.subr.mxu0 0.0
    %1679 = vmatpush1.msra.mxu0 0.0
    %1680 = vmatprep.subr.mxu0 0.0
    %1681 = vmatpush1.msra.mxu0 0.0
    %1682 = vmatprep.subr.mxu0 0.0
    %1683 = vmatpush1.msra.mxu0 0.0
    %1684 = vmatprep.subr.mxu0 0.0
    %1685 = vmatpush1.msra.mxu0 0.0
    %1686 = vmatprep.subr.mxu0 0.0
    %1687 = vmatpush1.msra.mxu0 0.0
    %1688 = vmatprep.subr.mxu0 0.0
    %1689 = vmatpush1.msra.mxu0 0.0
    %1690 = vmatprep.subr.mxu0 0.0
    %1691 = vmatpush1.msra.mxu0 0.0
    %1692 = vmatprep.subr.mxu0 0.0
    %1693 = vmatpush1.msra.mxu0 0.0
    %1694 = vmatprep.subr.mxu0 0.0
    %1695 = vmatpush1.msra.mxu0 0.0
    %1696 = vmatprep.subr.mxu0 0.0
    %1697 = vmatpush1.msra.mxu0 0.0
    %1698 = vmatprep.subr.mxu0 0.0
    %1699 = vmatpush1.msra.mxu0 0.0
    %1700 = vmatprep.subr.mxu0 0.0
    %1701 = vmatpush1.msra.mxu0 0.0
    %1702 = vmatprep.subr.mxu0 0.0
    %1703 = vmatpush1.msra.mxu0 0.0
    %1704 = vmatprep.subr.mxu0 0.0
    %1705 = vmatpush1.msra.mxu0 0.0
    %1706 = vmatprep.subr.mxu0 0.0
    %1707 = vmatpush1.msra.mxu0 0.0
    %1708 = vmatprep.subr.mxu0 0.0
    %1709 = vmatpush1.msra.mxu0 0.0
    %1710 = vmatprep.subr.mxu0 0.0
    %1711 = vmatpush1.msra.mxu0 0.0
    %1712 = vmatprep.subr.mxu0 0.0
    %1713 = vmatpush1.msra.mxu0 0.0
    %1714 = vmatprep.subr.mxu0 0.0
    %1715 = vmatpush1.msra.mxu0 0.0
    %1716 = vmatprep.subr.mxu0 0.0
    %1717 = vmatpush1.msra.mxu0 0.0
    %1718 = vmatprep.subr.mxu0 0.0
    %1719 = vmatpush1.msra.mxu0 0.0
    %1720 = vmatprep.subr.mxu0 0.0
    %1721 = vmatpush1.msra.mxu0 0.0
    %1722 = vmatprep.subr.mxu0 0.0
    %1723 = vmatpush1.msra.mxu0 0.0
    %1724 = vmatprep.subr.mxu0 0.0
    %1725 = vmatpush1.msra.mxu0 0.0
    %1726 = vmatprep.subr.mxu0 0.0
    %1727 = vmatpush1.msra.mxu0 0.0
    %1728 = vmatprep.subr.mxu0 0.0
    %1729 = vmatpush1.msra.mxu0 0.0
    %1730 = vmatprep.subr.mxu0 0.0
    %1731 = vmatpush1.msra.mxu0 0.0
    %1732 = vmatprep.mubr.f32.mxu0 0.0
    %1733 = vmatmul.mubr.f32.gmra.mrb[0].mxu0 %v1666
    %v1734 = vpop.f32.mrb[0].mxu0
    %v1735 = vadd.f32 0.0, %v1734
    %v1736 = vpop.f32.mrb[0].mxu0
    %1737 = vdwg.mxu0
    %1738 = vrot.lane.b32.xlu0 %v1398, 112
    %v1739 = vpop.permute.xlu0 %1738
    %1740 = vrot.lane.b32.xlu0 %v1398, 80
    %v1741 = vpop.permute.xlu0 %1740
    %v1742 = vsel %vm217, %v1739, 0
    %v1744 = vsel %vm217, %v1741, 0
    %1746 = vmatprep.subr.mxu0 0.0
    %1747 = vmatpush1.xpose.msra.mxu0 %v1744
    %1748 = vmatprep.subr.mxu0 0.0
    %1749 = vmatpush1.xpose.msra.mxu0 0.0
    %1750 = vmatprep.subr.mxu0 0.0
    %1751 = vmatpush1.xpose.msra.mxu0 0.0
    %1752 = vmatprep.subr.mxu0 0.0
    %1753 = vmatpush1.xpose.msra.mxu0 0.0
    %1754 = vmatprep.subr.mxu0 0.0
    %1755 = vmatpush1.xpose.msra.mxu0 0.0
    %1756 = vmatprep.subr.mxu0 0.0
    %1757 = vmatpush1.xpose.msra.mxu0 0.0
    %1758 = vmatprep.subr.mxu0 0.0
    %1759 = vmatpush1.xpose.msra.mxu0 0.0
    %1760 = vmatprep.subr.mxu0 0.0
    %1761 = vmatpush1.xpose.msra.mxu0 0.0
    %1762 = vmatprep.subr.mxu0 0.0
    %1763 = vmatpush1.xpose.msra.mxu0 0.0
    %1764 = vmatprep.subr.mxu0 0.0
    %1765 = vmatpush1.xpose.msra.mxu0 0.0
    %1766 = vmatprep.subr.mxu0 0.0
    %1767 = vmatpush1.xpose.msra.mxu0 0.0
    %1768 = vmatprep.subr.mxu0 0.0
    %1769 = vmatpush1.xpose.msra.mxu0 0.0
    %1770 = vmatprep.subr.mxu0 0.0
    %1771 = vmatpush1.xpose.msra.mxu0 0.0
    %1772 = vmatprep.subr.mxu0 0.0
    %1773 = vmatpush1.xpose.msra.mxu0 0.0
    %1774 = vmatprep.subr.mxu0 0.0
    %1775 = vmatpush1.xpose.msra.mxu0 0.0
    %1776 = vmatprep.subr.mxu0 0.0
    %1777 = vmatpush1.xpose.msra.mxu0 0.0
    %1778 = vmatprep.subr.mxu0 0.0
    %1779 = vmatpush1.xpose.msra.mxu0 0.0
    %1780 = vmatprep.subr.mxu0 0.0
    %1781 = vmatpush1.xpose.msra.mxu0 0.0
    %1782 = vmatprep.subr.mxu0 0.0
    %1783 = vmatpush1.xpose.msra.mxu0 0.0
    %1784 = vmatprep.subr.mxu0 0.0
    %1785 = vmatpush1.xpose.msra.mxu0 0.0
    %1786 = vmatprep.subr.mxu0 0.0
    %1787 = vmatpush1.xpose.msra.mxu0 0.0
    %1788 = vmatprep.subr.mxu0 0.0
    %1789 = vmatpush1.xpose.msra.mxu0 0.0
    %1790 = vmatprep.subr.mxu0 0.0
    %1791 = vmatpush1.xpose.msra.mxu0 0.0
    %1792 = vmatprep.subr.mxu0 0.0
    %1793 = vmatpush1.xpose.msra.mxu0 0.0
    %1794 = vmatprep.subr.mxu0 0.0
    %1795 = vmatpush1.xpose.msra.mxu0 0.0
    %1796 = vmatprep.subr.mxu0 0.0
    %1797 = vmatpush1.xpose.msra.mxu0 0.0
    %1798 = vmatprep.subr.mxu0 0.0
    %1799 = vmatpush1.xpose.msra.mxu0 0.0
    %1800 = vmatprep.subr.mxu0 0.0
    %1801 = vmatpush1.xpose.msra.mxu0 0.0
    %1802 = vmatprep.subr.mxu0 0.0
    %1803 = vmatpush1.xpose.msra.mxu0 0.0
    %1804 = vmatprep.subr.mxu0 0.0
    %1805 = vmatpush1.xpose.msra.mxu0 0.0
    %1806 = vmatprep.subr.mxu0 0.0
    %1807 = vmatpush1.xpose.msra.mxu0 0.0
    %1808 = vmatprep.subr.mxu0 0.0
    %1809 = vmatpush1.xpose.msra.mxu0 0.0
    %1810 = vmatprep.mubr.f32.mxu0 0.0
    %1811 = vmatmul.mubr.f32.gmra.mrb[0].mxu0 %v1742
    %v1812 = vpop.f32.mrb[0].mxu0
    %v1813 = vadd.f32 0.0, %v1812
    %v1814 = vpop.f32.mrb[0].mxu0
    %1815 = vdwg.mxu0
    %1816 = vrot.lane.b32.xlu0 %v1403, 112
    %v1817 = vpop.permute.xlu0 %1816
    %1818 = vrot.lane.b32.xlu0 %v1403, 80
    %v1819 = vpop.permute.xlu0 %1818
    %v1820 = vsel %vm217, %v1817, 0
    %v1822 = vsel %vm217, %v1819, 0
    %1824 = vmatprep.subr.mxu0 0.0
    %1825 = vmatpush1.xpose.msra.mxu0 %v1822
    %1826 = vmatprep.subr.mxu0 0.0
    %1827 = vmatpush1.xpose.msra.mxu0 0.0
    %1828 = vmatprep.subr.mxu0 0.0
    %1829 = vmatpush1.xpose.msra.mxu0 0.0
    %1830 = vmatprep.subr.mxu0 0.0
    %1831 = vmatpush1.xpose.msra.mxu0 0.0
    %1832 = vmatprep.subr.mxu0 0.0
    %1833 = vmatpush1.xpose.msra.mxu0 0.0
    %1834 = vmatprep.subr.mxu0 0.0
    %1835 = vmatpush1.xpose.msra.mxu0 0.0
    %1836 = vmatprep.subr.mxu0 0.0
    %1837 = vmatpush1.xpose.msra.mxu0 0.0
    %1838 = vmatprep.subr.mxu0 0.0
    %1839 = vmatpush1.xpose.msra.mxu0 0.0
    %1840 = vmatprep.subr.mxu0 0.0
    %1841 = vmatpush1.xpose.msra.mxu0 0.0
    %1842 = vmatprep.subr.mxu0 0.0
    %1843 = vmatpush1.xpose.msra.mxu0 0.0
    %1844 = vmatprep.subr.mxu0 0.0
    %1845 = vmatpush1.xpose.msra.mxu0 0.0
    %1846 = vmatprep.subr.mxu0 0.0
    %1847 = vmatpush1.xpose.msra.mxu0 0.0
    %1848 = vmatprep.subr.mxu0 0.0
    %1849 = vmatpush1.xpose.msra.mxu0 0.0
    %1850 = vmatprep.subr.mxu0 0.0
    %1851 = vmatpush1.xpose.msra.mxu0 0.0
    %1852 = vmatprep.subr.mxu0 0.0
    %1853 = vmatpush1.xpose.msra.mxu0 0.0
    %1854 = vmatprep.subr.mxu0 0.0
    %1855 = vmatpush1.xpose.msra.mxu0 0.0
    %1856 = vmatprep.subr.mxu0 0.0
    %1857 = vmatpush1.xpose.msra.mxu0 0.0
    %1858 = vmatprep.subr.mxu0 0.0
    %1859 = vmatpush1.xpose.msra.mxu0 0.0
    %1860 = vmatprep.subr.mxu0 0.0
    %1861 = vmatpush1.xpose.msra.mxu0 0.0
    %1862 = vmatprep.subr.mxu0 0.0
    %1863 = vmatpush1.xpose.msra.mxu0 0.0
    %1864 = vmatprep.subr.mxu0 0.0
    %1865 = vmatpush1.xpose.msra.mxu0 0.0
    %1866 = vmatprep.subr.mxu0 0.0
    %1867 = vmatpush1.xpose.msra.mxu0 0.0
    %1868 = vmatprep.subr.mxu0 0.0
    %1869 = vmatpush1.xpose.msra.mxu0 0.0
    %1870 = vmatprep.subr.mxu0 0.0
    %1871 = vmatpush1.xpose.msra.mxu0 0.0
    %1872 = vmatprep.subr.mxu0 0.0
    %1873 = vmatpush1.xpose.msra.mxu0 0.0
    %1874 = vmatprep.subr.mxu0 0.0
    %1875 = vmatpush1.xpose.msra.mxu0 0.0
    %1876 = vmatprep.subr.mxu0 0.0
    %1877 = vmatpush1.xpose.msra.mxu0 0.0
    %1878 = vmatprep.subr.mxu0 0.0
    %1879 = vmatpush1.xpose.msra.mxu0 0.0
    %1880 = vmatprep.subr.mxu0 0.0
    %1881 = vmatpush1.xpose.msra.mxu0 0.0
    %1882 = vmatprep.subr.mxu0 0.0
    %1883 = vmatpush1.xpose.msra.mxu0 0.0
    %1884 = vmatprep.subr.mxu0 0.0
    %1885 = vmatpush1.xpose.msra.mxu0 0.0
    %1886 = vmatprep.subr.mxu0 0.0
    %1887 = vmatpush1.xpose.msra.mxu0 0.0
    %1888 = vmatprep.mubr.f32.mxu0 0.0
    %1889 = vmatmul.mubr.f32.gmra.mrb[0].mxu0 %v1820
    %v1890 = vpop.f32.mrb[0].mxu0
    %v1891 = vadd.f32 0.0, %v1890
    %v1892 = vpop.f32.mrb[0].mxu0
    %1893 = vdwg.mxu0
    %v1894 = vmul.f32 %v1813, 0.25
    %v1895 = vmul.f32 %v1891, 0.25
    %v1896 = vadd.f32 %v1894, %v374
    %v1897 = vadd.f32 %v1895, %v378
    %v1898 = vsel %vm383, %v1896, -inf
    %1899 = vmax.xlane.f32.xlu0 %v1898
    %v1900 = vpop.xlane.xlu0 %1899
    %v1901 = vsel %vm383, %v1897, -inf
    %1902 = vmax.xlane.f32.xlu0 %v1901
    %v1903 = vpop.xlane.xlu0 %1902
    %v1904 = vsub.f32 %v1896, %v1900
    %v1905 = vsub.f32 %v1897, %v1903
    %v1906 = vmul.f32 %v1904, 1.442695
    %v1907 = vpow.pop %v1906
    %v1908 = vmul.f32 %v1905, 1.442695
    %v1909 = vpow.pop %v1908
    %v1910 = vsel %vm383, %v1907, 0.0
    %1911 = vadd.xlane.f32.xlu0 %v1910
    %v1912 = vpop.xlane.xlu0 %1911
    %v1913 = vsel %vm383, %v1909, 0.0
    %1914 = vadd.xlane.f32.xlu0 %v1913
    %v1915 = vpop.xlane.xlu0 %1914
    %v1916 = vrcp.pop %v1912
    %v1917 = vmul.f32 %v1907, %v1916
    %v1918 = vrcp.pop %v1915
    %v1919 = vmul.f32 %v1909, %v1918
    %1920 = vrot.lane.b32.xlu0 %v1398, 48
    %v1921 = vpop.permute.xlu0 %1920
    %v1924 = vsel %vm383, %v1917, 0
    %1926 = vmatprep.subr.mxu0 0.0
    %1927 = vmatpush1.msra.mxu0 %v1921
    %1928 = vmatprep.subr.mxu0 0.0
    %1929 = vmatpush1.msra.mxu0 0.0
    %1930 = vmatprep.subr.mxu0 0.0
    %1931 = vmatpush1.msra.mxu0 0.0
    %1932 = vmatprep.subr.mxu0 0.0
    %1933 = vmatpush1.msra.mxu0 0.0
    %1934 = vmatprep.subr.mxu0 0.0
    %1935 = vmatpush1.msra.mxu0 0.0
    %1936 = vmatprep.subr.mxu0 0.0
    %1937 = vmatpush1.msra.mxu0 0.0
    %1938 = vmatprep.subr.mxu0 0.0
    %1939 = vmatpush1.msra.mxu0 0.0
    %1940 = vmatprep.subr.mxu0 0.0
    %1941 = vmatpush1.msra.mxu0 0.0
    %1942 = vmatprep.subr.mxu0 0.0
    %1943 = vmatpush1.msra.mxu0 0.0
    %1944 = vmatprep.subr.mxu0 0.0
    %1945 = vmatpush1.msra.mxu0 0.0
    %1946 = vmatprep.subr.mxu0 0.0
    %1947 = vmatpush1.msra.mxu0 0.0
    %1948 = vmatprep.subr.mxu0 0.0
    %1949 = vmatpush1.msra.mxu0 0.0
    %1950 = vmatprep.subr.mxu0 0.0
    %1951 = vmatpush1.msra.mxu0 0.0
    %1952 = vmatprep.subr.mxu0 0.0
    %1953 = vmatpush1.msra.mxu0 0.0
    %1954 = vmatprep.subr.mxu0 0.0
    %1955 = vmatpush1.msra.mxu0 0.0
    %1956 = vmatprep.subr.mxu0 0.0
    %1957 = vmatpush1.msra.mxu0 0.0
    %1958 = vmatprep.subr.mxu0 0.0
    %1959 = vmatpush1.msra.mxu0 0.0
    %1960 = vmatprep.subr.mxu0 0.0
    %1961 = vmatpush1.msra.mxu0 0.0
    %1962 = vmatprep.subr.mxu0 0.0
    %1963 = vmatpush1.msra.mxu0 0.0
    %1964 = vmatprep.subr.mxu0 0.0
    %1965 = vmatpush1.msra.mxu0 0.0
    %1966 = vmatprep.subr.mxu0 0.0
    %1967 = vmatpush1.msra.mxu0 0.0
    %1968 = vmatprep.subr.mxu0 0.0
    %1969 = vmatpush1.msra.mxu0 0.0
    %1970 = vmatprep.subr.mxu0 0.0
    %1971 = vmatpush1.msra.mxu0 0.0
    %1972 = vmatprep.subr.mxu0 0.0
    %1973 = vmatpush1.msra.mxu0 0.0
    %1974 = vmatprep.subr.mxu0 0.0
    %1975 = vmatpush1.msra.mxu0 0.0
    %1976 = vmatprep.subr.mxu0 0.0
    %1977 = vmatpush1.msra.mxu0 0.0
    %1978 = vmatprep.subr.mxu0 0.0
    %1979 = vmatpush1.msra.mxu0 0.0
    %1980 = vmatprep.subr.mxu0 0.0
    %1981 = vmatpush1.msra.mxu0 0.0
    %1982 = vmatprep.subr.mxu0 0.0
    %1983 = vmatpush1.msra.mxu0 0.0
    %1984 = vmatprep.subr.mxu0 0.0
    %1985 = vmatpush1.msra.mxu0 0.0
    %1986 = vmatprep.subr.mxu0 0.0
    %1987 = vmatpush1.msra.mxu0 0.0
    %1988 = vmatprep.subr.mxu0 0.0
    %1989 = vmatpush1.msra.mxu0 0.0
    %1990 = vmatprep.mubr.f32.mxu0 0.0
    %1991 = vmatmul.mubr.f32.gmra.mrb[0].mxu0 %v1924
    %v1992 = vpop.f32.mrb[0].mxu0
    %v1993 = vadd.f32 0.0, %v1992
    %v1994 = vpop.f32.mrb[0].mxu0
    %1995 = vdwg.mxu0
    %1996 = vrot.lane.b32.xlu0 %v1403, 48
    %v1997 = vpop.permute.xlu0 %1996
    %v2000 = vsel %vm383, %v1919, 0
    %2002 = vmatprep.subr.mxu0 0.0
    %2003 = vmatpush1.msra.mxu0 %v1997
    %2004 = vmatprep.subr.mxu0 0.0
    %2005 = vmatpush1.msra.mxu0 0.0
    %2006 = vmatprep.subr.mxu0 0.0
    %2007 = vmatpush1.msra.mxu0 0.0
    %2008 = vmatprep.subr.mxu0 0.0
    %2009 = vmatpush1.msra.mxu0 0.0
    %2010 = vmatprep.subr.mxu0 0.0
    %2011 = vmatpush1.msra.mxu0 0.0
    %2012 = vmatprep.subr.mxu0 0.0
    %2013 = vmatpush1.msra.mxu0 0.0
    %2014 = vmatprep.subr.mxu0 0.0
    %2015 = vmatpush1.msra.mxu0 0.0
    %2016 = vmatprep.subr.mxu0 0.0
    %2017 = vmatpush1.msra.mxu0 0.0
    %2018 = vmatprep.subr.mxu0 0.0
    %2019 = vmatpush1.msra.mxu0 0.0
    %2020 = vmatprep.subr.mxu0 0.0
    %2021 = vmatpush1.msra.mxu0 0.0
    %2022 = vmatprep.subr.mxu0 0.0
    %2023 = vmatpush1.msra.mxu0 0.0
    %2024 = vmatprep.subr.mxu0 0.0
    %2025 = vmatpush1.msra.mxu0 0.0
    %2026 = vmatprep.subr.mxu0 0.0
    %2027 = vmatpush1.msra.mxu0 0.0
    %2028 = vmatprep.subr.mxu0 0.0
    %2029 = vmatpush1.msra.mxu0 0.0
    %2030 = vmatprep.subr.mxu0 0.0
    %2031 = vmatpush1.msra.mxu0 0.0
    %2032 = vmatprep.subr.mxu0 0.0
    %2033 = vmatpush1.msra.mxu0 0.0
    %2034 = vmatprep.subr.mxu0 0.0
    %2035 = vmatpush1.msra.mxu0 0.0
    %2036 = vmatprep.subr.mxu0 0.0
    %2037 = vmatpush1.msra.mxu0 0.0
    %2038 = vmatprep.subr.mxu0 0.0
    %2039 = vmatpush1.msra.mxu0 0.0
    %2040 = vmatprep.subr.mxu0 0.0
    %2041 = vmatpush1.msra.mxu0 0.0
    %2042 = vmatprep.subr.mxu0 0.0
    %2043 = vmatpush1.msra.mxu0 0.0
    %2044 = vmatprep.subr.mxu0 0.0
    %2045 = vmatpush1.msra.mxu0 0.0
    %2046 = vmatprep.subr.mxu0 0.0
    %2047 = vmatpush1.msra.mxu0 0.0
    %2048 = vmatprep.subr.mxu0 0.0
    %2049 = vmatpush1.msra.mxu0 0.0
    %2050 = vmatprep.subr.mxu0 0.0
    %2051 = vmatpush1.msra.mxu0 0.0
    %2052 = vmatprep.subr.mxu0 0.0
    %2053 = vmatpush1.msra.mxu0 0.0
    %2054 = vmatprep.subr.mxu0 0.0
    %2055 = vmatpush1.msra.mxu0 0.0
    %2056 = vmatprep.subr.mxu0 0.0
    %2057 = vmatpush1.msra.mxu0 0.0
    %2058 = vmatprep.subr.mxu0 0.0
    %2059 = vmatpush1.msra.mxu0 0.0
    %2060 = vmatprep.subr.mxu0 0.0
    %2061 = vmatpush1.msra.mxu0 0.0
    %2062 = vmatprep.subr.mxu0 0.0
    %2063 = vmatpush1.msra.mxu0 0.0
    %2064 = vmatprep.subr.mxu0 0.0
    %2065 = vmatpush1.msra.mxu0 0.0
    %2066 = vmatprep.mubr.f32.mxu0 0.0
    %2067 = vmatmul.mubr.f32.gmra.mrb[0].mxu0 %v2000
    %v2068 = vpop.f32.mrb[0].mxu0
    %v2069 = vadd.f32 0.0, %v2068
    %v2070 = vpop.f32.mrb[0].mxu0
    %2071 = vdwg.mxu0
    %2074 = vrot.lane.b32.xlu0 %v1993, 16
    %v2075 = vpop.permute.xlu0 %2074
    %2076 = vrot.lane.b32.xlu0 %v2069, 16
    %v2077 = vpop.permute.xlu0 %2076
    %v2080 = vsel %vm217, %v1659, %v2075
    %v2081 = vsel %vm217, %v1735, %v2077
    %v2082 = vlaneseq
    %v2083 = vshrl.u32 %v2082, 7
    %v2084 = vsub.s32 0, %v2083
    %v2085 = vrot.slane %v1302, %v2084
    %v2087 = vsel %vm35, %v2080, 0
    %v2090 = vsel %vm35, %v2081, 0
    %2092 = vmatprep.subr.mxu0 0.0
    %2093 = vmatpush1.msra.mxu0 %v1298
    %2094 = vmatprep.subr.mxu0 0.0
    %2095 = vmatpush1.msra.mxu0 %v1299
    %2096 = vmatprep.subr.mxu0 0.0
    %2097 = vmatpush1.msra.mxu0 %v1300
    %2098 = vmatprep.subr.mxu0 0.0
    %2099 = vmatpush1.msra.mxu0 %v1301
    %2100 = vmatprep.subr.mxu0 0.0
    %2101 = vmatpush1.msra.mxu0 0.0
    %2102 = vmatprep.subr.mxu0 0.0
    %2103 = vmatpush1.msra.mxu0 0.0
    %2104 = vmatprep.subr.mxu0 0.0
    %2105 = vmatpush1.msra.mxu0 0.0
    %2106 = vmatprep.subr.mxu0 0.0
    %2107 = vmatpush1.msra.mxu0 0.0
    %2108 = vmatprep.subr.mxu0 0.0
    %2109 = vmatpush1.msra.mxu0 0.0
    %2110 = vmatprep.subr.mxu0 0.0
    %2111 = vmatpush1.msra.mxu0 0.0
    %2112 = vmatprep.subr.mxu0 0.0
    %2113 = vmatpush1.msra.mxu0 0.0
    %2114 = vmatprep.subr.mxu0 0.0
    %2115 = vmatpush1.msra.mxu0 0.0
    %2116 = vmatprep.subr.mxu0 0.0
    %2117 = vmatpush1.msra.mxu0 0.0
    %2118 = vmatprep.subr.mxu0 0.0
    %2119 = vmatpush1.msra.mxu0 0.0
    %2120 = vmatprep.subr.mxu0 0.0
    %2121 = vmatpush1.msra.mxu0 0.0
    %2122 = vmatprep.subr.mxu0 0.0
    %2123 = vmatpush1.msra.mxu0 0.0
    %2124 = vmatprep.subr.mxu0 0.0
    %2125 = vmatpush1.msra.mxu0 0.0
    %2126 = vmatprep.subr.mxu0 0.0
    %2127 = vmatpush1.msra.mxu0 0.0
    %2128 = vmatprep.subr.mxu0 0.0
    %2129 = vmatpush1.msra.mxu0 0.0
    %2130 = vmatprep.subr.mxu0 0.0
    %2131 = vmatpush1.msra.mxu0 0.0
    %2132 = vmatprep.subr.mxu0 0.0
    %2133 = vmatpush1.msra.mxu0 0.0
    %2134 = vmatprep.subr.mxu0 0.0
    %2135 = vmatpush1.msra.mxu0 0.0
    %2136 = vmatprep.subr.mxu0 0.0
    %2137 = vmatpush1.msra.mxu0 0.0
    %2138 = vmatprep.subr.mxu0 0.0
    %2139 = vmatpush1.msra.mxu0 0.0
    %2140 = vmatprep.subr.mxu0 0.0
    %2141 = vmatpush1.msra.mxu0 0.0
    %2142 = vmatprep.subr.mxu0 0.0
    %2143 = vmatpush1.msra.mxu0 0.0
    %2144 = vmatprep.subr.mxu0 0.0
    %2145 = vmatpush1.msra.mxu0 0.0
    %2146 = vmatprep.subr.mxu0 0.0
    %2147 = vmatpush1.msra.mxu0 0.0
    %2148 = vmatprep.subr.mxu0 0.0
    %2149 = vmatpush1.msra.mxu0 0.0
    %2150 = vmatprep.subr.mxu0 0.0
    %2151 = vmatpush1.msra.mxu0 0.0
    %2152 = vmatprep.subr.mxu0 0.0
    %2153 = vmatpush1.msra.mxu0 0.0
    %2154 = vmatprep.subr.mxu0 0.0
    %2155 = vmatpush1.msra.mxu0 0.0
    %2156 = vmatprep.mubr.f32.mxu0 0.0
    %2157 = vmatmul.mubr.f32.gmra.mrb[0].mxu0 %v2087
    %v2158 = vpop.f32.mrb[0].mxu0
    %v2159 = vadd.f32 %v2085, %v2158
    %v2160 = vpop.f32.mrb[0].mxu0
    %2161 = vmatprep.mubr.f32.mxu0 0.0
    %2162 = vmatmul.mubr.f32.gmra.mrb[0].mxu0 %v2090
    %v2163 = vpop.f32.mrb[0].mxu0
    %v2164 = vadd.f32 %v2085, %v2163
    %v2165 = vpop.f32.mrb[0].mxu0
    %2166 = vdwg.mxu0
    %v2167 = vadd.f32 %v1290, %v2159
    %v2168 = vadd.f32 %v1291, %v2164
    %v2169 = vsel %vm35, %v2167, 0.0
    %2170 = vadd.xlane.f32.xlu0 %v2169
    %v2171 = vpop.xlane.xlu0 %2170
    %v2172 = vsel %vm35, %v2168, 0.0
    %2173 = vadd.xlane.f32.xlu0 %v2172
    %v2174 = vpop.xlane.xlu0 %2173
    %v2175 = vmul.f32 %v2171, %v42
    %v2176 = vmul.f32 %v2174, %v42
    %v2177 = vsub.f32 %v2167, %v2175
    %v2178 = vsub.f32 %v2168, %v2176
    %v2179 = vmul.f32 %v2177, %v2177
    %v2180 = vmul.f32 %v2178, %v2178
    %v2181 = vsel %vm35, %v2179, 0.0
    %2182 = vadd.xlane.f32.xlu0 %v2181
    %v2183 = vpop.xlane.xlu0 %2182
    %v2184 = vsel %vm35, %v2180, 0.0
    %2185 = vadd.xlane.f32.xlu0 %v2184
    %v2186 = vpop.xlane.xlu0 %2185
    %v2187 = vmul.f32 %v2183, %v42
    %v2188 = vmul.f32 %v2186, %v42
    %v2189 = vadd.f32 %v2187, 1e-12
    %v2190 = vadd.f32 %v2188, 1e-12
    %v2191 = vrsqrt.pop %v2189
    %v2192 = vrsqrt.pop %v2190
    %v2193 = vmul.f32 %v2177, %v2191
    %v2194 = vmul.f32 %v2178, %v2192
    %v2195 = vlaneseq
    %v2196 = vshrl.u32 %v2195, 7
    %v2197 = vsub.s32 0, %v2196
    %v2198 = vrot.slane %v1303, %v2197
    %v2199 = vmul.f32 %v2193, %v2198
    %v2200 = vmul.f32 %v2194, %v2198
    %v2201 = vlaneseq
    %v2202 = vshrl.u32 %v2201, 7
    %v2203 = vsub.s32 0, %v2202
    %v2204 = vrot.slane %v1304, %v2203
    %v2205 = vadd.f32 %v2199, %v2204
    %v2206 = vadd.f32 %v2200, %v2204
    %v2207 = vlaneseq
    %v2208 = vshrl.u32 %v2207, 7
    %v2209 = vsub.s32 0, %v2208
    %v2210 = vrot.slane %v1309, %v2209
    %v2212 = vsel %vm35, %v2205, 0
    %v2215 = vsel %vm35, %v2206, 0
    %2217 = vmatprep.subr.mxu0 0.0
    %2218 = vmatpush1.msra.mxu0 %v1305
    %2219 = vmatprep.subr.mxu0 0.0
    %2220 = vmatpush1.msra.mxu0 %v1306
    %2221 = vmatprep.subr.mxu0 0.0
    %2222 = vmatpush1.msra.mxu0 %v1307
    %2223 = vmatprep.subr.mxu0 0.0
    %2224 = vmatpush1.msra.mxu0 %v1308
    %2225 = vmatprep.subr.mxu0 0.0
    %2226 = vmatpush1.msra.mxu0 0.0
    %2227 = vmatprep.subr.mxu0 0.0
    %2228 = vmatpush1.msra.mxu0 0.0
    %2229 = vmatprep.subr.mxu0 0.0
    %2230 = vmatpush1.msra.mxu0 0.0
    %2231 = vmatprep.subr.mxu0 0.0
    %2232 = vmatpush1.msra.mxu0 0.0
    %2233 = vmatprep.subr.mxu0 0.0
    %2234 = vmatpush1.msra.mxu0 0.0
    %2235 = vmatprep.subr.mxu0 0.0
    %2236 = vmatpush1.msra.mxu0 0.0
    %2237 = vmatprep.subr.mxu0 0.0
    %2238 = vmatpush1.msra.mxu0 0.0
    %2239 = vmatprep.subr.mxu0 0.0
    %2240 = vmatpush1.msra.mxu0 0.0
    %2241 = vmatprep.subr.mxu0 0.0
    %2242 = vmatpush1.msra.mxu0 0.0
    %2243 = vmatprep.subr.mxu0 0.0
    %2244 = vmatpush1.msra.mxu0 0.0
    %2245 = vmatprep.subr.mxu0 0.0
    %2246 = vmatpush1.msra.mxu0 0.0
    %2247 = vmatprep.subr.mxu0 0.0
    %2248 = vmatpush1.msra.mxu0 0.0
    %2249 = vmatprep.subr.mxu0 0.0
    %2250 = vmatpush1.msra.mxu0 0.0
    %2251 = vmatprep.subr.mxu0 0.0
    %2252 = vmatpush1.msra.mxu0 0.0
    %2253 = vmatprep.subr.mxu0 0.0
    %2254 = vmatpush1.msra.mxu0 0.0
    %2255 = vmatprep.subr.mxu0 0.0
    %2256 = vmatpush1.msra.mxu0 0.0
    %2257 = vmatprep.subr.mxu0 0.0
    %2258 = vmatpush1.msra.mxu0 0.0
    %2259 = vmatprep.subr.mxu0 0.0
    %2260 = vmatpush1.msra.mxu0 0.0
    %2261 = vmatprep.subr.mxu0 0.0
    %2262 = vmatpush1.msra.mxu0 0.0
    %2263 = vmatprep.subr.mxu0 0.0
    %2264 = vmatpush1.msra.mxu0 0.0
    %2265 = vmatprep.subr.mxu0 0.0
    %2266 = vmatpush1.msra.mxu0 0.0
    %2267 = vmatprep.subr.mxu0 0.0
    %2268 = vmatpush1.msra.mxu0 0.0
    %2269 = vmatprep.subr.mxu0 0.0
    %2270 = vmatpush1.msra.mxu0 0.0
    %2271 = vmatprep.subr.mxu0 0.0
    %2272 = vmatpush1.msra.mxu0 0.0
    %2273 = vmatprep.subr.mxu0 0.0
    %2274 = vmatpush1.msra.mxu0 0.0
    %2275 = vmatprep.subr.mxu0 0.0
    %2276 = vmatpush1.msra.mxu0 0.0
    %2277 = vmatprep.subr.mxu0 0.0
    %2278 = vmatpush1.msra.mxu0 0.0
    %2279 = vmatprep.subr.mxu0 0.0
    %2280 = vmatpush1.msra.mxu0 0.0
    %2281 = vmatprep.mubr.f32.mxu0 0.0
    %2282 = vmatmul.mubr.f32.gmra.mrb[0].mxu0 %v2212
    %v2283 = vpop.f32.mrb[0].mxu0
    %v2284 = vadd.f32 %v2210, %v2283
    %v2285 = vpop.f32.mrb[0].mxu0
    %2286 = vmatprep.mubr.f32.mxu0 0.0
    %2287 = vmatmul.mubr.f32.gmra.mrb[0].mxu0 %v2215
    %v2288 = vpop.f32.mrb[0].mxu0
    %v2289 = vadd.f32 %v2210, %v2288
    %v2290 = vpop.f32.mrb[0].mxu0
    %2291 = vdwg.mxu0
    %v2292 = vmul.f32 %v2284, 0.5
    %v2293 = vmul.f32 %v2289, 0.5
    %v2294 = vmul.f32 %v2284, 0.70710677
    %v2295 = vmul.f32 %v2289, 0.70710677
    %v2296 = vand.u32 2147483647, %v2294
    %v2297 = vand.u32 2147483647, %v2295
    %v2298 = vmul.f32 %v2296, 0.3275911
    %v2299 = vmul.f32 %v2297, 0.3275911
    %v2300 = vadd.f32 %v2298, 1.0
    %v2301 = vadd.f32 %v2299, 1.0
    %v2302 = vrcp.pop %v2300
    %v2303 = vmul.f32 1.0, %v2302
    %v2304 = vrcp.pop %v2301
    %v2305 = vmul.f32 1.0, %v2304
    %v2306 = vmul.f32 %v2303, 1.0614054
    %v2307 = vmul.f32 %v2305, 1.0614054
    %v2308 = vadd.f32 %v2306, -1.4531521
    %v2309 = vadd.f32 %v2307, -1.4531521
    %v2310 = vmul.f32 %v2308, %v2303
    %v2311 = vmul.f32 %v2309, %v2305
    %v2312 = vadd.f32 %v2310, 1.4214138
    %v2313 = vadd.f32 %v2311, 1.4214138
    %v2314 = vmul.f32 %v2312, %v2303
    %v2315 = vmul.f32 %v2313, %v2305
    %v2316 = vadd.f32 %v2314, -0.28449672
    %v2317 = vadd.f32 %v2315, -0.28449672
    %v2318 = vmul.f32 %v2316, %v2303
    %v2319 = vmul.f32 %v2317, %v2305
    %v2320 = vadd.f32 %v2318, 0.2548296
    %v2321 = vadd.f32 %v2319, 0.2548296
    %v2322 = vmul.f32 %v2320, %v2303
    %v2323 = vmul.f32 %v2321, %v2305
    %v2324 = vsub.f32 0.0, %v2296
    %v2325 = vsub.f32 0.0, %v2297
    %v2326 = vmul.f32 %v2324, %v2296
    %v2327 = vmul.f32 %v2325, %v2297
    %v2328 = vmul.f32 %v2326, 1.442695
    %v2329 = vpow.pop %v2328
    %v2330 = vmul.f32 %v2327, 1.442695
    %v2331 = vpow.pop %v2330
    %v2332 = vmul.f32 %v2322, %v2329
    %v2333 = vmul.f32 %v2323, %v2331
    %v2334 = vsub.f32 1.0, %v2332
    %v2335 = vsub.f32 1.0, %v2333
    %vm2336 = vcmp.ge.f32.partialorder %v2294, 0.0
    %vm2337 = vcmp.ge.f32.partialorder %v2295, 0.0
    %v2338 = vsub.f32 0.0, %v2334
    %v2339 = vsub.f32 0.0, %v2335
    %v2340 = vsel %vm2336, %v2334, %v2338
    %v2341 = vsel %vm2337, %v2335, %v2339
    %v2342 = vadd.f32 %v2340, 1.0
    %v2343 = vadd.f32 %v2341, 1.0
    %v2344 = vmul.f32 %v2292, %v2342
    %v2345 = vmul.f32 %v2293, %v2343
    %v2346 = vlaneseq
    %v2347 = vshrl.u32 %v2346, 7
    %v2348 = vsub.s32 0, %v2347
    %v2349 = vrot.slane %v1318, %v2348
    %v2351 = vsel %vm1170, %v2344, 0
    %v2354 = vsel %vm1170, %v2345, 0
    %2356 = vmatprep.subr.mxu0 0.0
    %2357 = vmatpush1.msra.mxu0 %v1310
    %2358 = vmatprep.subr.mxu0 0.0
    %2359 = vmatpush1.msra.mxu0 %v1311
    %2360 = vmatprep.subr.mxu0 0.0
    %2361 = vmatpush1.msra.mxu0 %v1312
    %2362 = vmatprep.subr.mxu0 0.0
    %2363 = vmatpush1.msra.mxu0 %v1313
    %2364 = vmatprep.subr.mxu0 0.0
    %2365 = vmatpush1.msra.mxu0 %v1314
    %2366 = vmatprep.subr.mxu0 0.0
    %2367 = vmatpush1.msra.mxu0 %v1315
    %2368 = vmatprep.subr.mxu0 0.0
    %2369 = vmatpush1.msra.mxu0 %v1316
    %2370 = vmatprep.subr.mxu0 0.0
    %2371 = vmatpush1.msra.mxu0 %v1317
    %2372 = vmatprep.subr.mxu0 0.0
    %2373 = vmatpush1.msra.mxu0 0.0
    %2374 = vmatprep.subr.mxu0 0.0
    %2375 = vmatpush1.msra.mxu0 0.0
    %2376 = vmatprep.subr.mxu0 0.0
    %2377 = vmatpush1.msra.mxu0 0.0
    %2378 = vmatprep.subr.mxu0 0.0
    %2379 = vmatpush1.msra.mxu0 0.0
    %2380 = vmatprep.subr.mxu0 0.0
    %2381 = vmatpush1.msra.mxu0 0.0
    %2382 = vmatprep.subr.mxu0 0.0
    %2383 = vmatpush1.msra.mxu0 0.0
    %2384 = vmatprep.subr.mxu0 0.0
    %2385 = vmatpush1.msra.mxu0 0.0
    %2386 = vmatprep.subr.mxu0 0.0
    %2387 = vmatpush1.msra.mxu0 0.0
    %2388 = vmatprep.subr.mxu0 0.0
    %2389 = vmatpush1.msra.mxu0 0.0
    %2390 = vmatprep.subr.mxu0 0.0
    %2391 = vmatpush1.msra.mxu0 0.0
    %2392 = vmatprep.subr.mxu0 0.0
    %2393 = vmatpush1.msra.mxu0 0.0
    %2394 = vmatprep.subr.mxu0 0.0
    %2395 = vmatpush1.msra.mxu0 0.0
    %2396 = vmatprep.subr.mxu0 0.0
    %2397 = vmatpush1.msra.mxu0 0.0
    %2398 = vmatprep.subr.mxu0 0.0
    %2399 = vmatpush1.msra.mxu0 0.0
    %2400 = vmatprep.subr.mxu0 0.0
    %2401 = vmatpush1.msra.mxu0 0.0
    %2402 = vmatprep.subr.mxu0 0.0
    %2403 = vmatpush1.msra.mxu0 0.0
    %2404 = vmatprep.subr.mxu0 0.0
    %2405 = vmatpush1.msra.mxu0 0.0
    %2406 = vmatprep.subr.mxu0 0.0
    %2407 = vmatpush1.msra.mxu0 0.0
    %2408 = vmatprep.subr.mxu0 0.0
    %2409 = vmatpush1.msra.mxu0 0.0
    %2410 = vmatprep.subr.mxu0 0.0
    %2411 = vmatpush1.msra.mxu0 0.0
    %2412 = vmatprep.subr.mxu0 0.0
    %2413 = vmatpush1.msra.mxu0 0.0
    %2414 = vmatprep.subr.mxu0 0.0
    %2415 = vmatpush1.msra.mxu0 0.0
    %2416 = vmatprep.subr.mxu0 0.0
    %2417 = vmatpush1.msra.mxu0 0.0
    %2418 = vmatprep.subr.mxu0 0.0
    %2419 = vmatpush1.msra.mxu0 0.0
    %2420 = vmatprep.mubr.f32.mxu0 0.0
    %2421 = vmatmul.mubr.f32.gmra.mrb[0].mxu0 %v2351
    %v2422 = vpop.f32.mrb[0].mxu0
    %v2423 = vadd.f32 %v2349, %v2422
    %v2424 = vpop.f32.mrb[0].mxu0
    %2425 = vmatprep.mubr.f32.mxu0 0.0
    %2426 = vmatmul.mubr.f32.gmra.mrb[0].mxu0 %v2354
    %v2427 = vpop.f32.mrb[0].mxu0
    %v2428 = vadd.f32 %v2349, %v2427
    %v2429 = vpop.f32.mrb[0].mxu0
    %2430 = vdwg.mxu0
    %v2431 = vadd.f32 %v2205, %v2423
    %v2432 = vadd.f32 %v2206, %v2428
    %v2433 = vsel %vm35, %v2431, 0.0
    %2434 = vadd.xlane.f32.xlu0 %v2433
    %v2435 = vpop.xlane.xlu0 %2434
    %v2436 = vsel %vm35, %v2432, 0.0
    %2437 = vadd.xlane.f32.xlu0 %v2436
    %v2438 = vpop.xlane.xlu0 %2437
    %v2439 = vmul.f32 %v2435, %v42
    %v2440 = vmul.f32 %v2438, %v42
    %v2441 = vsub.f32 %v2431, %v2439
    %v2442 = vsub.f32 %v2432, %v2440
    %v2443 = vmul.f32 %v2441, %v2441
    %v2444 = vmul.f32 %v2442, %v2442
    %v2445 = vsel %vm35, %v2443, 0.0
    %2446 = vadd.xlane.f32.xlu0 %v2445
    %v2447 = vpop.xlane.xlu0 %2446
    %v2448 = vsel %vm35, %v2444, 0.0
    %2449 = vadd.xlane.f32.xlu0 %v2448
    %v2450 = vpop.xlane.xlu0 %2449
    %v2451 = vmul.f32 %v2447, %v42
    %v2452 = vmul.f32 %v2450, %v42
    %v2453 = vadd.f32 %v2451, 1e-12
    %v2454 = vadd.f32 %v2452, 1e-12
    %v2455 = vrsqrt.pop %v2453
    %v2456 = vrsqrt.pop %v2454
    %v2457 = vmul.f32 %v2441, %v2455
    %v2458 = vmul.f32 %v2442, %v2456
    %v2459 = vlaneseq
    %v2460 = vshrl.u32 %v2459, 7
    %v2461 = vsub.s32 0, %v2460
    %v2462 = vrot.slane %v1319, %v2461
    %v2463 = vmul.f32 %v2457, %v2462
    %v2464 = vmul.f32 %v2458, %v2462
    %v2465 = vlaneseq
    %v2466 = vshrl.u32 %v2465, 7
    %v2467 = vsub.s32 0, %v2466
    %v2468 = vrot.slane %v1320, %v2467
    %v2469 = vadd.f32 %v2463, %v2468
    %v2470 = vadd.f32 %v2464, %v2468
    %v2471 = vld [vmem:[%s3] sm:$0xff]
    %v2472 = vld [vmem:[%s3 + $0x8] sm:$0xff]
    %v2473 = vld [vmem:[%s3 + $0x10] sm:$0xff]
    %v2474 = vld [vmem:[%s3 + $0x18] sm:$0xff]
    %v2475 = vld [vmem:[%s3 + $0x20] sm:$0x1]
    %v2476 = vlaneseq
    %v2477 = vshrl.u32 %v2476, 7
    %v2478 = vsub.s32 0, %v2477
    %v2479 = vrot.slane %v2475, %v2478
    %v2481 = vsel %vm35, %v2469, 0
    %v2484 = vsel %vm35, %v2470, 0
    %2486 = vmatprep.subr.mxu0 0.0
    %2487 = vmatpush1.msra.mxu0 %v2471
    %2488 = vmatprep.subr.mxu0 0.0
    %2489 = vmatpush1.msra.mxu0 %v2472
    %2490 = vmatprep.subr.mxu0 0.0
    %2491 = vmatpush1.msra.mxu0 %v2473
    %2492 = vmatprep.subr.mxu0 0.0
    %2493 = vmatpush1.msra.mxu0 %v2474
    %2494 = vmatprep.subr.mxu0 0.0
    %2495 = vmatpush1.msra.mxu0 0.0
    %2496 = vmatprep.subr.mxu0 0.0
    %2497 = vmatpush1.msra.mxu0 0.0
    %2498 = vmatprep.subr.mxu0 0.0
    %2499 = vmatpush1.msra.mxu0 0.0
    %2500 = vmatprep.subr.mxu0 0.0
    %2501 = vmatpush1.msra.mxu0 0.0
    %2502 = vmatprep.subr.mxu0 0.0
    %2503 = vmatpush1.msra.mxu0 0.0
    %2504 = vmatprep.subr.mxu0 0.0
    %2505 = vmatpush1.msra.mxu0 0.0
    %2506 = vmatprep.subr.mxu0 0.0
    %2507 = vmatpush1.msra.mxu0 0.0
    %2508 = vmatprep.subr.mxu0 0.0
    %2509 = vmatpush1.msra.mxu0 0.0
    %2510 = vmatprep.subr.mxu0 0.0
    %2511 = vmatpush1.msra.mxu0 0.0
    %2512 = vmatprep.subr.mxu0 0.0
    %2513 = vmatpush1.msra.mxu0 0.0
    %2514 = vmatprep.subr.mxu0 0.0
    %2515 = vmatpush1.msra.mxu0 0.0
    %2516 = vmatprep.subr.mxu0 0.0
    %2517 = vmatpush1.msra.mxu0 0.0
    %2518 = vmatprep.subr.mxu0 0.0
    %2519 = vmatpush1.msra.mxu0 0.0
    %2520 = vmatprep.subr.mxu0 0.0
    %2521 = vmatpush1.msra.mxu0 0.0
    %2522 = vmatprep.subr.mxu0 0.0
    %2523 = vmatpush1.msra.mxu0 0.0
    %2524 = vmatprep.subr.mxu0 0.0
    %2525 = vmatpush1.msra.mxu0 0.0
    %2526 = vmatprep.subr.mxu0 0.0
    %2527 = vmatpush1.msra.mxu0 0.0
    %2528 = vmatprep.subr.mxu0 0.0
    %2529 = vmatpush1.msra.mxu0 0.0
    %2530 = vmatprep.subr.mxu0 0.0
    %2531 = vmatpush1.msra.mxu0 0.0
    %2532 = vmatprep.subr.mxu0 0.0
    %2533 = vmatpush1.msra.mxu0 0.0
    %2534 = vmatprep.subr.mxu0 0.0
    %2535 = vmatpush1.msra.mxu0 0.0
    %2536 = vmatprep.subr.mxu0 0.0
    %2537 = vmatpush1.msra.mxu0 0.0
    %2538 = vmatprep.subr.mxu0 0.0
    %2539 = vmatpush1.msra.mxu0 0.0
    %2540 = vmatprep.subr.mxu0 0.0
    %2541 = vmatpush1.msra.mxu0 0.0
    %2542 = vmatprep.subr.mxu0 0.0
    %2543 = vmatpush1.msra.mxu0 0.0
    %2544 = vmatprep.subr.mxu0 0.0
    %2545 = vmatpush1.msra.mxu0 0.0
    %2546 = vmatprep.subr.mxu0 0.0
    %2547 = vmatpush1.msra.mxu0 0.0
    %2548 = vmatprep.subr.mxu0 0.0
    %2549 = vmatpush1.msra.mxu0 0.0
    %2550 = vmatprep.mubr.f32.mxu0 0.0
    %2551 = vmatmul.mubr.f32.gmra.mrb[0].mxu0 %v2481
    %v2552 = vpop.f32.mrb[0].mxu0
    %v2553 = vadd.f32 %v2479, %v2552
    %v2554 = vpop.f32.mrb[0].mxu0
    %2555 = vmatprep.mubr.f32.mxu0 0.0
    %2556 = vmatmul.mubr.f32.gmra.mrb[0].mxu0 %v2484
    %v2557 = vpop.f32.mrb[0].mxu0
    %v2558 = vadd.f32 %v2479, %v2557
    %v2559 = vpop.f32.mrb[0].mxu0
    %2560 = vdwg.mxu0
    %v2561 = vmul.f32 %v2553, 0.5
    %v2562 = vmul.f32 %v2558, 0.5
    %v2563 = vmul.f32 %v2553, 0.70710677
    %v2564 = vmul.f32 %v2558, 0.70710677
    %v2565 = vand.u32 2147483647, %v2563
    %v2566 = vand.u32 2147483647, %v2564
    %v2567 = vmul.f32 %v2565, 0.3275911
    %v2568 = vmul.f32 %v2566, 0.3275911
    %v2569 = vadd.f32 %v2567, 1.0
    %v2570 = vadd.f32 %v2568, 1.0
    %v2571 = vrcp.pop %v2569
    %v2572 = vmul.f32 1.0, %v2571
    %v2573 = vrcp.pop %v2570
    %v2574 = vmul.f32 1.0, %v2573
    %v2575 = vmul.f32 %v2572, 1.0614054
    %v2576 = vmul.f32 %v2574, 1.0614054
    %v2577 = vadd.f32 %v2575, -1.4531521
    %v2578 = vadd.f32 %v2576, -1.4531521
    %v2579 = vmul.f32 %v2577, %v2572
    %v2580 = vmul.f32 %v2578, %v2574
    %v2581 = vadd.f32 %v2579, 1.4214138
    %v2582 = vadd.f32 %v2580, 1.4214138
    %v2583 = vmul.f32 %v2581, %v2572
    %v2584 = vmul.f32 %v2582, %v2574
    %v2585 = vadd.f32 %v2583, -0.28449672
    %v2586 = vadd.f32 %v2584, -0.28449672
    %v2587 = vmul.f32 %v2585, %v2572
    %v2588 = vmul.f32 %v2586, %v2574
    %v2589 = vadd.f32 %v2587, 0.2548296
    %v2590 = vadd.f32 %v2588, 0.2548296
    %v2591 = vmul.f32 %v2589, %v2572
    %v2592 = vmul.f32 %v2590, %v2574
    %v2593 = vsub.f32 0.0, %v2565
    %v2594 = vsub.f32 0.0, %v2566
    %v2595 = vmul.f32 %v2593, %v2565
    %v2596 = vmul.f32 %v2594, %v2566
    %v2597 = vmul.f32 %v2595, 1.442695
    %v2598 = vpow.pop %v2597
    %v2599 = vmul.f32 %v2596, 1.442695
    %v2600 = vpow.pop %v2599
    %v2601 = vmul.f32 %v2591, %v2598
    %v2602 = vmul.f32 %v2592, %v2600
    %v2603 = vsub.f32 1.0, %v2601
    %v2604 = vsub.f32 1.0, %v2602
    %vm2605 = vcmp.ge.f32.partialorder %v2563, 0.0
    %vm2606 = vcmp.ge.f32.partialorder %v2564, 0.0
    %v2607 = vsub.f32 0.0, %v2603
    %v2608 = vsub.f32 0.0, %v2604
    %v2609 = vsel %vm2605, %v2603, %v2607
    %v2610 = vsel %vm2606, %v2604, %v2608
    %v2611 = vadd.f32 %v2609, 1.0
    %v2612 = vadd.f32 %v2610, 1.0
    %v2613 = vmul.f32 %v2561, %v2611
    %v2614 = vmul.f32 %v2562, %v2612
    %v2615 = vld [vmem:[%s3 + $0x21] sm:$0x1]
    %v2616 = vld [vmem:[%s3 + $0x22] sm:$0x1]
    %v2617 = vlaneseq
    %v2618 = vshrl.u32 %v2617, 7
    %v2619 = vsub.s32 0, %v2618
    %v2620 = vrot.slane %v2615, %v2619
    %2622 = vrot.lane.b32.xlu0 %v2620, 2
    %v2623 = vpop.permute.xlu0 %2622
    %v2625 = vmul.f32 %v2613, %v2623
    %v2626 = vmul.f32 %v2614, %v2623
    %v2629 = vrot.slane %v2626, 7
    %vm2630 = vcmask 1041409
    %v2631 = vsel %vm2630, %v2629, %v2625
    %2632 = vrot.lane.b32.xlu0 %v2631, 126
    %v2633 = vpop.permute.xlu0 %2632
    %vm2635 = vcmask 254976
    %v2636 = vsel %vm2635, %v2633, 0.0
    %2637 = vadd.xlane.f32.xlu0 %v2636
    %v2638 = vpop.xlane.xlu0 %2637
    %v2639 = vlaneseq
    %v2640 = vshrl.u32 %v2639, 7
    %v2641 = vsub.s32 0, %v2640
    %v2642 = vrot.slane %v2616, %v2641
    %v2643 = vadd.f32 %v2638, %v2642
    %v2644 = vsub.f32 0.0, %v2643
    %v2645 = vmul.f32 %v2644, 1.442695
    %v2646 = vpow.pop %v2645
    %v2647 = vadd.f32 %v2646, 1.0
    %v2648 = vrcp.pop %v2647
    %v2649 = vmul.f32 1.0, %v2648
    %v2650 = vlaneseq
    %v2651 = vand.u32 %v2650, 127
    %v2654 = vunpack.c.l.s4 1966171168
    %v2655 = vunpack.c.0.s8 %v2654
    %v2656 = vlaneseq
    %v2657 = vshrl.u32 %v2656, 7
    %v2658 = vsub.s32 %v2655, %v2657
    %v2659 = vrot.slane %v2649, %v2658
    %v2660 = vcombine.high %v2659, %v2659
    %v2662 = vunpack.c.l.s4 1966171168
    %v2663 = vunpack.c.0.s8 %v2662
    %v2664 = vlaneseq
    %v2665 = vshrl.u32 %v2664, 7
    %v2666 = vsub.s32 %v2663, %v2665
    %v2667 = vrot.slane %v2659, %v2666
    %v2669 = vunpack.c.l.s4 1966171168
    %v2670 = vunpack.c.0.s8 %v2669
    %v2671 = vlaneseq
    %v2672 = vshrl.u32 %v2671, 7
    %v2673 = vsub.s32 %v2670, %v2672
    %v2674 = vrot.slane %v2660, %v2673
    %v2675 = vlaneseq
    %v2676 = vshrl.u32 %v2675, 7
    %v2677 = vsub.s32 0, %v2676
    %v2678 = vrot.slane %v2667, %v2677
    %v2679 = vlaneseq
    %v2680 = vshrl.u32 %v2679, 7
    %v2681 = vsub.s32 0, %v2680
    %v2682 = vrot.slane %v2674, %v2681
    %2683 = vset.pattern.permute.xlu0 0
    %2684 = vperm.xlu0 %2683, %v2678
    %v2685 = vpop.permute.xlu0 %2684
    %2687 = vset.pattern.permute.xlu0 0
    %2688 = vperm.xlu0 %2687, %v2682
    %v2689 = vpop.permute.xlu0 %2688
    %vm2691 = vcmp.lt.s32.totalorder %v2651, 2
    %v2692 = vsel %vm2691, %v2553, %v2685
    %v2693 = vsel %vm2691, %v2558, %v2689
    %2694 = vst [vmem:[%s4] sm:$0xff] %v2692
    %2695 = vst [vmem:[%s4 + $0x8] sm:$0xff] %v2693
    // Predicated region
    $region22: #{electra_qa_forward.1} parent=1 // pred_check
      _
    $region23: #{electra_qa_forward.1} parent=1 // pred_check_branch
      %2697 = sbr.rel (0) target = $region25
    $region24: #{electra_qa_forward.1} parent=1 // pred_region
      _
    $region25: #{electra_qa_forward.1} parent=1 // pred_fallthru
      _
    // Predicated region
    $region26: #{electra_qa_forward.1} parent=1 // pred_check
      _
    $region27: #{electra_qa_forward.1} parent=1 // pred_check_branch
      %2699 = sbr.rel (0) target = $region29
    $region28: #{electra_qa_forward.1} parent=1 // pred_region
      _
    $region29: #{electra_qa_forward.1} parent=1 // pred_fallthru
      _
    %2700 = vsyncpa [#allocation3], 1

</llo_original>
